<compile_context>
chip_gen: v5e
topology: v5e:2x2
jax: 0.10.0
libtpu: 0.0.40
codegen_flags: <defaults>
</compile_context>

<pallas_src>
import functools

import numpy as np

import jax
import jax.numpy as jnp
from jax.experimental import pallas as pl
from jax.experimental.pallas import tpu as pltpu


KERNEL_SIZE = 3  # padding=1 + MaxPool2d(2) twice => 28x28 -> 7x7 (matches Linear(7*7*32, 10))

# permutation that maps our (H, W, C)-ordered features to torch's (C, H, W) flatten order
_ii, _jj, _cc = np.meshgrid(np.arange(7), np.arange(7), np.arange(32), indexing="ij")
_HWC2CHW_PERM = np.asarray((_cc * 49 + _ii * 7 + _jj).reshape(-1))


# ---------------------------------------------------------------------------
# Pallas kernels
# ---------------------------------------------------------------------------
def _conv_relu_pool_kernel(s_ref, wbd_ref, b_ref, o_ref, *, hh, wh, cin, cout):
    """Fused 3x3 conv (padding=1) + bias + ReLU + 2x2/stride-2 maxpool.

    s_ref:   (1, 8, hh+1, wh*cin)  pre-shifted input tiles; tile (ar, c) holds
             padded_input[2u+ar, 2v+c, :] for u in [0,hh+1), v in [0,wh)
    wbd_ref: (9, wh*cin, wh*cout)  block-diagonal weight per 3x3 tap
    b_ref:   (1, wh*cout)          bias tiled over the W positions
    o_ref:   (1, hh, wh*cout)      pooled output rows, lanes = (w, cout)
    """
    best = None
    for qi in range(2):            # pooling-window quadrant (row)
        for qj in range(2):        # pooling-window quadrant (col)
            acc = None
            for di in range(3):    # 3x3 tap
                for dj in range(3):
                    a = qi + di                      # total row shift 0..3
                    c = qj + dj                      # total col shift 0..3
                    ar, ah = a & 1, a >> 1
                    t = s_ref[0, ar * 4 + c, ah:ah + hh, :]          # (hh, wh*cin)
                    p = jnp.dot(t, wbd_ref[di * 3 + dj, :, :],
                                preferred_element_type=jnp.float32)  # (hh, wh*cout)
                    acc = p if acc is None else acc + p
            best = acc if best is None else jnp.maximum(best, acc)
    # maxpool(relu(conv + bias)) == relu(max_over_window(conv) + bias)
    y = jnp.maximum(best + b_ref[...], 0.0)
    o_ref[0, :, :] = y.astype(o_ref.dtype)


def _linear_softmax_kernel(x_ref, w_ref, b_ref, o_ref):
    # x_ref: (tb, F), w_ref: (F, 10), b_ref: (1, 10), o_ref: (tb, 10)
    logits = jnp.dot(x_ref[...], w_ref[...], preferred_element_type=jnp.float32)
    logits = logits + b_ref[...]
    m = jnp.max(logits, axis=-1, keepdims=True)
    e = jnp.exp(logits - m)
    denom = jnp.sum(e, axis=-1, keepdims=True)
    o_ref[...] = (e * pl.reciprocal(denom, approx=True)).astype(o_ref.dtype)


# ---------------------------------------------------------------------------
# Pallas wrappers
# ---------------------------------------------------------------------------
def conv_relu_pool(slabs, wbd, bias_row, *, hh, wh, cin, cout):
    bsz = slabs.shape[0]
    kernel = functools.partial(_conv_relu_pool_kernel, hh=hh, wh=wh, cin=cin, cout=cout)
    return pl.pallas_call(
        kernel,
        out_shape=jax.ShapeDtypeStruct((bsz, hh, wh * cout), jnp.float32),
        grid=(bsz,),
        in_specs=[
            pl.BlockSpec((1, 8, hh + 1, wh * cin), lambda i: (i, 0, 0, 0)),
            pl.BlockSpec((9, wh * cin, wh * cout), lambda i: (0, 0, 0)),
            pl.BlockSpec((1, wh * cout), lambda i: (0, 0)),
        ],
        out_specs=pl.BlockSpec((1, hh, wh * cout), lambda i: (i, 0, 0)),
        compiler_params=pltpu.CompilerParams(dimension_semantics=("parallel",)),
    )(slabs, wbd, bias_row)


def linear_softmax(x, w, b):
    m, k = x.shape
    n = w.shape[1]
    tb = 8 if (m % 8 == 0) else m          # batch-tiled when possible (v7x cores)
    return pl.pallas_call(
        _linear_softmax_kernel,
        out_shape=jax.ShapeDtypeStruct((m, n), jnp.float32),
        grid=(m // tb,),
        in_specs=[
            pl.BlockSpec((tb, k), lambda i: (i, 0)),
            pl.BlockSpec((k, n), lambda i: (0, 0)),
            pl.BlockSpec((1, n), lambda i: (0, 0)),
        ],
        out_specs=pl.BlockSpec((tb, n), lambda i: (i, 0)),
        compiler_params=pltpu.CompilerParams(dimension_semantics=("parallel",)),
    )(x, w, b.reshape(1, n))


# ---------------------------------------------------------------------------
# Glue: parity/shift pre-split of the padded input + block-diagonal weights
# (small, ~2x input bytes; replaces the 9x im2col + pooling round-trips)
# ---------------------------------------------------------------------------
def _prep_stage(x_nhwc, w_hwio, b, *, hh, wh, cin, cout):
    bsz = x_nhwc.shape[0]
    xp = jnp.pad(x_nhwc, ((0, 0), (1, 1), (1, 1), (0, 0)))      # (B, 2hh+2, 2wh+2, cin)
    tiles = []
    for ar in range(2):            # row parity of the padded input
        for c in range(4):         # column shift (qj + dj)
            t = xp[:, ar::2, c:c + 2 * wh:2, :]                  # (B, hh+1, wh, cin)
            tiles.append(t.reshape(bsz, hh + 1, wh * cin))
    slabs = jnp.stack(tiles, axis=1)                             # (B, 8, hh+1, wh*cin)

    w9 = w_hwio.reshape(9, cin, cout)                            # (di*3+dj, ci, co)
    eye = jnp.eye(wh, dtype=w_hwio.dtype)
    # block-diagonal: wbd[k, v*cin+ci, u*cout+co] = (v==u) * w9[k, ci, co]
    wbd = jnp.einsum("vu,kcd->kvcud", eye, w9).reshape(9, wh * cin, wh * cout)
    bias_row = jnp.tile(b.reshape(1, cout), (1, wh))             # (1, wh*cout)
    return slabs, wbd, bias_row


# ---------------------------------------------------------------------------
# Model
# ---------------------------------------------------------------------------
def init_params(key):
    k1, k2, k3, k4, k5, k6 = jax.random.split(key, 6)

    def uniform(k, shape, fan_in):
        bound = 1.0 / jnp.sqrt(float(fan_in))
        return jax.random.uniform(k, shape, jnp.float32, -bound, bound)

    ks = KERNEL_SIZE
    return {
        # conv weights stored HWIO: (KH, KW, Cin, Cout)
        "w1": uniform(k1, (ks, ks, 1, 16), ks * ks * 1),
        "b1": uniform(k2, (16,), ks * ks * 1),
        "w2": uniform(k3, (ks, ks, 16, 32), ks * ks * 16),
        "b2": uniform(k4, (32,), ks * ks * 16),
        # linear weight stored (in_features, out_features), rows in torch (C,H,W) order
        "wl": uniform(k5, (7 * 7 * 32, 10), 7 * 7 * 32),
        "bl": uniform(k6, (10,), 7 * 7 * 32),
    }


def cnn_forward(x_nchw, params):
    """Equivalent of CNN.forward. x_nchw: (B, 1, 28, 28) float32 -> (B, 10)."""
    bsz = x_nchw.shape[0]
    x = jnp.transpose(x_nchw, (0, 2, 3, 1))                      # NHWC (B, 28, 28, 1)

    # --- stage 1: Conv2d(1, 16, 3, padding=1) + ReLU + MaxPool2d(2, 2), fused ---
    slabs, wbd, brow = _prep_stage(x, params["w1"], params["b1"],
                                   hh=14, wh=14, cin=1, cout=16)
    y = conv_relu_pool(slabs, wbd, brow, hh=14, wh=14, cin=1, cout=16)   # (B, 14, 224)
    y = y.reshape(bsz, 14, 14, 16)                                        # NHWC pooled

    # --- stage 2: Conv2d(16, 32, 3, padding=1) + ReLU + MaxPool2d(2, 2), fused ---
    slabs, wbd, brow = _prep_stage(y, params["w2"], params["b2"],
                                   hh=7, wh=7, cin=16, cout=32)
    y = conv_relu_pool(slabs, wbd, brow, hh=7, wh=7, cin=16, cout=32)    # (B, 7, 224)

    # --- flatten ((H,W,C) order) + Linear + Softmax; weight rows permuted once
    #     so that no activation transpose is needed on the hot path ---
    feat = y.reshape(bsz, 7 * 7 * 32)
    wl_hwc = params["wl"][_HWC2CHW_PERM, :]
    return linear_softmax(feat, wl_hwc, params["bl"])


# ---------------------------------------------------------------------------
# Pure-JAX reference (torch semantics) for a correctness cross-check
# ---------------------------------------------------------------------------
def _reference_forward(x_nchw, params):
    x = jnp.transpose(x_nchw, (0, 2, 3, 1))

    def conv(x, w, b):
        return jax.lax.conv_general_dilated(
            x, w, window_strides=(1, 1), padding=((1, 1), (1, 1)),
            dimension_numbers=("NHWC", "HWIO", "NHWC")) + b

    def pool(x):
        return jax.lax.reduce_window(x, -jnp.inf, jax.lax.max,
                                     (1, 2, 2, 1), (1, 2, 2, 1), "VALID")

    y = pool(jax.nn.relu(conv(x, params["w1"], params["b1"])))
    y = pool(jax.nn.relu(conv(y, params["w2"], params["b2"])))
    feat = jnp.transpose(y, (0, 3, 1, 2)).reshape(x.shape[0], -1)   # torch (C,H,W) flatten
    logits = feat @ params["wl"] + params["bl"]
    return jax.nn.softmax(logits, axis=-1)


# ---------------------------------------------------------------------------
if __name__ == "__main__":
    key = jax.random.PRNGKey(0)
    k_params, k_x = jax.random.split(key)

    params = init_params(k_params)
    # small batch; spatial must be 28x28 so that 7*7*32 matches the Linear layer
    x = jax.random.normal(k_x, (2, 1, 28, 28), dtype=jnp.float32)

    fwd = jax.jit(cnn_forward)
    probs = jax.block_until_ready(fwd(x, params))

    assert probs.shape == (2, 10), probs.shape
    row_sums = jnp.sum(probs, axis=1)
    assert bool(jnp.all(jnp.abs(row_sums - 1.0) < 2e-2)), row_sums
    assert bool(jnp.all(probs >= 0.0))

    ref = jax.block_until_ready(jax.jit(_reference_forward)(x, params))
    np.testing.assert_allclose(np.asarray(probs), np.asarray(ref), atol=2e-2, rtol=2e-2)

    print("KERNEL_OK")
</pallas_src>

<mosaic_0001>
module attributes {stable_mosaic.version = 11 : i64} {
  func.func @_conv_relu_pool_kernel(%arg0: i32, %arg1: memref<1x8x15x14xf32, #tpu.memory_space<vmem>>, %arg2: memref<9x14x224xf32, #tpu.memory_space<vmem>>, %arg3: memref<1x224xf32, #tpu.memory_space<vmem>>, %arg4: memref<1x14x224xf32, #tpu.memory_space<vmem>>) attributes {dimension_semantics = [#tpu.dimension_semantics<parallel>], iteration_bounds = array<i64: 2>, scalar_prefetch = 0 : i64, scratch_operands = 0 : i64, tpu.core_type = #tpu.core_type<tc>, window_params = [{transform_indices = @transform_0, window_bounds = array<i64: 1, 8, 15, 14>}, {pipeline_mode = #tpu.pipeline_mode<synchronous>, transform_indices = @transform_1, window_bounds = array<i64: 9, 14, 224>}, {pipeline_mode = #tpu.pipeline_mode<synchronous>, transform_indices = @transform_2, window_bounds = array<i64: 1, 224>}, {transform_indices = @transform_3, window_bounds = array<i64: 1, 14, 224>}]} {
    %c0 = arith.constant 0 : index
    %c0_0 = arith.constant 0 : index
    %c0_1 = arith.constant 0 : index
    %c0_2 = arith.constant 0 : index
    %0 = vector.load %arg1[%c0, %c0_0, %c0_1, %c0_2] : memref<1x8x15x14xf32, #tpu.memory_space<vmem>>, vector<1x1x14x14xf32>
    %1 = vector.shape_cast %0 : vector<1x1x14x14xf32> to vector<14x14xf32>
    %c0_3 = arith.constant 0 : index
    %c0_4 = arith.constant 0 : index
    %c0_5 = arith.constant 0 : index
    %2 = vector.load %arg2[%c0_3, %c0_4, %c0_5] : memref<9x14x224xf32, #tpu.memory_space<vmem>>, vector<1x14x224xf32>
    %3 = vector.shape_cast %2 : vector<1x14x224xf32> to vector<14x224xf32>
    %cst = arith.constant dense<0.000000e+00> : vector<14x224xf32>
    %4 = tpu.matmul %1, %3, %cst {dimension_numbers = #tpu.dot_dimension_numbers<[1], [0], [0], [1], [0, 0, 1, 1], [], []>} : vector<14x14xf32>, vector<14x224xf32>, vector<14x224xf32> -> vector<14x224xf32>
    %c0_6 = arith.constant 0 : index
    %c1 = arith.constant 1 : index
    %c0_7 = arith.constant 0 : index
    %c0_8 = arith.constant 0 : index
    %5 = vector.load %arg1[%c0_6, %c1, %c0_7, %c0_8] : memref<1x8x15x14xf32, #tpu.memory_space<vmem>>, vector<1x1x14x14xf32>
    %6 = vector.shape_cast %5 : vector<1x1x14x14xf32> to vector<14x14xf32>
    %c1_9 = arith.constant 1 : index
    %c0_10 = arith.constant 0 : index
    %c0_11 = arith.constant 0 : index
    %7 = vector.load %arg2[%c1_9, %c0_10, %c0_11] : memref<9x14x224xf32, #tpu.memory_space<vmem>>, vector<1x14x224xf32>
    %8 = vector.shape_cast %7 : vector<1x14x224xf32> to vector<14x224xf32>
    %cst_12 = arith.constant dense<0.000000e+00> : vector<14x224xf32>
    %9 = tpu.matmul %6, %8, %cst_12 {dimension_numbers = #tpu.dot_dimension_numbers<[1], [0], [0], [1], [0, 0, 1, 1], [], []>} : vector<14x14xf32>, vector<14x224xf32>, vector<14x224xf32> -> vector<14x224xf32>
    %10 = arith.addf %4, %9 : vector<14x224xf32>
    %c0_13 = arith.constant 0 : index
    %c2 = arith.constant 2 : index
    %c0_14 = arith.constant 0 : index
    %c0_15 = arith.constant 0 : index
    %11 = vector.load %arg1[%c0_13, %c2, %c0_14, %c0_15] : memref<1x8x15x14xf32, #tpu.memory_space<vmem>>, vector<1x1x14x14xf32>
    %12 = vector.shape_cast %11 : vector<1x1x14x14xf32> to vector<14x14xf32>
    %c2_16 = arith.constant 2 : index
    %c0_17 = arith.constant 0 : index
    %c0_18 = arith.constant 0 : index
    %13 = vector.load %arg2[%c2_16, %c0_17, %c0_18] : memref<9x14x224xf32, #tpu.memory_space<vmem>>, vector<1x14x224xf32>
    %14 = vector.shape_cast %13 : vector<1x14x224xf32> to vector<14x224xf32>
    %cst_19 = arith.constant dense<0.000000e+00> : vector<14x224xf32>
    %15 = tpu.matmul %12, %14, %cst_19 {dimension_numbers = #tpu.dot_dimension_numbers<[1], [0], [0], [1], [0, 0, 1, 1], [], []>} : vector<14x14xf32>, vector<14x224xf32>, vector<14x224xf32> -> vector<14x224xf32>
    %16 = arith.addf %10, %15 : vector<14x224xf32>
    %c0_20 = arith.constant 0 : index
    %c4 = arith.constant 4 : index
    %c0_21 = arith.constant 0 : index
    %c0_22 = arith.constant 0 : index
    %17 = vector.load %arg1[%c0_20, %c4, %c0_21, %c0_22] : memref<1x8x15x14xf32, #tpu.memory_space<vmem>>, vector<1x1x14x14xf32>
    %18 = vector.shape_cast %17 : vector<1x1x14x14xf32> to vector<14x14xf32>
    %c3 = arith.constant 3 : index
    %c0_23 = arith.constant 0 : index
    %c0_24 = arith.constant 0 : index
    %19 = vector.load %arg2[%c3, %c0_23, %c0_24] : memref<9x14x224xf32, #tpu.memory_space<vmem>>, vector<1x14x224xf32>
    %20 = vector.shape_cast %19 : vector<1x14x224xf32> to vector<14x224xf32>
    %cst_25 = arith.constant dense<0.000000e+00> : vector<14x224xf32>
    %21 = tpu.matmul %18, %20, %cst_25 {dimension_numbers = #tpu.dot_dimension_numbers<[1], [0], [0], [1], [0, 0, 1, 1], [], []>} : vector<14x14xf32>, vector<14x224xf32>, vector<14x224xf32> -> vector<14x224xf32>
    %22 = arith.addf %16, %21 : vector<14x224xf32>
    %c0_26 = arith.constant 0 : index
    %c5 = arith.constant 5 : index
    %c0_27 = arith.constant 0 : index
    %c0_28 = arith.constant 0 : index
    %23 = vector.load %arg1[%c0_26, %c5, %c0_27, %c0_28] : memref<1x8x15x14xf32, #tpu.memory_space<vmem>>, vector<1x1x14x14xf32>
    %24 = vector.shape_cast %23 : vector<1x1x14x14xf32> to vector<14x14xf32>
    %c4_29 = arith.constant 4 : index
    %c0_30 = arith.constant 0 : index
    %c0_31 = arith.constant 0 : index
    %25 = vector.load %arg2[%c4_29, %c0_30, %c0_31] : memref<9x14x224xf32, #tpu.memory_space<vmem>>, vector<1x14x224xf32>
    %26 = vector.shape_cast %25 : vector<1x14x224xf32> to vector<14x224xf32>
    %cst_32 = arith.constant dense<0.000000e+00> : vector<14x224xf32>
    %27 = tpu.matmul %24, %26, %cst_32 {dimension_numbers = #tpu.dot_dimension_numbers<[1], [0], [0], [1], [0, 0, 1, 1], [], []>} : vector<14x14xf32>, vector<14x224xf32>, vector<14x224xf32> -> vector<14x224xf32>
    %28 = arith.addf %22, %27 : vector<14x224xf32>
    %c0_33 = arith.constant 0 : index
    %c6 = arith.constant 6 : index
    %c0_34 = arith.constant 0 : index
    %c0_35 = arith.constant 0 : index
    %29 = vector.load %arg1[%c0_33, %c6, %c0_34, %c0_35] : memref<1x8x15x14xf32, #tpu.memory_space<vmem>>, vector<1x1x14x14xf32>
    %30 = vector.shape_cast %29 : vector<1x1x14x14xf32> to vector<14x14xf32>
    %c5_36 = arith.constant 5 : index
    %c0_37 = arith.constant 0 : index
    %c0_38 = arith.constant 0 : index
    %31 = vector.load %arg2[%c5_36, %c0_37, %c0_38] : memref<9x14x224xf32, #tpu.memory_space<vmem>>, vector<1x14x224xf32>
    %32 = vector.shape_cast %31 : vector<1x14x224xf32> to vector<14x224xf32>
    %cst_39 = arith.constant dense<0.000000e+00> : vector<14x224xf32>
    %33 = tpu.matmul %30, %32, %cst_39 {dimension_numbers = #tpu.dot_dimension_numbers<[1], [0], [0], [1], [0, 0, 1, 1], [], []>} : vector<14x14xf32>, vector<14x224xf32>, vector<14x224xf32> -> vector<14x224xf32>
    %34 = arith.addf %28, %33 : vector<14x224xf32>
    %c0_40 = arith.constant 0 : index
    %c0_41 = arith.constant 0 : index
    %c1_42 = arith.constant 1 : index
    %c0_43 = arith.constant 0 : index
    %35 = vector.load %arg1[%c0_40, %c0_41, %c1_42, %c0_43] : memref<1x8x15x14xf32, #tpu.memory_space<vmem>>, vector<1x1x14x14xf32>
    %36 = vector.shape_cast %35 : vector<1x1x14x14xf32> to vector<14x14xf32>
    %c6_44 = arith.constant 6 : index
    %c0_45 = arith.constant 0 : index
    %c0_46 = arith.constant 0 : index
    %37 = vector.load %arg2[%c6_44, %c0_45, %c0_46] : memref<9x14x224xf32, #tpu.memory_space<vmem>>, vector<1x14x224xf32>
    %38 = vector.shape_cast %37 : vector<1x14x224xf32> to vector<14x224xf32>
    %cst_47 = arith.constant dense<0.000000e+00> : vector<14x224xf32>
    %39 = tpu.matmul %36, %38, %cst_47 {dimension_numbers = #tpu.dot_dimension_numbers<[1], [0], [0], [1], [0, 0, 1, 1], [], []>} : vector<14x14xf32>, vector<14x224xf32>, vector<14x224xf32> -> vector<14x224xf32>
    %40 = arith.addf %34, %39 : vector<14x224xf32>
    %c0_48 = arith.constant 0 : index
    %c1_49 = arith.constant 1 : index
    %c1_50 = arith.constant 1 : index
    %c0_51 = arith.constant 0 : index
    %41 = vector.load %arg1[%c0_48, %c1_49, %c1_50, %c0_51] : memref<1x8x15x14xf32, #tpu.memory_space<vmem>>, vector<1x1x14x14xf32>
    %42 = vector.shape_cast %41 : vector<1x1x14x14xf32> to vector<14x14xf32>
    %c7 = arith.constant 7 : index
    %c0_52 = arith.constant 0 : index
    %c0_53 = arith.constant 0 : index
    %43 = vector.load %arg2[%c7, %c0_52, %c0_53] : memref<9x14x224xf32, #tpu.memory_space<vmem>>, vector<1x14x224xf32>
    %44 = vector.shape_cast %43 : vector<1x14x224xf32> to vector<14x224xf32>
    %cst_54 = arith.constant dense<0.000000e+00> : vector<14x224xf32>
    %45 = tpu.matmul %42, %44, %cst_54 {dimension_numbers = #tpu.dot_dimension_numbers<[1], [0], [0], [1], [0, 0, 1, 1], [], []>} : vector<14x14xf32>, vector<14x224xf32>, vector<14x224xf32> -> vector<14x224xf32>
    %46 = arith.addf %40, %45 : vector<14x224xf32>
    %c0_55 = arith.constant 0 : index
    %c2_56 = arith.constant 2 : index
    %c1_57 = arith.constant 1 : index
    %c0_58 = arith.constant 0 : index
    %47 = vector.load %arg1[%c0_55, %c2_56, %c1_57, %c0_58] : memref<1x8x15x14xf32, #tpu.memory_space<vmem>>, vector<1x1x14x14xf32>
    %48 = vector.shape_cast %47 : vector<1x1x14x14xf32> to vector<14x14xf32>
    %c8 = arith.constant 8 : index
    %c0_59 = arith.constant 0 : index
    %c0_60 = arith.constant 0 : index
    %49 = vector.load %arg2[%c8, %c0_59, %c0_60] : memref<9x14x224xf32, #tpu.memory_space<vmem>>, vector<1x14x224xf32>
    %50 = vector.shape_cast %49 : vector<1x14x224xf32> to vector<14x224xf32>
    %cst_61 = arith.constant dense<0.000000e+00> : vector<14x224xf32>
    %51 = tpu.matmul %48, %50, %cst_61 {dimension_numbers = #tpu.dot_dimension_numbers<[1], [0], [0], [1], [0, 0, 1, 1], [], []>} : vector<14x14xf32>, vector<14x224xf32>, vector<14x224xf32> -> vector<14x224xf32>
    %52 = arith.addf %46, %51 : vector<14x224xf32>
    %c0_62 = arith.constant 0 : index
    %c1_63 = arith.constant 1 : index
    %c0_64 = arith.constant 0 : index
    %c0_65 = arith.constant 0 : index
    %53 = vector.load %arg1[%c0_62, %c1_63, %c0_64, %c0_65] : memref<1x8x15x14xf32, #tpu.memory_space<vmem>>, vector<1x1x14x14xf32>
    %54 = vector.shape_cast %53 : vector<1x1x14x14xf32> to vector<14x14xf32>
    %c0_66 = arith.constant 0 : index
    %c0_67 = arith.constant 0 : index
    %c0_68 = arith.constant 0 : index
    %55 = vector.load %arg2[%c0_66, %c0_67, %c0_68] : memref<9x14x224xf32, #tpu.memory_space<vmem>>, vector<1x14x224xf32>
    %56 = vector.shape_cast %55 : vector<1x14x224xf32> to vector<14x224xf32>
    %cst_69 = arith.constant dense<0.000000e+00> : vector<14x224xf32>
    %57 = tpu.matmul %54, %56, %cst_69 {dimension_numbers = #tpu.dot_dimension_numbers<[1], [0], [0], [1], [0, 0, 1, 1], [], []>} : vector<14x14xf32>, vector<14x224xf32>, vector<14x224xf32> -> vector<14x224xf32>
    %c0_70 = arith.constant 0 : index
    %c2_71 = arith.constant 2 : index
    %c0_72 = arith.constant 0 : index
    %c0_73 = arith.constant 0 : index
    %58 = vector.load %arg1[%c0_70, %c2_71, %c0_72, %c0_73] : memref<1x8x15x14xf32, #tpu.memory_space<vmem>>, vector<1x1x14x14xf32>
    %59 = vector.shape_cast %58 : vector<1x1x14x14xf32> to vector<14x14xf32>
    %c1_74 = arith.constant 1 : index
    %c0_75 = arith.constant 0 : index
    %c0_76 = arith.constant 0 : index
    %60 = vector.load %arg2[%c1_74, %c0_75, %c0_76] : memref<9x14x224xf32, #tpu.memory_space<vmem>>, vector<1x14x224xf32>
    %61 = vector.shape_cast %60 : vector<1x14x224xf32> to vector<14x224xf32>
    %cst_77 = arith.constant dense<0.000000e+00> : vector<14x224xf32>
    %62 = tpu.matmul %59, %61, %cst_77 {dimension_numbers = #tpu.dot_dimension_numbers<[1], [0], [0], [1], [0, 0, 1, 1], [], []>} : vector<14x14xf32>, vector<14x224xf32>, vector<14x224xf32> -> vector<14x224xf32>
    %63 = arith.addf %57, %62 : vector<14x224xf32>
    %c0_78 = arith.constant 0 : index
    %c3_79 = arith.constant 3 : index
    %c0_80 = arith.constant 0 : index
    %c0_81 = arith.constant 0 : index
    %64 = vector.load %arg1[%c0_78, %c3_79, %c0_80, %c0_81] : memref<1x8x15x14xf32, #tpu.memory_space<vmem>>, vector<1x1x14x14xf32>
    %65 = vector.shape_cast %64 : vector<1x1x14x14xf32> to vector<14x14xf32>
    %c2_82 = arith.constant 2 : index
    %c0_83 = arith.constant 0 : index
    %c0_84 = arith.constant 0 : index
    %66 = vector.load %arg2[%c2_82, %c0_83, %c0_84] : memref<9x14x224xf32, #tpu.memory_space<vmem>>, vector<1x14x224xf32>
    %67 = vector.shape_cast %66 : vector<1x14x224xf32> to vector<14x224xf32>
    %cst_85 = arith.constant dense<0.000000e+00> : vector<14x224xf32>
    %68 = tpu.matmul %65, %67, %cst_85 {dimension_numbers = #tpu.dot_dimension_numbers<[1], [0], [0], [1], [0, 0, 1, 1], [], []>} : vector<14x14xf32>, vector<14x224xf32>, vector<14x224xf32> -> vector<14x224xf32>
    %69 = arith.addf %63, %68 : vector<14x224xf32>
    %c0_86 = arith.constant 0 : index
    %c5_87 = arith.constant 5 : index
    %c0_88 = arith.constant 0 : index
    %c0_89 = arith.constant 0 : index
    %70 = vector.load %arg1[%c0_86, %c5_87, %c0_88, %c0_89] : memref<1x8x15x14xf32, #tpu.memory_space<vmem>>, vector<1x1x14x14xf32>
    %71 = vector.shape_cast %70 : vector<1x1x14x14xf32> to vector<14x14xf32>
    %c3_90 = arith.constant 3 : index
    %c0_91 = arith.constant 0 : index
    %c0_92 = arith.constant 0 : index
    %72 = vector.load %arg2[%c3_90, %c0_91, %c0_92] : memref<9x14x224xf32, #tpu.memory_space<vmem>>, vector<1x14x224xf32>
    %73 = vector.shape_cast %72 : vector<1x14x224xf32> to vector<14x224xf32>
    %cst_93 = arith.constant dense<0.000000e+00> : vector<14x224xf32>
    %74 = tpu.matmul %71, %73, %cst_93 {dimension_numbers = #tpu.dot_dimension_numbers<[1], [0], [0], [1], [0, 0, 1, 1], [], []>} : vector<14x14xf32>, vector<14x224xf32>, vector<14x224xf32> -> vector<14x224xf32>
    %75 = arith.addf %69, %74 : vector<14x224xf32>
    %c0_94 = arith.constant 0 : index
    %c6_95 = arith.constant 6 : index
    %c0_96 = arith.constant 0 : index
    %c0_97 = arith.constant 0 : index
    %76 = vector.load %arg1[%c0_94, %c6_95, %c0_96, %c0_97] : memref<1x8x15x14xf32, #tpu.memory_space<vmem>>, vector<1x1x14x14xf32>
    %77 = vector.shape_cast %76 : vector<1x1x14x14xf32> to vector<14x14xf32>
    %c4_98 = arith.constant 4 : index
    %c0_99 = arith.constant 0 : index
    %c0_100 = arith.constant 0 : index
    %78 = vector.load %arg2[%c4_98, %c0_99, %c0_100] : memref<9x14x224xf32, #tpu.memory_space<vmem>>, vector<1x14x224xf32>
    %79 = vector.shape_cast %78 : vector<1x14x224xf32> to vector<14x224xf32>
    %cst_101 = arith.constant dense<0.000000e+00> : vector<14x224xf32>
    %80 = tpu.matmul %77, %79, %cst_101 {dimension_numbers = #tpu.dot_dimension_numbers<[1], [0], [0], [1], [0, 0, 1, 1], [], []>} : vector<14x14xf32>, vector<14x224xf32>, vector<14x224xf32> -> vector<14x224xf32>
    %81 = arith.addf %75, %80 : vector<14x224xf32>
    %c0_102 = arith.constant 0 : index
    %c7_103 = arith.constant 7 : index
    %c0_104 = arith.constant 0 : index
    %c0_105 = arith.constant 0 : index
    %82 = vector.load %arg1[%c0_102, %c7_103, %c0_104, %c0_105] : memref<1x8x15x14xf32, #tpu.memory_space<vmem>>, vector<1x1x14x14xf32>
    %83 = vector.shape_cast %82 : vector<1x1x14x14xf32> to vector<14x14xf32>
    %c5_106 = arith.constant 5 : index
    %c0_107 = arith.constant 0 : index
    %c0_108 = arith.constant 0 : index
    %84 = vector.load %arg2[%c5_106, %c0_107, %c0_108] : memref<9x14x224xf32, #tpu.memory_space<vmem>>, vector<1x14x224xf32>
    %85 = vector.shape_cast %84 : vector<1x14x224xf32> to vector<14x224xf32>
    %cst_109 = arith.constant dense<0.000000e+00> : vector<14x224xf32>
    %86 = tpu.matmul %83, %85, %cst_109 {dimension_numbers = #tpu.dot_dimension_numbers<[1], [0], [0], [1], [0, 0, 1, 1], [], []>} : vector<14x14xf32>, vector<14x224xf32>, vector<14x224xf32> -> vector<14x224xf32>
    %87 = arith.addf %81, %86 : vector<14x224xf32>
    %c0_110 = arith.constant 0 : index
    %c1_111 = arith.constant 1 : index
    %c1_112 = arith.constant 1 : index
    %c0_113 = arith.constant 0 : index
    %88 = vector.load %arg1[%c0_110, %c1_111, %c1_112, %c0_113] : memref<1x8x15x14xf32, #tpu.memory_space<vmem>>, vector<1x1x14x14xf32>
    %89 = vector.shape_cast %88 : vector<1x1x14x14xf32> to vector<14x14xf32>
    %c6_114 = arith.constant 6 : index
    %c0_115 = arith.constant 0 : index
    %c0_116 = arith.constant 0 : index
    %90 = vector.load %arg2[%c6_114, %c0_115, %c0_116] : memref<9x14x224xf32, #tpu.memory_space<vmem>>, vector<1x14x224xf32>
    %91 = vector.shape_cast %90 : vector<1x14x224xf32> to vector<14x224xf32>
    %cst_117 = arith.constant dense<0.000000e+00> : vector<14x224xf32>
    %92 = tpu.matmul %89, %91, %cst_117 {dimension_numbers = #tpu.dot_dimension_numbers<[1], [0], [0], [1], [0, 0, 1, 1], [], []>} : vector<14x14xf32>, vector<14x224xf32>, vector<14x224xf32> -> vector<14x224xf32>
    %93 = arith.addf %87, %92 : vector<14x224xf32>
    %c0_118 = arith.constant 0 : index
    %c2_119 = arith.constant 2 : index
    %c1_120 = arith.constant 1 : index
    %c0_121 = arith.constant 0 : index
    %94 = vector.load %arg1[%c0_118, %c2_119, %c1_120, %c0_121] : memref<1x8x15x14xf32, #tpu.memory_space<vmem>>, vector<1x1x14x14xf32>
    %95 = vector.shape_cast %94 : vector<1x1x14x14xf32> to vector<14x14xf32>
    %c7_122 = arith.constant 7 : index
    %c0_123 = arith.constant 0 : index
    %c0_124 = arith.constant 0 : index
    %96 = vector.load %arg2[%c7_122, %c0_123, %c0_124] : memref<9x14x224xf32, #tpu.memory_space<vmem>>, vector<1x14x224xf32>
    %97 = vector.shape_cast %96 : vector<1x14x224xf32> to vector<14x224xf32>
    %cst_125 = arith.constant dense<0.000000e+00> : vector<14x224xf32>
    %98 = tpu.matmul %95, %97, %cst_125 {dimension_numbers = #tpu.dot_dimension_numbers<[1], [0], [0], [1], [0, 0, 1, 1], [], []>} : vector<14x14xf32>, vector<14x224xf32>, vector<14x224xf32> -> vector<14x224xf32>
    %99 = arith.addf %93, %98 : vector<14x224xf32>
    %c0_126 = arith.constant 0 : index
    %c3_127 = arith.constant 3 : index
    %c1_128 = arith.constant 1 : index
    %c0_129 = arith.constant 0 : index
    %100 = vector.load %arg1[%c0_126, %c3_127, %c1_128, %c0_129] : memref<1x8x15x14xf32, #tpu.memory_space<vmem>>, vector<1x1x14x14xf32>
    %101 = vector.shape_cast %100 : vector<1x1x14x14xf32> to vector<14x14xf32>
    %c8_130 = arith.constant 8 : index
    %c0_131 = arith.constant 0 : index
    %c0_132 = arith.constant 0 : index
    %102 = vector.load %arg2[%c8_130, %c0_131, %c0_132] : memref<9x14x224xf32, #tpu.memory_space<vmem>>, vector<1x14x224xf32>
    %103 = vector.shape_cast %102 : vector<1x14x224xf32> to vector<14x224xf32>
    %cst_133 = arith.constant dense<0.000000e+00> : vector<14x224xf32>
    %104 = tpu.matmul %101, %103, %cst_133 {dimension_numbers = #tpu.dot_dimension_numbers<[1], [0], [0], [1], [0, 0, 1, 1], [], []>} : vector<14x14xf32>, vector<14x224xf32>, vector<14x224xf32> -> vector<14x224xf32>
    %105 = arith.addf %99, %104 : vector<14x224xf32>
    %106 = arith.maximumf %52, %105 : vector<14x224xf32>
    %c0_134 = arith.constant 0 : index
    %c4_135 = arith.constant 4 : index
    %c0_136 = arith.constant 0 : index
    %c0_137 = arith.constant 0 : index
    %107 = vector.load %arg1[%c0_134, %c4_135, %c0_136, %c0_137] : memref<1x8x15x14xf32, #tpu.memory_space<vmem>>, vector<1x1x14x14xf32>
    %108 = vector.shape_cast %107 : vector<1x1x14x14xf32> to vector<14x14xf32>
    %c0_138 = arith.constant 0 : index
    %c0_139 = arith.constant 0 : index
    %c0_140 = arith.constant 0 : index
    %109 = vector.load %arg2[%c0_138, %c0_139, %c0_140] : memref<9x14x224xf32, #tpu.memory_space<vmem>>, vector<1x14x224xf32>
    %110 = vector.shape_cast %109 : vector<1x14x224xf32> to vector<14x224xf32>
    %cst_141 = arith.constant dense<0.000000e+00> : vector<14x224xf32>
    %111 = tpu.matmul %108, %110, %cst_141 {dimension_numbers = #tpu.dot_dimension_numbers<[1], [0], [0], [1], [0, 0, 1, 1], [], []>} : vector<14x14xf32>, vector<14x224xf32>, vector<14x224xf32> -> vector<14x224xf32>
    %c0_142 = arith.constant 0 : index
    %c5_143 = arith.constant 5 : index
    %c0_144 = arith.constant 0 : index
    %c0_145 = arith.constant 0 : index
    %112 = vector.load %arg1[%c0_142, %c5_143, %c0_144, %c0_145] : memref<1x8x15x14xf32, #tpu.memory_space<vmem>>, vector<1x1x14x14xf32>
    %113 = vector.shape_cast %112 : vector<1x1x14x14xf32> to vector<14x14xf32>
    %c1_146 = arith.constant 1 : index
    %c0_147 = arith.constant 0 : index
    %c0_148 = arith.constant 0 : index
    %114 = vector.load %arg2[%c1_146, %c0_147, %c0_148] : memref<9x14x224xf32, #tpu.memory_space<vmem>>, vector<1x14x224xf32>
    %115 = vector.shape_cast %114 : vector<1x14x224xf32> to vector<14x224xf32>
    %cst_149 = arith.constant dense<0.000000e+00> : vector<14x224xf32>
    %116 = tpu.matmul %113, %115, %cst_149 {dimension_numbers = #tpu.dot_dimension_numbers<[1], [0], [0], [1], [0, 0, 1, 1], [], []>} : vector<14x14xf32>, vector<14x224xf32>, vector<14x224xf32> -> vector<14x224xf32>
    %117 = arith.addf %111, %116 : vector<14x224xf32>
    %c0_150 = arith.constant 0 : index
    %c6_151 = arith.constant 6 : index
    %c0_152 = arith.constant 0 : index
    %c0_153 = arith.constant 0 : index
    %118 = vector.load %arg1[%c0_150, %c6_151, %c0_152, %c0_153] : memref<1x8x15x14xf32, #tpu.memory_space<vmem>>, vector<1x1x14x14xf32>
    %119 = vector.shape_cast %118 : vector<1x1x14x14xf32> to vector<14x14xf32>
    %c2_154 = arith.constant 2 : index
    %c0_155 = arith.constant 0 : index
    %c0_156 = arith.constant 0 : index
    %120 = vector.load %arg2[%c2_154, %c0_155, %c0_156] : memref<9x14x224xf32, #tpu.memory_space<vmem>>, vector<1x14x224xf32>
    %121 = vector.shape_cast %120 : vector<1x14x224xf32> to vector<14x224xf32>
    %cst_157 = arith.constant dense<0.000000e+00> : vector<14x224xf32>
    %122 = tpu.matmul %119, %121, %cst_157 {dimension_numbers = #tpu.dot_dimension_numbers<[1], [0], [0], [1], [0, 0, 1, 1], [], []>} : vector<14x14xf32>, vector<14x224xf32>, vector<14x224xf32> -> vector<14x224xf32>
    %123 = arith.addf %117, %122 : vector<14x224xf32>
    %c0_158 = arith.constant 0 : index
    %c0_159 = arith.constant 0 : index
    %c1_160 = arith.constant 1 : index
    %c0_161 = arith.constant 0 : index
    %124 = vector.load %arg1[%c0_158, %c0_159, %c1_160, %c0_161] : memref<1x8x15x14xf32, #tpu.memory_space<vmem>>, vector<1x1x14x14xf32>
    %125 = vector.shape_cast %124 : vector<1x1x14x14xf32> to vector<14x14xf32>
    %c3_162 = arith.constant 3 : index
    %c0_163 = arith.constant 0 : index
    %c0_164 = arith.constant 0 : index
    %126 = vector.load %arg2[%c3_162, %c0_163, %c0_164] : memref<9x14x224xf32, #tpu.memory_space<vmem>>, vector<1x14x224xf32>
    %127 = vector.shape_cast %126 : vector<1x14x224xf32> to vector<14x224xf32>
    %cst_165 = arith.constant dense<0.000000e+00> : vector<14x224xf32>
    %128 = tpu.matmul %125, %127, %cst_165 {dimension_numbers = #tpu.dot_dimension_numbers<[1], [0], [0], [1], [0, 0, 1, 1], [], []>} : vector<14x14xf32>, vector<14x224xf32>, vector<14x224xf32> -> vector<14x224xf32>
    %129 = arith.addf %123, %128 : vector<14x224xf32>
    %c0_166 = arith.constant 0 : index
    %c1_167 = arith.constant 1 : index
    %c1_168 = arith.constant 1 : index
    %c0_169 = arith.constant 0 : index
    %130 = vector.load %arg1[%c0_166, %c1_167, %c1_168, %c0_169] : memref<1x8x15x14xf32, #tpu.memory_space<vmem>>, vector<1x1x14x14xf32>
    %131 = vector.shape_cast %130 : vector<1x1x14x14xf32> to vector<14x14xf32>
    %c4_170 = arith.constant 4 : index
    %c0_171 = arith.constant 0 : index
    %c0_172 = arith.constant 0 : index
    %132 = vector.load %arg2[%c4_170, %c0_171, %c0_172] : memref<9x14x224xf32, #tpu.memory_space<vmem>>, vector<1x14x224xf32>
    %133 = vector.shape_cast %132 : vector<1x14x224xf32> to vector<14x224xf32>
    %cst_173 = arith.constant dense<0.000000e+00> : vector<14x224xf32>
    %134 = tpu.matmul %131, %133, %cst_173 {dimension_numbers = #tpu.dot_dimension_numbers<[1], [0], [0], [1], [0, 0, 1, 1], [], []>} : vector<14x14xf32>, vector<14x224xf32>, vector<14x224xf32> -> vector<14x224xf32>
    %135 = arith.addf %129, %134 : vector<14x224xf32>
    %c0_174 = arith.constant 0 : index
    %c2_175 = arith.constant 2 : index
    %c1_176 = arith.constant 1 : index
    %c0_177 = arith.constant 0 : index
    %136 = vector.load %arg1[%c0_174, %c2_175, %c1_176, %c0_177] : memref<1x8x15x14xf32, #tpu.memory_space<vmem>>, vector<1x1x14x14xf32>
    %137 = vector.shape_cast %136 : vector<1x1x14x14xf32> to vector<14x14xf32>
    %c5_178 = arith.constant 5 : index
    %c0_179 = arith.constant 0 : index
    %c0_180 = arith.constant 0 : index
    %138 = vector.load %arg2[%c5_178, %c0_179, %c0_180] : memref<9x14x224xf32, #tpu.memory_space<vmem>>, vector<1x14x224xf32>
    %139 = vector.shape_cast %138 : vector<1x14x224xf32> to vector<14x224xf32>
    %cst_181 = arith.constant dense<0.000000e+00> : vector<14x224xf32>
    %140 = tpu.matmul %137, %139, %cst_181 {dimension_numbers = #tpu.dot_dimension_numbers<[1], [0], [0], [1], [0, 0, 1, 1], [], []>} : vector<14x14xf32>, vector<14x224xf32>, vector<14x224xf32> -> vector<14x224xf32>
    %141 = arith.addf %135, %140 : vector<14x224xf32>
    %c0_182 = arith.constant 0 : index
    %c4_183 = arith.constant 4 : index
    %c1_184 = arith.constant 1 : index
    %c0_185 = arith.constant 0 : index
    %142 = vector.load %arg1[%c0_182, %c4_183, %c1_184, %c0_185] : memref<1x8x15x14xf32, #tpu.memory_space<vmem>>, vector<1x1x14x14xf32>
    %143 = vector.shape_cast %142 : vector<1x1x14x14xf32> to vector<14x14xf32>
    %c6_186 = arith.constant 6 : index
    %c0_187 = arith.constant 0 : index
    %c0_188 = arith.constant 0 : index
    %144 = vector.load %arg2[%c6_186, %c0_187, %c0_188] : memref<9x14x224xf32, #tpu.memory_space<vmem>>, vector<1x14x224xf32>
    %145 = vector.shape_cast %144 : vector<1x14x224xf32> to vector<14x224xf32>
    %cst_189 = arith.constant dense<0.000000e+00> : vector<14x224xf32>
    %146 = tpu.matmul %143, %145, %cst_189 {dimension_numbers = #tpu.dot_dimension_numbers<[1], [0], [0], [1], [0, 0, 1, 1], [], []>} : vector<14x14xf32>, vector<14x224xf32>, vector<14x224xf32> -> vector<14x224xf32>
    %147 = arith.addf %141, %146 : vector<14x224xf32>
    %c0_190 = arith.constant 0 : index
    %c5_191 = arith.constant 5 : index
    %c1_192 = arith.constant 1 : index
    %c0_193 = arith.constant 0 : index
    %148 = vector.load %arg1[%c0_190, %c5_191, %c1_192, %c0_193] : memref<1x8x15x14xf32, #tpu.memory_space<vmem>>, vector<1x1x14x14xf32>
    %149 = vector.shape_cast %148 : vector<1x1x14x14xf32> to vector<14x14xf32>
    %c7_194 = arith.constant 7 : index
    %c0_195 = arith.constant 0 : index
    %c0_196 = arith.constant 0 : index
    %150 = vector.load %arg2[%c7_194, %c0_195, %c0_196] : memref<9x14x224xf32, #tpu.memory_space<vmem>>, vector<1x14x224xf32>
    %151 = vector.shape_cast %150 : vector<1x14x224xf32> to vector<14x224xf32>
    %cst_197 = arith.constant dense<0.000000e+00> : vector<14x224xf32>
    %152 = tpu.matmul %149, %151, %cst_197 {dimension_numbers = #tpu.dot_dimension_numbers<[1], [0], [0], [1], [0, 0, 1, 1], [], []>} : vector<14x14xf32>, vector<14x224xf32>, vector<14x224xf32> -> vector<14x224xf32>
    %153 = arith.addf %147, %152 : vector<14x224xf32>
    %c0_198 = arith.constant 0 : index
    %c6_199 = arith.constant 6 : index
    %c1_200 = arith.constant 1 : index
    %c0_201 = arith.constant 0 : index
    %154 = vector.load %arg1[%c0_198, %c6_199, %c1_200, %c0_201] : memref<1x8x15x14xf32, #tpu.memory_space<vmem>>, vector<1x1x14x14xf32>
    %155 = vector.shape_cast %154 : vector<1x1x14x14xf32> to vector<14x14xf32>
    %c8_202 = arith.constant 8 : index
    %c0_203 = arith.constant 0 : index
    %c0_204 = arith.constant 0 : index
    %156 = vector.load %arg2[%c8_202, %c0_203, %c0_204] : memref<9x14x224xf32, #tpu.memory_space<vmem>>, vector<1x14x224xf32>
    %157 = vector.shape_cast %156 : vector<1x14x224xf32> to vector<14x224xf32>
    %cst_205 = arith.constant dense<0.000000e+00> : vector<14x224xf32>
    %158 = tpu.matmul %155, %157, %cst_205 {dimension_numbers = #tpu.dot_dimension_numbers<[1], [0], [0], [1], [0, 0, 1, 1], [], []>} : vector<14x14xf32>, vector<14x224xf32>, vector<14x224xf32> -> vector<14x224xf32>
    %159 = arith.addf %153, %158 : vector<14x224xf32>
    %160 = arith.maximumf %106, %159 : vector<14x224xf32>
    %c0_206 = arith.constant 0 : index
    %c5_207 = arith.constant 5 : index
    %c0_208 = arith.constant 0 : index
    %c0_209 = arith.constant 0 : index
    %161 = vector.load %arg1[%c0_206, %c5_207, %c0_208, %c0_209] : memref<1x8x15x14xf32, #tpu.memory_space<vmem>>, vector<1x1x14x14xf32>
    %162 = vector.shape_cast %161 : vector<1x1x14x14xf32> to vector<14x14xf32>
    %c0_210 = arith.constant 0 : index
    %c0_211 = arith.constant 0 : index
    %c0_212 = arith.constant 0 : index
    %163 = vector.load %arg2[%c0_210, %c0_211, %c0_212] : memref<9x14x224xf32, #tpu.memory_space<vmem>>, vector<1x14x224xf32>
    %164 = vector.shape_cast %163 : vector<1x14x224xf32> to vector<14x224xf32>
    %cst_213 = arith.constant dense<0.000000e+00> : vector<14x224xf32>
    %165 = tpu.matmul %162, %164, %cst_213 {dimension_numbers = #tpu.dot_dimension_numbers<[1], [0], [0], [1], [0, 0, 1, 1], [], []>} : vector<14x14xf32>, vector<14x224xf32>, vector<14x224xf32> -> vector<14x224xf32>
    %c0_214 = arith.constant 0 : index
    %c6_215 = arith.constant 6 : index
    %c0_216 = arith.constant 0 : index
    %c0_217 = arith.constant 0 : index
    %166 = vector.load %arg1[%c0_214, %c6_215, %c0_216, %c0_217] : memref<1x8x15x14xf32, #tpu.memory_space<vmem>>, vector<1x1x14x14xf32>
    %167 = vector.shape_cast %166 : vector<1x1x14x14xf32> to vector<14x14xf32>
    %c1_218 = arith.constant 1 : index
    %c0_219 = arith.constant 0 : index
    %c0_220 = arith.constant 0 : index
    %168 = vector.load %arg2[%c1_218, %c0_219, %c0_220] : memref<9x14x224xf32, #tpu.memory_space<vmem>>, vector<1x14x224xf32>
    %169 = vector.shape_cast %168 : vector<1x14x224xf32> to vector<14x224xf32>
    %cst_221 = arith.constant dense<0.000000e+00> : vector<14x224xf32>
    %170 = tpu.matmul %167, %169, %cst_221 {dimension_numbers = #tpu.dot_dimension_numbers<[1], [0], [0], [1], [0, 0, 1, 1], [], []>} : vector<14x14xf32>, vector<14x224xf32>, vector<14x224xf32> -> vector<14x224xf32>
    %171 = arith.addf %165, %170 : vector<14x224xf32>
    %c0_222 = arith.constant 0 : index
    %c7_223 = arith.constant 7 : index
    %c0_224 = arith.constant 0 : index
    %c0_225 = arith.constant 0 : index
    %172 = vector.load %arg1[%c0_222, %c7_223, %c0_224, %c0_225] : memref<1x8x15x14xf32, #tpu.memory_space<vmem>>, vector<1x1x14x14xf32>
    %173 = vector.shape_cast %172 : vector<1x1x14x14xf32> to vector<14x14xf32>
    %c2_226 = arith.constant 2 : index
    %c0_227 = arith.constant 0 : index
    %c0_228 = arith.constant 0 : index
    %174 = vector.load %arg2[%c2_226, %c0_227, %c0_228] : memref<9x14x224xf32, #tpu.memory_space<vmem>>, vector<1x14x224xf32>
    %175 = vector.shape_cast %174 : vector<1x14x224xf32> to vector<14x224xf32>
    %cst_229 = arith.constant dense<0.000000e+00> : vector<14x224xf32>
    %176 = tpu.matmul %173, %175, %cst_229 {dimension_numbers = #tpu.dot_dimension_numbers<[1], [0], [0], [1], [0, 0, 1, 1], [], []>} : vector<14x14xf32>, vector<14x224xf32>, vector<14x224xf32> -> vector<14x224xf32>
    %177 = arith.addf %171, %176 : vector<14x224xf32>
    %c0_230 = arith.constant 0 : index
    %c1_231 = arith.constant 1 : index
    %c1_232 = arith.constant 1 : index
    %c0_233 = arith.constant 0 : index
    %178 = vector.load %arg1[%c0_230, %c1_231, %c1_232, %c0_233] : memref<1x8x15x14xf32, #tpu.memory_space<vmem>>, vector<1x1x14x14xf32>
    %179 = vector.shape_cast %178 : vector<1x1x14x14xf32> to vector<14x14xf32>
    %c3_234 = arith.constant 3 : index
    %c0_235 = arith.constant 0 : index
    %c0_236 = arith.constant 0 : index
    %180 = vector.load %arg2[%c3_234, %c0_235, %c0_236] : memref<9x14x224xf32, #tpu.memory_space<vmem>>, vector<1x14x224xf32>
    %181 = vector.shape_cast %180 : vector<1x14x224xf32> to vector<14x224xf32>
    %cst_237 = arith.constant dense<0.000000e+00> : vector<14x224xf32>
    %182 = tpu.matmul %179, %181, %cst_237 {dimension_numbers = #tpu.dot_dimension_numbers<[1], [0], [0], [1], [0, 0, 1, 1], [], []>} : vector<14x14xf32>, vector<14x224xf32>, vector<14x224xf32> -> vector<14x224xf32>
    %183 = arith.addf %177, %182 : vector<14x224xf32>
    %c0_238 = arith.constant 0 : index
    %c2_239 = arith.constant 2 : index
    %c1_240 = arith.constant 1 : index
    %c0_241 = arith.constant 0 : index
    %184 = vector.load %arg1[%c0_238, %c2_239, %c1_240, %c0_241] : memref<1x8x15x14xf32, #tpu.memory_space<vmem>>, vector<1x1x14x14xf32>
    %185 = vector.shape_cast %184 : vector<1x1x14x14xf32> to vector<14x14xf32>
    %c4_242 = arith.constant 4 : index
    %c0_243 = arith.constant 0 : index
    %c0_244 = arith.constant 0 : index
    %186 = vector.load %arg2[%c4_242, %c0_243, %c0_244] : memref<9x14x224xf32, #tpu.memory_space<vmem>>, vector<1x14x224xf32>
    %187 = vector.shape_cast %186 : vector<1x14x224xf32> to vector<14x224xf32>
    %cst_245 = arith.constant dense<0.000000e+00> : vector<14x224xf32>
    %188 = tpu.matmul %185, %187, %cst_245 {dimension_numbers = #tpu.dot_dimension_numbers<[1], [0], [0], [1], [0, 0, 1, 1], [], []>} : vector<14x14xf32>, vector<14x224xf32>, vector<14x224xf32> -> vector<14x224xf32>
    %189 = arith.addf %183, %188 : vector<14x224xf32>
    %c0_246 = arith.constant 0 : index
    %c3_247 = arith.constant 3 : index
    %c1_248 = arith.constant 1 : index
    %c0_249 = arith.constant 0 : index
    %190 = vector.load %arg1[%c0_246, %c3_247, %c1_248, %c0_249] : memref<1x8x15x14xf32, #tpu.memory_space<vmem>>, vector<1x1x14x14xf32>
    %191 = vector.shape_cast %190 : vector<1x1x14x14xf32> to vector<14x14xf32>
    %c5_250 = arith.constant 5 : index
    %c0_251 = arith.constant 0 : index
    %c0_252 = arith.constant 0 : index
    %192 = vector.load %arg2[%c5_250, %c0_251, %c0_252] : memref<9x14x224xf32, #tpu.memory_space<vmem>>, vector<1x14x224xf32>
    %193 = vector.shape_cast %192 : vector<1x14x224xf32> to vector<14x224xf32>
    %cst_253 = arith.constant dense<0.000000e+00> : vector<14x224xf32>
    %194 = tpu.matmul %191, %193, %cst_253 {dimension_numbers = #tpu.dot_dimension_numbers<[1], [0], [0], [1], [0, 0, 1, 1], [], []>} : vector<14x14xf32>, vector<14x224xf32>, vector<14x224xf32> -> vector<14x224xf32>
    %195 = arith.addf %189, %194 : vector<14x224xf32>
    %c0_254 = arith.constant 0 : index
    %c5_255 = arith.constant 5 : index
    %c1_256 = arith.constant 1 : index
    %c0_257 = arith.constant 0 : index
    %196 = vector.load %arg1[%c0_254, %c5_255, %c1_256, %c0_257] : memref<1x8x15x14xf32, #tpu.memory_space<vmem>>, vector<1x1x14x14xf32>
    %197 = vector.shape_cast %196 : vector<1x1x14x14xf32> to vector<14x14xf32>
    %c6_258 = arith.constant 6 : index
    %c0_259 = arith.constant 0 : index
    %c0_260 = arith.constant 0 : index
    %198 = vector.load %arg2[%c6_258, %c0_259, %c0_260] : memref<9x14x224xf32, #tpu.memory_space<vmem>>, vector<1x14x224xf32>
    %199 = vector.shape_cast %198 : vector<1x14x224xf32> to vector<14x224xf32>
    %cst_261 = arith.constant dense<0.000000e+00> : vector<14x224xf32>
    %200 = tpu.matmul %197, %199, %cst_261 {dimension_numbers = #tpu.dot_dimension_numbers<[1], [0], [0], [1], [0, 0, 1, 1], [], []>} : vector<14x14xf32>, vector<14x224xf32>, vector<14x224xf32> -> vector<14x224xf32>
    %201 = arith.addf %195, %200 : vector<14x224xf32>
    %c0_262 = arith.constant 0 : index
    %c6_263 = arith.constant 6 : index
    %c1_264 = arith.constant 1 : index
    %c0_265 = arith.constant 0 : index
    %202 = vector.load %arg1[%c0_262, %c6_263, %c1_264, %c0_265] : memref<1x8x15x14xf32, #tpu.memory_space<vmem>>, vector<1x1x14x14xf32>
    %203 = vector.shape_cast %202 : vector<1x1x14x14xf32> to vector<14x14xf32>
    %c7_266 = arith.constant 7 : index
    %c0_267 = arith.constant 0 : index
    %c0_268 = arith.constant 0 : index
    %204 = vector.load %arg2[%c7_266, %c0_267, %c0_268] : memref<9x14x224xf32, #tpu.memory_space<vmem>>, vector<1x14x224xf32>
    %205 = vector.shape_cast %204 : vector<1x14x224xf32> to vector<14x224xf32>
    %cst_269 = arith.constant dense<0.000000e+00> : vector<14x224xf32>
    %206 = tpu.matmul %203, %205, %cst_269 {dimension_numbers = #tpu.dot_dimension_numbers<[1], [0], [0], [1], [0, 0, 1, 1], [], []>} : vector<14x14xf32>, vector<14x224xf32>, vector<14x224xf32> -> vector<14x224xf32>
    %207 = arith.addf %201, %206 : vector<14x224xf32>
    %c0_270 = arith.constant 0 : index
    %c7_271 = arith.constant 7 : index
    %c1_272 = arith.constant 1 : index
    %c0_273 = arith.constant 0 : index
    %208 = vector.load %arg1[%c0_270, %c7_271, %c1_272, %c0_273] : memref<1x8x15x14xf32, #tpu.memory_space<vmem>>, vector<1x1x14x14xf32>
    %209 = vector.shape_cast %208 : vector<1x1x14x14xf32> to vector<14x14xf32>
    %c8_274 = arith.constant 8 : index
    %c0_275 = arith.constant 0 : index
    %c0_276 = arith.constant 0 : index
    %210 = vector.load %arg2[%c8_274, %c0_275, %c0_276] : memref<9x14x224xf32, #tpu.memory_space<vmem>>, vector<1x14x224xf32>
    %211 = vector.shape_cast %210 : vector<1x14x224xf32> to vector<14x224xf32>
    %cst_277 = arith.constant dense<0.000000e+00> : vector<14x224xf32>
    %212 = tpu.matmul %209, %211, %cst_277 {dimension_numbers = #tpu.dot_dimension_numbers<[1], [0], [0], [1], [0, 0, 1, 1], [], []>} : vector<14x14xf32>, vector<14x224xf32>, vector<14x224xf32> -> vector<14x224xf32>
    %213 = arith.addf %207, %212 : vector<14x224xf32>
    %214 = arith.maximumf %160, %213 : vector<14x224xf32>
    %c0_278 = arith.constant 0 : index
    %c0_279 = arith.constant 0 : index
    %215 = vector.load %arg3[%c0_278, %c0_279] : memref<1x224xf32, #tpu.memory_space<vmem>>, vector<1x224xf32>
    %216 = vector.broadcast %215 : vector<1x224xf32> to vector<14x224xf32>
    %217 = arith.addf %214, %216 : vector<14x224xf32>
    %cst_280 = arith.constant 0.000000e+00 : f32
    %218 = vector.broadcast %cst_280 : f32 to vector<14x224xf32>
    %219 = arith.maximumf %217, %218 : vector<14x224xf32>
    %c0_281 = arith.constant 0 : index
    %c0_282 = arith.constant 0 : index
    %c0_283 = arith.constant 0 : index
    %220 = vector.load %arg4[%c0_281, %c0_282, %c0_283] : memref<1x14x224xf32, #tpu.memory_space<vmem>>, vector<1x14x224xf32>
    %221 = vector.shape_cast %220 : vector<1x14x224xf32> to vector<14x224xf32>
    %222 = vector.shape_cast %219 : vector<14x224xf32> to vector<1x14x224xf32>
    tpu.vector_store %arg4[%c0_281, %c0_282, %c0_283], %222 {strides = array<i32>} : memref<1x14x224xf32, #tpu.memory_space<vmem>>, vector<1x14x224xf32>,
    return
  }
  func.func @transform_0(%arg0: i32) -> (i32, i32, i32, i32) {
    %c0_i32 = arith.constant 0 : i32
    %c0_i32_0 = arith.constant 0 : i32
    %c0_i32_1 = arith.constant 0 : i32
    %c0_i32_2 = arith.constant 0 : i32
    return %arg0, %c0_i32, %c0_i32_0, %c0_i32_1 : i32, i32, i32, i32
  }
  func.func @transform_1(%arg0: i32) -> (i32, i32, i32) {
    %c0_i32 = arith.constant 0 : i32
    %c0_i32_0 = arith.constant 0 : i32
    %c0_i32_1 = arith.constant 0 : i32
    %c0_i32_2 = arith.constant 0 : i32
    return %c0_i32, %c0_i32_0, %c0_i32_1 : i32, i32, i32
  }
  func.func @transform_2(%arg0: i32) -> (i32, i32) {
    %c0_i32 = arith.constant 0 : i32
    %c0_i32_0 = arith.constant 0 : i32
    %c0_i32_1 = arith.constant 0 : i32
    return %c0_i32, %c0_i32_0 : i32, i32
  }
  func.func @transform_3(%arg0: i32) -> (i32, i32, i32) {
    %c0_i32 = arith.constant 0 : i32
    %c0_i32_0 = arith.constant 0 : i32
    %c0_i32_1 = arith.constant 0 : i32
    return %arg0, %c0_i32, %c0_i32_0 : i32, i32, i32
  }
}

module attributes {stable_mosaic.version = 11 : i64} {
  func.func @_conv_relu_pool_kernel(%arg0: i32, %arg1: memref<1x8x8x112xf32, #tpu.memory_space<vmem>>, %arg2: memref<9x112x224xf32, #tpu.memory_space<vmem>>, %arg3: memref<1x224xf32, #tpu.memory_space<vmem>>, %arg4: memref<1x7x224xf32, #tpu.memory_space<vmem>>) attributes {dimension_semantics = [#tpu.dimension_semantics<parallel>], iteration_bounds = array<i64: 2>, scalar_prefetch = 0 : i64, scratch_operands = 0 : i64, tpu.core_type = #tpu.core_type<tc>, window_params = [{transform_indices = @transform_0, window_bounds = array<i64: 1, 8, 8, 112>}, {pipeline_mode = #tpu.pipeline_mode<synchronous>, transform_indices = @transform_1, window_bounds = array<i64: 9, 112, 224>}, {pipeline_mode = #tpu.pipeline_mode<synchronous>, transform_indices = @transform_2, window_bounds = array<i64: 1, 224>}, {transform_indices = @transform_3, window_bounds = array<i64: 1, 7, 224>}]} {
    %c0 = arith.constant 0 : index
    %c0_0 = arith.constant 0 : index
    %c0_1 = arith.constant 0 : index
    %c0_2 = arith.constant 0 : index
    %0 = vector.load %arg1[%c0, %c0_0, %c0_1, %c0_2] : memref<1x8x8x112xf32, #tpu.memory_space<vmem>>, vector<1x1x7x112xf32>
    %1 = vector.shape_cast %0 : vector<1x1x7x112xf32> to vector<7x112xf32>
    %c0_3 = arith.constant 0 : index
    %c0_4 = arith.constant 0 : index
    %c0_5 = arith.constant 0 : index
    %2 = vector.load %arg2[%c0_3, %c0_4, %c0_5] : memref<9x112x224xf32, #tpu.memory_space<vmem>>, vector<1x112x224xf32>
    %3 = vector.shape_cast %2 : vector<1x112x224xf32> to vector<112x224xf32>
    %cst = arith.constant dense<0.000000e+00> : vector<7x224xf32>
    %4 = tpu.matmul %1, %3, %cst {dimension_numbers = #tpu.dot_dimension_numbers<[1], [0], [0], [1], [0, 0, 1, 1], [], []>} : vector<7x112xf32>, vector<112x224xf32>, vector<7x224xf32> -> vector<7x224xf32>
    %c0_6 = arith.constant 0 : index
    %c1 = arith.constant 1 : index
    %c0_7 = arith.constant 0 : index
    %c0_8 = arith.constant 0 : index
    %5 = vector.load %arg1[%c0_6, %c1, %c0_7, %c0_8] : memref<1x8x8x112xf32, #tpu.memory_space<vmem>>, vector<1x1x7x112xf32>
    %6 = vector.shape_cast %5 : vector<1x1x7x112xf32> to vector<7x112xf32>
    %c1_9 = arith.constant 1 : index
    %c0_10 = arith.constant 0 : index
    %c0_11 = arith.constant 0 : index
    %7 = vector.load %arg2[%c1_9, %c0_10, %c0_11] : memref<9x112x224xf32, #tpu.memory_space<vmem>>, vector<1x112x224xf32>
    %8 = vector.shape_cast %7 : vector<1x112x224xf32> to vector<112x224xf32>
    %cst_12 = arith.constant dense<0.000000e+00> : vector<7x224xf32>
    %9 = tpu.matmul %6, %8, %cst_12 {dimension_numbers = #tpu.dot_dimension_numbers<[1], [0], [0], [1], [0, 0, 1, 1], [], []>} : vector<7x112xf32>, vector<112x224xf32>, vector<7x224xf32> -> vector<7x224xf32>
    %10 = arith.addf %4, %9 : vector<7x224xf32>
    %c0_13 = arith.constant 0 : index
    %c2 = arith.constant 2 : index
    %c0_14 = arith.constant 0 : index
    %c0_15 = arith.constant 0 : index
    %11 = vector.load %arg1[%c0_13, %c2, %c0_14, %c0_15] : memref<1x8x8x112xf32, #tpu.memory_space<vmem>>, vector<1x1x7x112xf32>
    %12 = vector.shape_cast %11 : vector<1x1x7x112xf32> to vector<7x112xf32>
    %c2_16 = arith.constant 2 : index
    %c0_17 = arith.constant 0 : index
    %c0_18 = arith.constant 0 : index
    %13 = vector.load %arg2[%c2_16, %c0_17, %c0_18] : memref<9x112x224xf32, #tpu.memory_space<vmem>>, vector<1x112x224xf32>
    %14 = vector.shape_cast %13 : vector<1x112x224xf32> to vector<112x224xf32>
    %cst_19 = arith.constant dense<0.000000e+00> : vector<7x224xf32>
    %15 = tpu.matmul %12, %14, %cst_19 {dimension_numbers = #tpu.dot_dimension_numbers<[1], [0], [0], [1], [0, 0, 1, 1], [], []>} : vector<7x112xf32>, vector<112x224xf32>, vector<7x224xf32> -> vector<7x224xf32>
    %16 = arith.addf %10, %15 : vector<7x224xf32>
    %c0_20 = arith.constant 0 : index
    %c4 = arith.constant 4 : index
    %c0_21 = arith.constant 0 : index
    %c0_22 = arith.constant 0 : index
    %17 = vector.load %arg1[%c0_20, %c4, %c0_21, %c0_22] : memref<1x8x8x112xf32, #tpu.memory_space<vmem>>, vector<1x1x7x112xf32>
    %18 = vector.shape_cast %17 : vector<1x1x7x112xf32> to vector<7x112xf32>
    %c3 = arith.constant 3 : index
    %c0_23 = arith.constant 0 : index
    %c0_24 = arith.constant 0 : index
    %19 = vector.load %arg2[%c3, %c0_23, %c0_24] : memref<9x112x224xf32, #tpu.memory_space<vmem>>, vector<1x112x224xf32>
    %20 = vector.shape_cast %19 : vector<1x112x224xf32> to vector<112x224xf32>
    %cst_25 = arith.constant dense<0.000000e+00> : vector<7x224xf32>
    %21 = tpu.matmul %18, %20, %cst_25 {dimension_numbers = #tpu.dot_dimension_numbers<[1], [0], [0], [1], [0, 0, 1, 1], [], []>} : vector<7x112xf32>, vector<112x224xf32>, vector<7x224xf32> -> vector<7x224xf32>
    %22 = arith.addf %16, %21 : vector<7x224xf32>
    %c0_26 = arith.constant 0 : index
    %c5 = arith.constant 5 : index
    %c0_27 = arith.constant 0 : index
    %c0_28 = arith.constant 0 : index
    %23 = vector.load %arg1[%c0_26, %c5, %c0_27, %c0_28] : memref<1x8x8x112xf32, #tpu.memory_space<vmem>>, vector<1x1x7x112xf32>
    %24 = vector.shape_cast %23 : vector<1x1x7x112xf32> to vector<7x112xf32>
    %c4_29 = arith.constant 4 : index
    %c0_30 = arith.constant 0 : index
    %c0_31 = arith.constant 0 : index
    %25 = vector.load %arg2[%c4_29, %c0_30, %c0_31] : memref<9x112x224xf32, #tpu.memory_space<vmem>>, vector<1x112x224xf32>
    %26 = vector.shape_cast %25 : vector<1x112x224xf32> to vector<112x224xf32>
    %cst_32 = arith.constant dense<0.000000e+00> : vector<7x224xf32>
    %27 = tpu.matmul %24, %26, %cst_32 {dimension_numbers = #tpu.dot_dimension_numbers<[1], [0], [0], [1], [0, 0, 1, 1], [], []>} : vector<7x112xf32>, vector<112x224xf32>, vector<7x224xf32> -> vector<7x224xf32>
    %28 = arith.addf %22, %27 : vector<7x224xf32>
    %c0_33 = arith.constant 0 : index
    %c6 = arith.constant 6 : index
    %c0_34 = arith.constant 0 : index
    %c0_35 = arith.constant 0 : index
    %29 = vector.load %arg1[%c0_33, %c6, %c0_34, %c0_35] : memref<1x8x8x112xf32, #tpu.memory_space<vmem>>, vector<1x1x7x112xf32>
    %30 = vector.shape_cast %29 : vector<1x1x7x112xf32> to vector<7x112xf32>
    %c5_36 = arith.constant 5 : index
    %c0_37 = arith.constant 0 : index
    %c0_38 = arith.constant 0 : index
    %31 = vector.load %arg2[%c5_36, %c0_37, %c0_38] : memref<9x112x224xf32, #tpu.memory_space<vmem>>, vector<1x112x224xf32>
    %32 = vector.shape_cast %31 : vector<1x112x224xf32> to vector<112x224xf32>
    %cst_39 = arith.constant dense<0.000000e+00> : vector<7x224xf32>
    %33 = tpu.matmul %30, %32, %cst_39 {dimension_numbers = #tpu.dot_dimension_numbers<[1], [0], [0], [1], [0, 0, 1, 1], [], []>} : vector<7x112xf32>, vector<112x224xf32>, vector<7x224xf32> -> vector<7x224xf32>
    %34 = arith.addf %28, %33 : vector<7x224xf32>
    %c0_40 = arith.constant 0 : index
    %c0_41 = arith.constant 0 : index
    %c1_42 = arith.constant 1 : index
    %c0_43 = arith.constant 0 : index
    %35 = vector.load %arg1[%c0_40, %c0_41, %c1_42, %c0_43] : memref<1x8x8x112xf32, #tpu.memory_space<vmem>>, vector<1x1x7x112xf32>
    %36 = vector.shape_cast %35 : vector<1x1x7x112xf32> to vector<7x112xf32>
    %c6_44 = arith.constant 6 : index
    %c0_45 = arith.constant 0 : index
    %c0_46 = arith.constant 0 : index
    %37 = vector.load %arg2[%c6_44, %c0_45, %c0_46] : memref<9x112x224xf32, #tpu.memory_space<vmem>>, vector<1x112x224xf32>
    %38 = vector.shape_cast %37 : vector<1x112x224xf32> to vector<112x224xf32>
    %cst_47 = arith.constant dense<0.000000e+00> : vector<7x224xf32>
    %39 = tpu.matmul %36, %38, %cst_47 {dimension_numbers = #tpu.dot_dimension_numbers<[1], [0], [0], [1], [0, 0, 1, 1], [], []>} : vector<7x112xf32>, vector<112x224xf32>, vector<7x224xf32> -> vector<7x224xf32>
    %40 = arith.addf %34, %39 : vector<7x224xf32>
    %c0_48 = arith.constant 0 : index
    %c1_49 = arith.constant 1 : index
    %c1_50 = arith.constant 1 : index
    %c0_51 = arith.constant 0 : index
    %41 = vector.load %arg1[%c0_48, %c1_49, %c1_50, %c0_51] : memref<1x8x8x112xf32, #tpu.memory_space<vmem>>, vector<1x1x7x112xf32>
    %42 = vector.shape_cast %41 : vector<1x1x7x112xf32> to vector<7x112xf32>
    %c7 = arith.constant 7 : index
    %c0_52 = arith.constant 0 : index
    %c0_53 = arith.constant 0 : index
    %43 = vector.load %arg2[%c7, %c0_52, %c0_53] : memref<9x112x224xf32, #tpu.memory_space<vmem>>, vector<1x112x224xf32>
    %44 = vector.shape_cast %43 : vector<1x112x224xf32> to vector<112x224xf32>
    %cst_54 = arith.constant dense<0.000000e+00> : vector<7x224xf32>
    %45 = tpu.matmul %42, %44, %cst_54 {dimension_numbers = #tpu.dot_dimension_numbers<[1], [0], [0], [1], [0, 0, 1, 1], [], []>} : vector<7x112xf32>, vector<112x224xf32>, vector<7x224xf32> -> vector<7x224xf32>
    %46 = arith.addf %40, %45 : vector<7x224xf32>
    %c0_55 = arith.constant 0 : index
    %c2_56 = arith.constant 2 : index
    %c1_57 = arith.constant 1 : index
    %c0_58 = arith.constant 0 : index
    %47 = vector.load %arg1[%c0_55, %c2_56, %c1_57, %c0_58] : memref<1x8x8x112xf32, #tpu.memory_space<vmem>>, vector<1x1x7x112xf32>
    %48 = vector.shape_cast %47 : vector<1x1x7x112xf32> to vector<7x112xf32>
    %c8 = arith.constant 8 : index
    %c0_59 = arith.constant 0 : index
    %c0_60 = arith.constant 0 : index
    %49 = vector.load %arg2[%c8, %c0_59, %c0_60] : memref<9x112x224xf32, #tpu.memory_space<vmem>>, vector<1x112x224xf32>
    %50 = vector.shape_cast %49 : vector<1x112x224xf32> to vector<112x224xf32>
    %cst_61 = arith.constant dense<0.000000e+00> : vector<7x224xf32>
    %51 = tpu.matmul %48, %50, %cst_61 {dimension_numbers = #tpu.dot_dimension_numbers<[1], [0], [0], [1], [0, 0, 1, 1], [], []>} : vector<7x112xf32>, vector<112x224xf32>, vector<7x224xf32> -> vector<7x224xf32>
    %52 = arith.addf %46, %51 : vector<7x224xf32>
    %c0_62 = arith.constant 0 : index
    %c1_63 = arith.constant 1 : index
    %c0_64 = arith.constant 0 : index
    %c0_65 = arith.constant 0 : index
    %53 = vector.load %arg1[%c0_62, %c1_63, %c0_64, %c0_65] : memref<1x8x8x112xf32, #tpu.memory_space<vmem>>, vector<1x1x7x112xf32>
    %54 = vector.shape_cast %53 : vector<1x1x7x112xf32> to vector<7x112xf32>
    %c0_66 = arith.constant 0 : index
    %c0_67 = arith.constant 0 : index
    %c0_68 = arith.constant 0 : index
    %55 = vector.load %arg2[%c0_66, %c0_67, %c0_68] : memref<9x112x224xf32, #tpu.memory_space<vmem>>, vector<1x112x224xf32>
    %56 = vector.shape_cast %55 : vector<1x112x224xf32> to vector<112x224xf32>
    %cst_69 = arith.constant dense<0.000000e+00> : vector<7x224xf32>
    %57 = tpu.matmul %54, %56, %cst_69 {dimension_numbers = #tpu.dot_dimension_numbers<[1], [0], [0], [1], [0, 0, 1, 1], [], []>} : vector<7x112xf32>, vector<112x224xf32>, vector<7x224xf32> -> vector<7x224xf32>
    %c0_70 = arith.constant 0 : index
    %c2_71 = arith.constant 2 : index
    %c0_72 = arith.constant 0 : index
    %c0_73 = arith.constant 0 : index
    %58 = vector.load %arg1[%c0_70, %c2_71, %c0_72, %c0_73] : memref<1x8x8x112xf32, #tpu.memory_space<vmem>>, vector<1x1x7x112xf32>
    %59 = vector.shape_cast %58 : vector<1x1x7x112xf32> to vector<7x112xf32>
    %c1_74 = arith.constant 1 : index
    %c0_75 = arith.constant 0 : index
    %c0_76 = arith.constant 0 : index
    %60 = vector.load %arg2[%c1_74, %c0_75, %c0_76] : memref<9x112x224xf32, #tpu.memory_space<vmem>>, vector<1x112x224xf32>
    %61 = vector.shape_cast %60 : vector<1x112x224xf32> to vector<112x224xf32>
    %cst_77 = arith.constant dense<0.000000e+00> : vector<7x224xf32>
    %62 = tpu.matmul %59, %61, %cst_77 {dimension_numbers = #tpu.dot_dimension_numbers<[1], [0], [0], [1], [0, 0, 1, 1], [], []>} : vector<7x112xf32>, vector<112x224xf32>, vector<7x224xf32> -> vector<7x224xf32>
    %63 = arith.addf %57, %62 : vector<7x224xf32>
    %c0_78 = arith.constant 0 : index
    %c3_79 = arith.constant 3 : index
    %c0_80 = arith.constant 0 : index
    %c0_81 = arith.constant 0 : index
    %64 = vector.load %arg1[%c0_78, %c3_79, %c0_80, %c0_81] : memref<1x8x8x112xf32, #tpu.memory_space<vmem>>, vector<1x1x7x112xf32>
    %65 = vector.shape_cast %64 : vector<1x1x7x112xf32> to vector<7x112xf32>
    %c2_82 = arith.constant 2 : index
    %c0_83 = arith.constant 0 : index
    %c0_84 = arith.constant 0 : index
    %66 = vector.load %arg2[%c2_82, %c0_83, %c0_84] : memref<9x112x224xf32, #tpu.memory_space<vmem>>, vector<1x112x224xf32>
    %67 = vector.shape_cast %66 : vector<1x112x224xf32> to vector<112x224xf32>
    %cst_85 = arith.constant dense<0.000000e+00> : vector<7x224xf32>
    %68 = tpu.matmul %65, %67, %cst_85 {dimension_numbers = #tpu.dot_dimension_numbers<[1], [0], [0], [1], [0, 0, 1, 1], [], []>} : vector<7x112xf32>, vector<112x224xf32>, vector<7x224xf32> -> vector<7x224xf32>
    %69 = arith.addf %63, %68 : vector<7x224xf32>
    %c0_86 = arith.constant 0 : index
    %c5_87 = arith.constant 5 : index
    %c0_88 = arith.constant 0 : index
    %c0_89 = arith.constant 0 : index
    %70 = vector.load %arg1[%c0_86, %c5_87, %c0_88, %c0_89] : memref<1x8x8x112xf32, #tpu.memory_space<vmem>>, vector<1x1x7x112xf32>
    %71 = vector.shape_cast %70 : vector<1x1x7x112xf32> to vector<7x112xf32>
    %c3_90 = arith.constant 3 : index
    %c0_91 = arith.constant 0 : index
    %c0_92 = arith.constant 0 : index
    %72 = vector.load %arg2[%c3_90, %c0_91, %c0_92] : memref<9x112x224xf32, #tpu.memory_space<vmem>>, vector<1x112x224xf32>
    %73 = vector.shape_cast %72 : vector<1x112x224xf32> to vector<112x224xf32>
    %cst_93 = arith.constant dense<0.000000e+00> : vector<7x224xf32>
    %74 = tpu.matmul %71, %73, %cst_93 {dimension_numbers = #tpu.dot_dimension_numbers<[1], [0], [0], [1], [0, 0, 1, 1], [], []>} : vector<7x112xf32>, vector<112x224xf32>, vector<7x224xf32> -> vector<7x224xf32>
    %75 = arith.addf %69, %74 : vector<7x224xf32>
    %c0_94 = arith.constant 0 : index
    %c6_95 = arith.constant 6 : index
    %c0_96 = arith.constant 0 : index
    %c0_97 = arith.constant 0 : index
    %76 = vector.load %arg1[%c0_94, %c6_95, %c0_96, %c0_97] : memref<1x8x8x112xf32, #tpu.memory_space<vmem>>, vector<1x1x7x112xf32>
    %77 = vector.shape_cast %76 : vector<1x1x7x112xf32> to vector<7x112xf32>
    %c4_98 = arith.constant 4 : index
    %c0_99 = arith.constant 0 : index
    %c0_100 = arith.constant 0 : index
    %78 = vector.load %arg2[%c4_98, %c0_99, %c0_100] : memref<9x112x224xf32, #tpu.memory_space<vmem>>, vector<1x112x224xf32>
    %79 = vector.shape_cast %78 : vector<1x112x224xf32> to vector<112x224xf32>
    %cst_101 = arith.constant dense<0.000000e+00> : vector<7x224xf32>
    %80 = tpu.matmul %77, %79, %cst_101 {dimension_numbers = #tpu.dot_dimension_numbers<[1], [0], [0], [1], [0, 0, 1, 1], [], []>} : vector<7x112xf32>, vector<112x224xf32>, vector<7x224xf32> -> vector<7x224xf32>
    %81 = arith.addf %75, %80 : vector<7x224xf32>
    %c0_102 = arith.constant 0 : index
    %c7_103 = arith.constant 7 : index
    %c0_104 = arith.constant 0 : index
    %c0_105 = arith.constant 0 : index
    %82 = vector.load %arg1[%c0_102, %c7_103, %c0_104, %c0_105] : memref<1x8x8x112xf32, #tpu.memory_space<vmem>>, vector<1x1x7x112xf32>
    %83 = vector.shape_cast %82 : vector<1x1x7x112xf32> to vector<7x112xf32>
    %c5_106 = arith.constant 5 : index
    %c0_107 = arith.constant 0 : index
    %c0_108 = arith.constant 0 : index
    %84 = vector.load %arg2[%c5_106, %c0_107, %c0_108] : memref<9x112x224xf32, #tpu.memory_space<vmem>>, vector<1x112x224xf32>
    %85 = vector.shape_cast %84 : vector<1x112x224xf32> to vector<112x224xf32>
    %cst_109 = arith.constant dense<0.000000e+00> : vector<7x224xf32>
    %86 = tpu.matmul %83, %85, %cst_109 {dimension_numbers = #tpu.dot_dimension_numbers<[1], [0], [0], [1], [0, 0, 1, 1], [], []>} : vector<7x112xf32>, vector<112x224xf32>, vector<7x224xf32> -> vector<7x224xf32>
    %87 = arith.addf %81, %86 : vector<7x224xf32>
    %c0_110 = arith.constant 0 : index
    %c1_111 = arith.constant 1 : index
    %c1_112 = arith.constant 1 : index
    %c0_113 = arith.constant 0 : index
    %88 = vector.load %arg1[%c0_110, %c1_111, %c1_112, %c0_113] : memref<1x8x8x112xf32, #tpu.memory_space<vmem>>, vector<1x1x7x112xf32>
    %89 = vector.shape_cast %88 : vector<1x1x7x112xf32> to vector<7x112xf32>
    %c6_114 = arith.constant 6 : index
    %c0_115 = arith.constant 0 : index
    %c0_116 = arith.constant 0 : index
    %90 = vector.load %arg2[%c6_114, %c0_115, %c0_116] : memref<9x112x224xf32, #tpu.memory_space<vmem>>, vector<1x112x224xf32>
    %91 = vector.shape_cast %90 : vector<1x112x224xf32> to vector<112x224xf32>
    %cst_117 = arith.constant dense<0.000000e+00> : vector<7x224xf32>
    %92 = tpu.matmul %89, %91, %cst_117 {dimension_numbers = #tpu.dot_dimension_numbers<[1], [0], [0], [1], [0, 0, 1, 1], [], []>} : vector<7x112xf32>, vector<112x224xf32>, vector<7x224xf32> -> vector<7x224xf32>
    %93 = arith.addf %87, %92 : vector<7x224xf32>
    %c0_118 = arith.constant 0 : index
    %c2_119 = arith.constant 2 : index
    %c1_120 = arith.constant 1 : index
    %c0_121 = arith.constant 0 : index
    %94 = vector.load %arg1[%c0_118, %c2_119, %c1_120, %c0_121] : memref<1x8x8x112xf32, #tpu.memory_space<vmem>>, vector<1x1x7x112xf32>
    %95 = vector.shape_cast %94 : vector<1x1x7x112xf32> to vector<7x112xf32>
    %c7_122 = arith.constant 7 : index
    %c0_123 = arith.constant 0 : index
    %c0_124 = arith.constant 0 : index
    %96 = vector.load %arg2[%c7_122, %c0_123, %c0_124] : memref<9x112x224xf32, #tpu.memory_space<vmem>>, vector<1x112x224xf32>
    %97 = vector.shape_cast %96 : vector<1x112x224xf32> to vector<112x224xf32>
    %cst_125 = arith.constant dense<0.000000e+00> : vector<7x224xf32>
    %98 = tpu.matmul %95, %97, %cst_125 {dimension_numbers = #tpu.dot_dimension_numbers<[1], [0], [0], [1], [0, 0, 1, 1], [], []>} : vector<7x112xf32>, vector<112x224xf32>, vector<7x224xf32> -> vector<7x224xf32>
    %99 = arith.addf %93, %98 : vector<7x224xf32>
    %c0_126 = arith.constant 0 : index
    %c3_127 = arith.constant 3 : index
    %c1_128 = arith.constant 1 : index
    %c0_129 = arith.constant 0 : index
    %100 = vector.load %arg1[%c0_126, %c3_127, %c1_128, %c0_129] : memref<1x8x8x112xf32, #tpu.memory_space<vmem>>, vector<1x1x7x112xf32>
    %101 = vector.shape_cast %100 : vector<1x1x7x112xf32> to vector<7x112xf32>
    %c8_130 = arith.constant 8 : index
    %c0_131 = arith.constant 0 : index
    %c0_132 = arith.constant 0 : index
    %102 = vector.load %arg2[%c8_130, %c0_131, %c0_132] : memref<9x112x224xf32, #tpu.memory_space<vmem>>, vector<1x112x224xf32>
    %103 = vector.shape_cast %102 : vector<1x112x224xf32> to vector<112x224xf32>
    %cst_133 = arith.constant dense<0.000000e+00> : vector<7x224xf32>
    %104 = tpu.matmul %101, %103, %cst_133 {dimension_numbers = #tpu.dot_dimension_numbers<[1], [0], [0], [1], [0, 0, 1, 1], [], []>} : vector<7x112xf32>, vector<112x224xf32>, vector<7x224xf32> -> vector<7x224xf32>
    %105 = arith.addf %99, %104 : vector<7x224xf32>
    %106 = arith.maximumf %52, %105 : vector<7x224xf32>
    %c0_134 = arith.constant 0 : index
    %c4_135 = arith.constant 4 : index
    %c0_136 = arith.constant 0 : index
    %c0_137 = arith.constant 0 : index
    %107 = vector.load %arg1[%c0_134, %c4_135, %c0_136, %c0_137] : memref<1x8x8x112xf32, #tpu.memory_space<vmem>>, vector<1x1x7x112xf32>
    %108 = vector.shape_cast %107 : vector<1x1x7x112xf32> to vector<7x112xf32>
    %c0_138 = arith.constant 0 : index
    %c0_139 = arith.constant 0 : index
    %c0_140 = arith.constant 0 : index
    %109 = vector.load %arg2[%c0_138, %c0_139, %c0_140] : memref<9x112x224xf32, #tpu.memory_space<vmem>>, vector<1x112x224xf32>
    %110 = vector.shape_cast %109 : vector<1x112x224xf32> to vector<112x224xf32>
    %cst_141 = arith.constant dense<0.000000e+00> : vector<7x224xf32>
    %111 = tpu.matmul %108, %110, %cst_141 {dimension_numbers = #tpu.dot_dimension_numbers<[1], [0], [0], [1], [0, 0, 1, 1], [], []>} : vector<7x112xf32>, vector<112x224xf32>, vector<7x224xf32> -> vector<7x224xf32>
    %c0_142 = arith.constant 0 : index
    %c5_143 = arith.constant 5 : index
    %c0_144 = arith.constant 0 : index
    %c0_145 = arith.constant 0 : index
    %112 = vector.load %arg1[%c0_142, %c5_143, %c0_144, %c0_145] : memref<1x8x8x112xf32, #tpu.memory_space<vmem>>, vector<1x1x7x112xf32>
    %113 = vector.shape_cast %112 : vector<1x1x7x112xf32> to vector<7x112xf32>
    %c1_146 = arith.constant 1 : index
    %c0_147 = arith.constant 0 : index
    %c0_148 = arith.constant 0 : index
    %114 = vector.load %arg2[%c1_146, %c0_147, %c0_148] : memref<9x112x224xf32, #tpu.memory_space<vmem>>, vector<1x112x224xf32>
    %115 = vector.shape_cast %114 : vector<1x112x224xf32> to vector<112x224xf32>
    %cst_149 = arith.constant dense<0.000000e+00> : vector<7x224xf32>
    %116 = tpu.matmul %113, %115, %cst_149 {dimension_numbers = #tpu.dot_dimension_numbers<[1], [0], [0], [1], [0, 0, 1, 1], [], []>} : vector<7x112xf32>, vector<112x224xf32>, vector<7x224xf32> -> vector<7x224xf32>
    %117 = arith.addf %111, %116 : vector<7x224xf32>
    %c0_150 = arith.constant 0 : index
    %c6_151 = arith.constant 6 : index
    %c0_152 = arith.constant 0 : index
    %c0_153 = arith.constant 0 : index
    %118 = vector.load %arg1[%c0_150, %c6_151, %c0_152, %c0_153] : memref<1x8x8x112xf32, #tpu.memory_space<vmem>>, vector<1x1x7x112xf32>
    %119 = vector.shape_cast %118 : vector<1x1x7x112xf32> to vector<7x112xf32>
    %c2_154 = arith.constant 2 : index
    %c0_155 = arith.constant 0 : index
    %c0_156 = arith.constant 0 : index
    %120 = vector.load %arg2[%c2_154, %c0_155, %c0_156] : memref<9x112x224xf32, #tpu.memory_space<vmem>>, vector<1x112x224xf32>
    %121 = vector.shape_cast %120 : vector<1x112x224xf32> to vector<112x224xf32>
    %cst_157 = arith.constant dense<0.000000e+00> : vector<7x224xf32>
    %122 = tpu.matmul %119, %121, %cst_157 {dimension_numbers = #tpu.dot_dimension_numbers<[1], [0], [0], [1], [0, 0, 1, 1], [], []>} : vector<7x112xf32>, vector<112x224xf32>, vector<7x224xf32> -> vector<7x224xf32>
    %123 = arith.addf %117, %122 : vector<7x224xf32>
    %c0_158 = arith.constant 0 : index
    %c0_159 = arith.constant 0 : index
    %c1_160 = arith.constant 1 : index
    %c0_161 = arith.constant 0 : index
    %124 = vector.load %arg1[%c0_158, %c0_159, %c1_160, %c0_161] : memref<1x8x8x112xf32, #tpu.memory_space<vmem>>, vector<1x1x7x112xf32>
    %125 = vector.shape_cast %124 : vector<1x1x7x112xf32> to vector<7x112xf32>
    %c3_162 = arith.constant 3 : index
    %c0_163 = arith.constant 0 : index
    %c0_164 = arith.constant 0 : index
    %126 = vector.load %arg2[%c3_162, %c0_163, %c0_164] : memref<9x112x224xf32, #tpu.memory_space<vmem>>, vector<1x112x224xf32>
    %127 = vector.shape_cast %126 : vector<1x112x224xf32> to vector<112x224xf32>
    %cst_165 = arith.constant dense<0.000000e+00> : vector<7x224xf32>
    %128 = tpu.matmul %125, %127, %cst_165 {dimension_numbers = #tpu.dot_dimension_numbers<[1], [0], [0], [1], [0, 0, 1, 1], [], []>} : vector<7x112xf32>, vector<112x224xf32>, vector<7x224xf32> -> vector<7x224xf32>
    %129 = arith.addf %123, %128 : vector<7x224xf32>
    %c0_166 = arith.constant 0 : index
    %c1_167 = arith.constant 1 : index
    %c1_168 = arith.constant 1 : index
    %c0_169 = arith.constant 0 : index
    %130 = vector.load %arg1[%c0_166, %c1_167, %c1_168, %c0_169] : memref<1x8x8x112xf32, #tpu.memory_space<vmem>>, vector<1x1x7x112xf32>
    %131 = vector.shape_cast %130 : vector<1x1x7x112xf32> to vector<7x112xf32>
    %c4_170 = arith.constant 4 : index
    %c0_171 = arith.constant 0 : index
    %c0_172 = arith.constant 0 : index
    %132 = vector.load %arg2[%c4_170, %c0_171, %c0_172] : memref<9x112x224xf32, #tpu.memory_space<vmem>>, vector<1x112x224xf32>
    %133 = vector.shape_cast %132 : vector<1x112x224xf32> to vector<112x224xf32>
    %cst_173 = arith.constant dense<0.000000e+00> : vector<7x224xf32>
    %134 = tpu.matmul %131, %133, %cst_173 {dimension_numbers = #tpu.dot_dimension_numbers<[1], [0], [0], [1], [0, 0, 1, 1], [], []>} : vector<7x112xf32>, vector<112x224xf32>, vector<7x224xf32> -> vector<7x224xf32>
    %135 = arith.addf %129, %134 : vector<7x224xf32>
    %c0_174 = arith.constant 0 : index
    %c2_175 = arith.constant 2 : index
    %c1_176 = arith.constant 1 : index
    %c0_177 = arith.constant 0 : index
    %136 = vector.load %arg1[%c0_174, %c2_175, %c1_176, %c0_177] : memref<1x8x8x112xf32, #tpu.memory_space<vmem>>, vector<1x1x7x112xf32>
    %137 = vector.shape_cast %136 : vector<1x1x7x112xf32> to vector<7x112xf32>
    %c5_178 = arith.constant 5 : index
    %c0_179 = arith.constant 0 : index
    %c0_180 = arith.constant 0 : index
    %138 = vector.load %arg2[%c5_178, %c0_179, %c0_180] : memref<9x112x224xf32, #tpu.memory_space<vmem>>, vector<1x112x224xf32>
    %139 = vector.shape_cast %138 : vector<1x112x224xf32> to vector<112x224xf32>
    %cst_181 = arith.constant dense<0.000000e+00> : vector<7x224xf32>
    %140 = tpu.matmul %137, %139, %cst_181 {dimension_numbers = #tpu.dot_dimension_numbers<[1], [0], [0], [1], [0, 0, 1, 1], [], []>} : vector<7x112xf32>, vector<112x224xf32>, vector<7x224xf32> -> vector<7x224xf32>
    %141 = arith.addf %135, %140 : vector<7x224xf32>
    %c0_182 = arith.constant 0 : index
    %c4_183 = arith.constant 4 : index
    %c1_184 = arith.constant 1 : index
    %c0_185 = arith.constant 0 : index
    %142 = vector.load %arg1[%c0_182, %c4_183, %c1_184, %c0_185] : memref<1x8x8x112xf32, #tpu.memory_space<vmem>>, vector<1x1x7x112xf32>
    %143 = vector.shape_cast %142 : vector<1x1x7x112xf32> to vector<7x112xf32>
    %c6_186 = arith.constant 6 : index
    %c0_187 = arith.constant 0 : index
    %c0_188 = arith.constant 0 : index
    %144 = vector.load %arg2[%c6_186, %c0_187, %c0_188] : memref<9x112x224xf32, #tpu.memory_space<vmem>>, vector<1x112x224xf32>
    %145 = vector.shape_cast %144 : vector<1x112x224xf32> to vector<112x224xf32>
    %cst_189 = arith.constant dense<0.000000e+00> : vector<7x224xf32>
    %146 = tpu.matmul %143, %145, %cst_189 {dimension_numbers = #tpu.dot_dimension_numbers<[1], [0], [0], [1], [0, 0, 1, 1], [], []>} : vector<7x112xf32>, vector<112x224xf32>, vector<7x224xf32> -> vector<7x224xf32>
    %147 = arith.addf %141, %146 : vector<7x224xf32>
    %c0_190 = arith.constant 0 : index
    %c5_191 = arith.constant 5 : index
    %c1_192 = arith.constant 1 : index
    %c0_193 = arith.constant 0 : index
    %148 = vector.load %arg1[%c0_190, %c5_191, %c1_192, %c0_193] : memref<1x8x8x112xf32, #tpu.memory_space<vmem>>, vector<1x1x7x112xf32>
    %149 = vector.shape_cast %148 : vector<1x1x7x112xf32> to vector<7x112xf32>
    %c7_194 = arith.constant 7 : index
    %c0_195 = arith.constant 0 : index
    %c0_196 = arith.constant 0 : index
    %150 = vector.load %arg2[%c7_194, %c0_195, %c0_196] : memref<9x112x224xf32, #tpu.memory_space<vmem>>, vector<1x112x224xf32>
    %151 = vector.shape_cast %150 : vector<1x112x224xf32> to vector<112x224xf32>
    %cst_197 = arith.constant dense<0.000000e+00> : vector<7x224xf32>
    %152 = tpu.matmul %149, %151, %cst_197 {dimension_numbers = #tpu.dot_dimension_numbers<[1], [0], [0], [1], [0, 0, 1, 1], [], []>} : vector<7x112xf32>, vector<112x224xf32>, vector<7x224xf32> -> vector<7x224xf32>
    %153 = arith.addf %147, %152 : vector<7x224xf32>
    %c0_198 = arith.constant 0 : index
    %c6_199 = arith.constant 6 : index
    %c1_200 = arith.constant 1 : index
    %c0_201 = arith.constant 0 : index
    %154 = vector.load %arg1[%c0_198, %c6_199, %c1_200, %c0_201] : memref<1x8x8x112xf32, #tpu.memory_space<vmem>>, vector<1x1x7x112xf32>
    %155 = vector.shape_cast %154 : vector<1x1x7x112xf32> to vector<7x112xf32>
    %c8_202 = arith.constant 8 : index
    %c0_203 = arith.constant 0 : index
    %c0_204 = arith.constant 0 : index
    %156 = vector.load %arg2[%c8_202, %c0_203, %c0_204] : memref<9x112x224xf32, #tpu.memory_space<vmem>>, vector<1x112x224xf32>
    %157 = vector.shape_cast %156 : vector<1x112x224xf32> to vector<112x224xf32>
    %cst_205 = arith.constant dense<0.000000e+00> : vector<7x224xf32>
    %158 = tpu.matmul %155, %157, %cst_205 {dimension_numbers = #tpu.dot_dimension_numbers<[1], [0], [0], [1], [0, 0, 1, 1], [], []>} : vector<7x112xf32>, vector<112x224xf32>, vector<7x224xf32> -> vector<7x224xf32>
    %159 = arith.addf %153, %158 : vector<7x224xf32>
    %160 = arith.maximumf %106, %159 : vector<7x224xf32>
    %c0_206 = arith.constant 0 : index
    %c5_207 = arith.constant 5 : index
    %c0_208 = arith.constant 0 : index
    %c0_209 = arith.constant 0 : index
    %161 = vector.load %arg1[%c0_206, %c5_207, %c0_208, %c0_209] : memref<1x8x8x112xf32, #tpu.memory_space<vmem>>, vector<1x1x7x112xf32>
    %162 = vector.shape_cast %161 : vector<1x1x7x112xf32> to vector<7x112xf32>
    %c0_210 = arith.constant 0 : index
    %c0_211 = arith.constant 0 : index
    %c0_212 = arith.constant 0 : index
    %163 = vector.load %arg2[%c0_210, %c0_211, %c0_212] : memref<9x112x224xf32, #tpu.memory_space<vmem>>, vector<1x112x224xf32>
    %164 = vector.shape_cast %163 : vector<1x112x224xf32> to vector<112x224xf32>
    %cst_213 = arith.constant dense<0.000000e+00> : vector<7x224xf32>
    %165 = tpu.matmul %162, %164, %cst_213 {dimension_numbers = #tpu.dot_dimension_numbers<[1], [0], [0], [1], [0, 0, 1, 1], [], []>} : vector<7x112xf32>, vector<112x224xf32>, vector<7x224xf32> -> vector<7x224xf32>
    %c0_214 = arith.constant 0 : index
    %c6_215 = arith.constant 6 : index
    %c0_216 = arith.constant 0 : index
    %c0_217 = arith.constant 0 : index
    %166 = vector.load %arg1[%c0_214, %c6_215, %c0_216, %c0_217] : memref<1x8x8x112xf32, #tpu.memory_space<vmem>>, vector<1x1x7x112xf32>
    %167 = vector.shape_cast %166 : vector<1x1x7x112xf32> to vector<7x112xf32>
    %c1_218 = arith.constant 1 : index
    %c0_219 = arith.constant 0 : index
    %c0_220 = arith.constant 0 : index
    %168 = vector.load %arg2[%c1_218, %c0_219, %c0_220] : memref<9x112x224xf32, #tpu.memory_space<vmem>>, vector<1x112x224xf32>
    %169 = vector.shape_cast %168 : vector<1x112x224xf32> to vector<112x224xf32>
    %cst_221 = arith.constant dense<0.000000e+00> : vector<7x224xf32>
    %170 = tpu.matmul %167, %169, %cst_221 {dimension_numbers = #tpu.dot_dimension_numbers<[1], [0], [0], [1], [0, 0, 1, 1], [], []>} : vector<7x112xf32>, vector<112x224xf32>, vector<7x224xf32> -> vector<7x224xf32>
    %171 = arith.addf %165, %170 : vector<7x224xf32>
    %c0_222 = arith.constant 0 : index
    %c7_223 = arith.constant 7 : index
    %c0_224 = arith.constant 0 : index
    %c0_225 = arith.constant 0 : index
    %172 = vector.load %arg1[%c0_222, %c7_223, %c0_224, %c0_225] : memref<1x8x8x112xf32, #tpu.memory_space<vmem>>, vector<1x1x7x112xf32>
    %173 = vector.shape_cast %172 : vector<1x1x7x112xf32> to vector<7x112xf32>
    %c2_226 = arith.constant 2 : index
    %c0_227 = arith.constant 0 : index
    %c0_228 = arith.constant 0 : index
    %174 = vector.load %arg2[%c2_226, %c0_227, %c0_228] : memref<9x112x224xf32, #tpu.memory_space<vmem>>, vector<1x112x224xf32>
    %175 = vector.shape_cast %174 : vector<1x112x224xf32> to vector<112x224xf32>
    %cst_229 = arith.constant dense<0.000000e+00> : vector<7x224xf32>
    %176 = tpu.matmul %173, %175, %cst_229 {dimension_numbers = #tpu.dot_dimension_numbers<[1], [0], [0], [1], [0, 0, 1, 1], [], []>} : vector<7x112xf32>, vector<112x224xf32>, vector<7x224xf32> -> vector<7x224xf32>
    %177 = arith.addf %171, %176 : vector<7x224xf32>
    %c0_230 = arith.constant 0 : index
    %c1_231 = arith.constant 1 : index
    %c1_232 = arith.constant 1 : index
    %c0_233 = arith.constant 0 : index
    %178 = vector.load %arg1[%c0_230, %c1_231, %c1_232, %c0_233] : memref<1x8x8x112xf32, #tpu.memory_space<vmem>>, vector<1x1x7x112xf32>
    %179 = vector.shape_cast %178 : vector<1x1x7x112xf32> to vector<7x112xf32>
    %c3_234 = arith.constant 3 : index
    %c0_235 = arith.constant 0 : index
    %c0_236 = arith.constant 0 : index
    %180 = vector.load %arg2[%c3_234, %c0_235, %c0_236] : memref<9x112x224xf32, #tpu.memory_space<vmem>>, vector<1x112x224xf32>
    %181 = vector.shape_cast %180 : vector<1x112x224xf32> to vector<112x224xf32>
    %cst_237 = arith.constant dense<0.000000e+00> : vector<7x224xf32>
    %182 = tpu.matmul %179, %181, %cst_237 {dimension_numbers = #tpu.dot_dimension_numbers<[1], [0], [0], [1], [0, 0, 1, 1], [], []>} : vector<7x112xf32>, vector<112x224xf32>, vector<7x224xf32> -> vector<7x224xf32>
    %183 = arith.addf %177, %182 : vector<7x224xf32>
    %c0_238 = arith.constant 0 : index
    %c2_239 = arith.constant 2 : index
    %c1_240 = arith.constant 1 : index
    %c0_241 = arith.constant 0 : index
    %184 = vector.load %arg1[%c0_238, %c2_239, %c1_240, %c0_241] : memref<1x8x8x112xf32, #tpu.memory_space<vmem>>, vector<1x1x7x112xf32>
    %185 = vector.shape_cast %184 : vector<1x1x7x112xf32> to vector<7x112xf32>
    %c4_242 = arith.constant 4 : index
    %c0_243 = arith.constant 0 : index
    %c0_244 = arith.constant 0 : index
    %186 = vector.load %arg2[%c4_242, %c0_243, %c0_244] : memref<9x112x224xf32, #tpu.memory_space<vmem>>, vector<1x112x224xf32>
    %187 = vector.shape_cast %186 : vector<1x112x224xf32> to vector<112x224xf32>
    %cst_245 = arith.constant dense<0.000000e+00> : vector<7x224xf32>
    %188 = tpu.matmul %185, %187, %cst_245 {dimension_numbers = #tpu.dot_dimension_numbers<[1], [0], [0], [1], [0, 0, 1, 1], [], []>} : vector<7x112xf32>, vector<112x224xf32>, vector<7x224xf32> -> vector<7x224xf32>
    %189 = arith.addf %183, %188 : vector<7x224xf32>
    %c0_246 = arith.constant 0 : index
    %c3_247 = arith.constant 3 : index
    %c1_248 = arith.constant 1 : index
    %c0_249 = arith.constant 0 : index
    %190 = vector.load %arg1[%c0_246, %c3_247, %c1_248, %c0_249] : memref<1x8x8x112xf32, #tpu.memory_space<vmem>>, vector<1x1x7x112xf32>
    %191 = vector.shape_cast %190 : vector<1x1x7x112xf32> to vector<7x112xf32>
    %c5_250 = arith.constant 5 : index
    %c0_251 = arith.constant 0 : index
    %c0_252 = arith.constant 0 : index
    %192 = vector.load %arg2[%c5_250, %c0_251, %c0_252] : memref<9x112x224xf32, #tpu.memory_space<vmem>>, vector<1x112x224xf32>
    %193 = vector.shape_cast %192 : vector<1x112x224xf32> to vector<112x224xf32>
    %cst_253 = arith.constant dense<0.000000e+00> : vector<7x224xf32>
    %194 = tpu.matmul %191, %193, %cst_253 {dimension_numbers = #tpu.dot_dimension_numbers<[1], [0], [0], [1], [0, 0, 1, 1], [], []>} : vector<7x112xf32>, vector<112x224xf32>, vector<7x224xf32> -> vector<7x224xf32>
    %195 = arith.addf %189, %194 : vector<7x224xf32>
    %c0_254 = arith.constant 0 : index
    %c5_255 = arith.constant 5 : index
    %c1_256 = arith.constant 1 : index
    %c0_257 = arith.constant 0 : index
    %196 = vector.load %arg1[%c0_254, %c5_255, %c1_256, %c0_257] : memref<1x8x8x112xf32, #tpu.memory_space<vmem>>, vector<1x1x7x112xf32>
    %197 = vector.shape_cast %196 : vector<1x1x7x112xf32> to vector<7x112xf32>
    %c6_258 = arith.constant 6 : index
    %c0_259 = arith.constant 0 : index
    %c0_260 = arith.constant 0 : index
    %198 = vector.load %arg2[%c6_258, %c0_259, %c0_260] : memref<9x112x224xf32, #tpu.memory_space<vmem>>, vector<1x112x224xf32>
    %199 = vector.shape_cast %198 : vector<1x112x224xf32> to vector<112x224xf32>
    %cst_261 = arith.constant dense<0.000000e+00> : vector<7x224xf32>
    %200 = tpu.matmul %197, %199, %cst_261 {dimension_numbers = #tpu.dot_dimension_numbers<[1], [0], [0], [1], [0, 0, 1, 1], [], []>} : vector<7x112xf32>, vector<112x224xf32>, vector<7x224xf32> -> vector<7x224xf32>
    %201 = arith.addf %195, %200 : vector<7x224xf32>
    %c0_262 = arith.constant 0 : index
    %c6_263 = arith.constant 6 : index
    %c1_264 = arith.constant 1 : index
    %c0_265 = arith.constant 0 : index
    %202 = vector.load %arg1[%c0_262, %c6_263, %c1_264, %c0_265] : memref<1x8x8x112xf32, #tpu.memory_space<vmem>>, vector<1x1x7x112xf32>
    %203 = vector.shape_cast %202 : vector<1x1x7x112xf32> to vector<7x112xf32>
    %c7_266 = arith.constant 7 : index
    %c0_267 = arith.constant 0 : index
    %c0_268 = arith.constant 0 : index
    %204 = vector.load %arg2[%c7_266, %c0_267, %c0_268] : memref<9x112x224xf32, #tpu.memory_space<vmem>>, vector<1x112x224xf32>
    %205 = vector.shape_cast %204 : vector<1x112x224xf32> to vector<112x224xf32>
    %cst_269 = arith.constant dense<0.000000e+00> : vector<7x224xf32>
    %206 = tpu.matmul %203, %205, %cst_269 {dimension_numbers = #tpu.dot_dimension_numbers<[1], [0], [0], [1], [0, 0, 1, 1], [], []>} : vector<7x112xf32>, vector<112x224xf32>, vector<7x224xf32> -> vector<7x224xf32>
    %207 = arith.addf %201, %206 : vector<7x224xf32>
    %c0_270 = arith.constant 0 : index
    %c7_271 = arith.constant 7 : index
    %c1_272 = arith.constant 1 : index
    %c0_273 = arith.constant 0 : index
    %208 = vector.load %arg1[%c0_270, %c7_271, %c1_272, %c0_273] : memref<1x8x8x112xf32, #tpu.memory_space<vmem>>, vector<1x1x7x112xf32>
    %209 = vector.shape_cast %208 : vector<1x1x7x112xf32> to vector<7x112xf32>
    %c8_274 = arith.constant 8 : index
    %c0_275 = arith.constant 0 : index
    %c0_276 = arith.constant 0 : index
    %210 = vector.load %arg2[%c8_274, %c0_275, %c0_276] : memref<9x112x224xf32, #tpu.memory_space<vmem>>, vector<1x112x224xf32>
    %211 = vector.shape_cast %210 : vector<1x112x224xf32> to vector<112x224xf32>
    %cst_277 = arith.constant dense<0.000000e+00> : vector<7x224xf32>
    %212 = tpu.matmul %209, %211, %cst_277 {dimension_numbers = #tpu.dot_dimension_numbers<[1], [0], [0], [1], [0, 0, 1, 1], [], []>} : vector<7x112xf32>, vector<112x224xf32>, vector<7x224xf32> -> vector<7x224xf32>
    %213 = arith.addf %207, %212 : vector<7x224xf32>
    %214 = arith.maximumf %160, %213 : vector<7x224xf32>
    %c0_278 = arith.constant 0 : index
    %c0_279 = arith.constant 0 : index
    %215 = vector.load %arg3[%c0_278, %c0_279] : memref<1x224xf32, #tpu.memory_space<vmem>>, vector<1x224xf32>
    %216 = vector.broadcast %215 : vector<1x224xf32> to vector<7x224xf32>
    %217 = arith.addf %214, %216 : vector<7x224xf32>
    %cst_280 = arith.constant 0.000000e+00 : f32
    %218 = vector.broadcast %cst_280 : f32 to vector<7x224xf32>
    %219 = arith.maximumf %217, %218 : vector<7x224xf32>
    %c0_281 = arith.constant 0 : index
    %c0_282 = arith.constant 0 : index
    %c0_283 = arith.constant 0 : index
    %220 = vector.load %arg4[%c0_281, %c0_282, %c0_283] : memref<1x7x224xf32, #tpu.memory_space<vmem>>, vector<1x7x224xf32>
    %221 = vector.shape_cast %220 : vector<1x7x224xf32> to vector<7x224xf32>
    %222 = vector.shape_cast %219 : vector<7x224xf32> to vector<1x7x224xf32>
    tpu.vector_store %arg4[%c0_281, %c0_282, %c0_283], %222 {strides = array<i32>} : memref<1x7x224xf32, #tpu.memory_space<vmem>>, vector<1x7x224xf32>,
    return
  }
  func.func @transform_0(%arg0: i32) -> (i32, i32, i32, i32) {
    %c0_i32 = arith.constant 0 : i32
    %c0_i32_0 = arith.constant 0 : i32
    %c0_i32_1 = arith.constant 0 : i32
    %c0_i32_2 = arith.constant 0 : i32
    return %arg0, %c0_i32, %c0_i32_0, %c0_i32_1 : i32, i32, i32, i32
  }
  func.func @transform_1(%arg0: i32) -> (i32, i32, i32) {
    %c0_i32 = arith.constant 0 : i32
    %c0_i32_0 = arith.constant 0 : i32
    %c0_i32_1 = arith.constant 0 : i32
    %c0_i32_2 = arith.constant 0 : i32
    return %c0_i32, %c0_i32_0, %c0_i32_1 : i32, i32, i32
  }
  func.func @transform_2(%arg0: i32) -> (i32, i32) {
    %c0_i32 = arith.constant 0 : i32
    %c0_i32_0 = arith.constant 0 : i32
    %c0_i32_1 = arith.constant 0 : i32
    return %c0_i32, %c0_i32_0 : i32, i32
  }
  func.func @transform_3(%arg0: i32) -> (i32, i32, i32) {
    %c0_i32 = arith.constant 0 : i32
    %c0_i32_0 = arith.constant 0 : i32
    %c0_i32_1 = arith.constant 0 : i32
    return %arg0, %c0_i32, %c0_i32_0 : i32, i32, i32
  }
}

module attributes {stable_mosaic.version = 11 : i64} {
  func.func @_linear_softmax_kernel(%arg0: i32, %arg1: memref<2x1568xf32, #tpu.memory_space<vmem>>, %arg2: memref<1568x10xf32, #tpu.memory_space<vmem>>, %arg3: memref<1x10xf32, #tpu.memory_space<vmem>>, %arg4: memref<2x10xf32, #tpu.memory_space<vmem>>) attributes {dimension_semantics = [#tpu.dimension_semantics<parallel>], iteration_bounds = array<i64: 1>, scalar_prefetch = 0 : i64, scratch_operands = 0 : i64, tpu.core_type = #tpu.core_type<tc>, window_params = [{transform_indices = @transform_0, window_bounds = array<i64: 2, 1568>}, {pipeline_mode = #tpu.pipeline_mode<synchronous>, transform_indices = @transform_1, window_bounds = array<i64: 1568, 10>}, {pipeline_mode = #tpu.pipeline_mode<synchronous>, transform_indices = @transform_2, window_bounds = array<i64: 1, 10>}, {transform_indices = @transform_3, window_bounds = array<i64: 2, 10>}]} {
    %c0 = arith.constant 0 : index
    %c0_0 = arith.constant 0 : index
    %0 = vector.load %arg1[%c0, %c0_0] : memref<2x1568xf32, #tpu.memory_space<vmem>>, vector<2x1568xf32>
    %c0_1 = arith.constant 0 : index
    %c0_2 = arith.constant 0 : index
    %1 = vector.load %arg2[%c0_1, %c0_2] : memref<1568x10xf32, #tpu.memory_space<vmem>>, vector<1568x10xf32>
    %cst = arith.constant dense<0.000000e+00> : vector<2x10xf32>
    %2 = tpu.matmul %0, %1, %cst {dimension_numbers = #tpu.dot_dimension_numbers<[1], [0], [0], [1], [0, 0, 1, 1], [], []>} : vector<2x1568xf32>, vector<1568x10xf32>, vector<2x10xf32> -> vector<2x10xf32>
    %c0_3 = arith.constant 0 : index
    %c0_4 = arith.constant 0 : index
    %3 = vector.load %arg3[%c0_3, %c0_4] : memref<1x10xf32, #tpu.memory_space<vmem>>, vector<1x10xf32>
    %4 = vector.broadcast %3 : vector<1x10xf32> to vector<2x10xf32>
    %5 = arith.addf %2, %4 : vector<2x10xf32>
    %cst_5 = arith.constant dense<0xFF800000> : vector<2xf32>
    %6 = vector.multi_reduction <maximumf>, %5, %cst_5 [1] : vector<2x10xf32> to vector<2xf32>
    %7 = vector.shape_cast %6 : vector<2xf32> to vector<2x1xf32>
    %8 = vector.broadcast %7 : vector<2x1xf32> to vector<2x10xf32>
    %9 = arith.subf %5, %8 : vector<2x10xf32>
    %10 = math.exp %9 : vector<2x10xf32>
    %cst_6 = arith.constant dense<0.000000e+00> : vector<2xf32>
    %11 = vector.multi_reduction <add>, %10, %cst_6 [1] : vector<2x10xf32> to vector<2xf32>
    %12 = vector.shape_cast %11 : vector<2xf32> to vector<2x1xf32>
    %13 = tpu.reciprocal %12 {approx = true} : vector<2x1xf32> -> vector<2x1xf32>
    %14 = vector.broadcast %13 : vector<2x1xf32> to vector<2x10xf32>
    %15 = arith.mulf %10, %14 : vector<2x10xf32>
    %c0_7 = arith.constant 0 : index
    %c0_8 = arith.constant 0 : index
    %16 = vector.load %arg4[%c0_7, %c0_8] : memref<2x10xf32, #tpu.memory_space<vmem>>, vector<2x10xf32>
    tpu.vector_store %arg4[%c0_7, %c0_8], %15 {strides = array<i32>} : memref<2x10xf32, #tpu.memory_space<vmem>>, vector<2x10xf32>,
    return
  }
  func.func @transform_0(%arg0: i32) -> (i32, i32) {
    %c0_i32 = arith.constant 0 : i32
    %c0_i32_0 = arith.constant 0 : i32
    return %arg0, %c0_i32 : i32, i32
  }
  func.func @transform_1(%arg0: i32) -> (i32, i32) {
    %c0_i32 = arith.constant 0 : i32
    %c0_i32_0 = arith.constant 0 : i32
    %c0_i32_1 = arith.constant 0 : i32
    return %c0_i32, %c0_i32_0 : i32, i32
  }
  func.func @transform_2(%arg0: i32) -> (i32, i32) {
    %c0_i32 = arith.constant 0 : i32
    %c0_i32_0 = arith.constant 0 : i32
    %c0_i32_1 = arith.constant 0 : i32
    return %c0_i32, %c0_i32_0 : i32, i32
  }
  func.func @transform_3(%arg0: i32) -> (i32, i32) {
    %c0_i32 = arith.constant 0 : i32
    %c0_i32_0 = arith.constant 0 : i32
    return %arg0, %c0_i32 : i32, i32
  }
}

</mosaic_0001>

<llo_original>
// kernel: cnn_forward.3
$region0: #{cnn_forward.3}
  #allocation0 [shape = 'u32[]', space=smem, size = 0x4, offset = 0x4, fixed_abs, tag = 'smem constant byte address 0x4 - core index']
  #allocation1 [shape = 'u32[72,128]{1,0:T(1,128)}', space=vmem, size = 0x9000, scoped, tag = 'internal scratch']
  %s0 = inlined_call_operand.vmem [shape: f32[2,8,15,14], index: 0, kind: input, shape index: {}]
  %s1 = inlined_call_operand.vmem [shape: f32[9,14,224], index: 1, kind: input, shape index: {}]
  %s2 = inlined_call_operand.vmem [shape: f32[1,224], index: 2, kind: input, shape index: {}]
  %s3 = inlined_call_operand.vmem [shape: f32[2,14,224], index: 3, kind: output, shape index: {}]
  %s4 = sld [smem:[#allocation0]]
  $region45: #{cnn_forward.3} parent=0
    _
  %s6 = ssub.s32 1, %s4
  %s7 = scalar_select 0, %s6, %s4
  loop: start=0, step=1, limit=4
  $region2: #{cnn_forward.3} parent=0 // loop_pre_header
    _
  $region3: #{cnn_forward.3} parent=0 // loop_header
    %s9 = sphi 0, %s13
    %p10 = scmp.ge.s32.totalorder %s9, 4
    %s19 = sphi 0, %s21
    %s22 = sphi 0, %s19
    %s23 = sphi 0, %s22
    %s39 = sphi 0, %s23
    %s43 = sphi 0, %s43
    %s45 = sphi 0, %s43
    %s46 = sphi 0, %s45
    %s60 = sphi 0, %s46
    %s64 = sphi 0, %s64
    %s66 = sphi 0, %s64
    %s67 = sphi 0, %s66
    %s81 = sphi 0, %s67
    %s87 = sphi 0, %s89
    %s90 = sphi 0, %s87
    %s91 = sphi 0, %s90
    %s107 = sphi 0, %s91
  $region4: #{cnn_forward.3} parent=0 // loop_header_branch
    %12 = sbr.rel (%p10) target = $region8
  $region5: #{cnn_forward.3} parent=0 // loop_body
    %s14 = ssub.s32 %s9, 1
    %s15 = ssub.s32 %s9, 2
    %s16 = sadd.s32 %s9, 1
    %s17 = ssub.s32 %s9, %s16
    %p18 = scmp.eq.s32.totalorder %s17, 0
    %s20 = sadd.s32 %s19, 1
    %s21 = scalar_select %p18, %s19, %s20
    %p24 = pneg %p18
    %p25 = scmp.eq.s32.totalorder %s9, 1
    %p26 = por %p24, %p25
    %p27 = scmp.ne.s32.totalorder %s19, %s22
    %p28 = scmp.eq.s32.totalorder %s9, 0
    %p29 = por %p27, %p28
    %p30 = scmp.ne.s32.totalorder %s19, %s22
    %p31 = scmp.eq.s32.totalorder %s14, 1
    %p32 = por %p30, %p31
    %p33 = scmp.ne.s32.totalorder %s22, %s23
    %p34 = scmp.eq.s32.totalorder %s14, 0
    %p35 = por %p33, %p34
    %p36 = scmp.ne.s32.totalorder %s22, %s23
    %p37 = scmp.eq.s32.totalorder %s15, 1
    %p38 = por %p36, %p37
    %p40 = scmp.ne.s32.totalorder %s23, %s39
    %p41 = scmp.eq.s32.totalorder %s15, 0
    %p42 = por %p40, %p41
    %s44 = sadd.s32 %s43, 1
    %p47 = scmp.eq.s32.totalorder %s9, 1
    %p48 = scmp.ne.s32.totalorder %s43, %s45
    %p49 = scmp.eq.s32.totalorder %s9, 0
    %p50 = por %p48, %p49
    %p51 = scmp.ne.s32.totalorder %s43, %s45
    %p52 = scmp.eq.s32.totalorder %s14, 1
    %p53 = por %p51, %p52
    %p54 = scmp.ne.s32.totalorder %s45, %s46
    %p55 = scmp.eq.s32.totalorder %s14, 0
    %p56 = por %p54, %p55
    %p57 = scmp.ne.s32.totalorder %s45, %s46
    %p58 = scmp.eq.s32.totalorder %s15, 1
    %p59 = por %p57, %p58
    %p61 = scmp.ne.s32.totalorder %s46, %s60
    %p62 = scmp.eq.s32.totalorder %s15, 0
    %p63 = por %p61, %p62
    %s65 = sadd.s32 %s64, 1
    %p68 = scmp.eq.s32.totalorder %s9, 1
    %p69 = scmp.ne.s32.totalorder %s64, %s66
    %p70 = scmp.eq.s32.totalorder %s9, 0
    %p71 = por %p69, %p70
    %p72 = scmp.ne.s32.totalorder %s64, %s66
    %p73 = scmp.eq.s32.totalorder %s14, 1
    %p74 = por %p72, %p73
    %p75 = scmp.ne.s32.totalorder %s66, %s67
    %p76 = scmp.eq.s32.totalorder %s14, 0
    %p77 = por %p75, %p76
    %p78 = scmp.ne.s32.totalorder %s66, %s67
    %p79 = scmp.eq.s32.totalorder %s15, 1
    %p80 = por %p78, %p79
    %p82 = scmp.ne.s32.totalorder %s67, %s81
    %p83 = scmp.eq.s32.totalorder %s15, 0
    %p84 = por %p82, %p83
    %s85 = ssub.s32 %s9, %s16
    %p86 = scmp.eq.s32.totalorder %s85, 0
    %s88 = sadd.s32 %s87, 1
    %s89 = scalar_select %p86, %s87, %s88
    %p92 = pneg %p86
    %p93 = scmp.eq.s32.totalorder %s9, 1
    %p94 = por %p92, %p93
    %p95 = scmp.ne.s32.totalorder %s87, %s90
    %p96 = scmp.eq.s32.totalorder %s9, 0
    %p97 = por %p95, %p96
    %p98 = scmp.ne.s32.totalorder %s87, %s90
    %p99 = scmp.eq.s32.totalorder %s14, 1
    %p100 = por %p98, %p99
    %p101 = scmp.ne.s32.totalorder %s90, %s91
    %p102 = scmp.eq.s32.totalorder %s14, 0
    %p103 = por %p101, %p102
    %p104 = scmp.ne.s32.totalorder %s90, %s91
    %p105 = scmp.eq.s32.totalorder %s15, 1
    %p106 = por %p104, %p105
    %p108 = scmp.ne.s32.totalorder %s91, %s107
    %p109 = scmp.eq.s32.totalorder %s15, 0
    %p110 = por %p108, %p109
    %p111 = scmp.le.s32.totalorder 1, %s9
    %p112 = scmp.lt.s32.totalorder %s9, 3
    %p113 = pnand %p111, %p112
    %p114 = pneg %p113
    // Predicated region
    $region9: #{cnn_forward.3} parent=5 // pred_check
      _
    $region10: #{cnn_forward.3} parent=5 // pred_check_branch
      %116 = sbr.rel (%p113) target = $region12
    $region11: #{cnn_forward.3} parent=5 // pred_region
      %s117 = ssub.s32 %s9, 1
      // Predicated region
      $region13: #{cnn_forward.3} parent=11 // pred_check
        %p118 = pneg %p56
      $region14: #{cnn_forward.3} parent=11 // pred_check_branch
        %120 = sbr.rel (%p118) target = $region16
      $region15: #{cnn_forward.3} parent=11 // pred_region
        _
      $region16: #{cnn_forward.3} parent=11 // pred_fallthru
        _
      // Predicated region
      $region17: #{cnn_forward.3} parent=11 // pred_check
        %p121 = pneg %p77
      $region18: #{cnn_forward.3} parent=11 // pred_check_branch
        %123 = sbr.rel (%p121) target = $region20
      $region19: #{cnn_forward.3} parent=11 // pred_region
        _
      $region20: #{cnn_forward.3} parent=11 // pred_fallthru
        _
    $region12: #{cnn_forward.3} parent=5 // pred_fallthru
      _
    %p124 = scmp.lt.s32.totalorder %s9, 2
    // Predicated region
    $region21: #{cnn_forward.3} parent=5 // pred_check
      %p125 = pneg %p124
    $region22: #{cnn_forward.3} parent=5 // pred_check_branch
      %127 = sbr.rel (%p125) target = $region24
    $region23: #{cnn_forward.3} parent=5 // pred_region
      // Predicated region
      $region25: #{cnn_forward.3} parent=23 // pred_check
        %p128 = pneg %p29
      $region26: #{cnn_forward.3} parent=23 // pred_check_branch
        %130 = sbr.rel (%p128) target = $region28
      $region27: #{cnn_forward.3} parent=23 // pred_region
        %p131 = scmp.lt.s32.totalorder %s9, 1
        %s132 = scalar_select %p131, %s9, 1
        %s133 = smul.addr %s132, 16
        %s134 = smul.addr %s133, 8
        %s135 = scalar_lea.vmem %s0, %s134
      $region28: #{cnn_forward.3} parent=23 // pred_fallthru
        _
    $region24: #{cnn_forward.3} parent=5 // pred_fallthru
      _
    %p136 = scmp.le.s32.totalorder 1, %s9
    %p137 = scmp.lt.s32.totalorder %s9, 3
    %p138 = pnand %p136, %p137
    %p139 = pneg %p138
    // Predicated region
    $region29: #{cnn_forward.3} parent=5 // pred_check
      _
    $region30: #{cnn_forward.3} parent=5 // pred_check_branch
      %141 = sbr.rel (%p138) target = $region32
    $region31: #{cnn_forward.3} parent=5 // pred_region
      %s142 = ssub.s32 %s9, 1
      %p143 = scmp.lt.s32.totalorder %s14, 1
      %s144 = scalar_select %p143, %s14, 1
      %s145 = smul.addr %s144, 16
      %s146 = smul.addr %s145, 8
      %s147 = scalar_lea.vmem %s0, %s146
      %p148 = pneg %p35
      %p149 = pneg %p32
      %p150 = pneg %p56
      %p151 = pneg %p53
      %p152 = pneg %p77
      %p153 = pneg %p74
      %p154 = pneg %p103
      %p155 = pneg %p100
      %p156 = scmp.lt.s32.totalorder %s14, 1
      %s157 = scalar_select %p156, %s14, 1
      %s158 = smul.addr %s157, 4
      %s159 = smul.addr %s158, 8
      %s160 = scalar_lea.vmem %s3, %s159
      %p161 = scmp.lt.s32.totalorder %s14, 1
      %s162 = scalar_select %p161, %s14, 1
      %s163 = smul.addr %s162, 16
      %s164 = smul.addr %s163, 8
      %s165 = scalar_lea.vmem %s0, %s164
      %p166 = scmp.lt.s32.totalorder %s14, 1
      %s167 = scalar_select %p166, %s14, 1
      %s168 = smul.addr %s167, 4
      %s169 = smul.addr %s168, 8
      %s170 = scalar_lea.vmem %s3, %s169
      %v171 = vld [vmem:[%s165] sm:$0xff]
      %v172 = vld [vmem:[%s165 + $0x8] sm:$0x3f]
      %v173 = vld [vmem:[%s1] sm:$0xff]
      %v174 = vld [vmem:[%s1 + $0x8] sm:$0xff]
      %v175 = vld [vmem:[%s1 + $0x10] sm:$0x3f]
      %v176 = vld [vmem:[%s1 + $0x18] sm:$0x3f]
      %s177 = scalar_lea.vmem %s165, 16
      %v178 = vld [vmem:[%s177] sm:$0xff]
      %v179 = vld [vmem:[%s177 + $0x8] sm:$0x3f]
      %s180 = scalar_lea.vmem %s1, 32
      %v181 = vld [vmem:[%s180] sm:$0xff]
      %v182 = vld [vmem:[%s180 + $0x8] sm:$0xff]
      %v183 = vld [vmem:[%s180 + $0x10] sm:$0x3f]
      %v184 = vld [vmem:[%s180 + $0x18] sm:$0x3f]
      %vm185 = vcmask 113664
      %v187 = vsel %vm185, %v178, 0
      %v190 = vsel %vm185, %v179, 0
      %vm192 = vcmask 1045504
      %v194 = vsel %vm192, %v183, 0
      %v197 = vsel %vm192, %v184, 0
      %199 = vmatpush.msra.mxu0 0.0
      %200 = vmatpush.msra.mxu0 0.0
      %201 = vmatpush.msra.mxu0 0.0
      %202 = vmatpush.msra.mxu0 0.0
      %203 = vmatpush.msra.mxu0 0.0
      %204 = vmatpush.msra.mxu0 0.0
      %205 = vmatpush.msra.mxu0 0.0
      %206 = vmatpush.msra.mxu0 0.0
      %207 = vmatpush.msra.mxu0 0.0
      %208 = vmatpush.msra.mxu0 0.0
      %209 = vmatpush.msra.mxu0 0.0
      %210 = vmatpush.msra.mxu0 0.0
      %211 = vmatpush.msra.mxu0 0.0
      %212 = vmatpush.msra.mxu0 0.0
      %213 = vmatpush.msra.mxu0 %v194
      %214 = vmatpush.msra.mxu0 %v181
      %215 = vmatmul.f32.gmra.mxu0 %v187
      %v216 = vpop.f32.mrf.mxu0
      %v217 = vadd.f32 0.0, %v216
      %218 = vmatmul.f32.gmra.mxu0 %v190
      %v219 = vpop.f32.mrf.mxu0
      %v220 = vadd.f32 0.0, %v219
      %221 = vdwg.mxu0
      %222 = vmatpush.msra.mxu0 0.0
      %223 = vmatpush.msra.mxu0 0.0
      %224 = vmatpush.msra.mxu0 0.0
      %225 = vmatpush.msra.mxu0 0.0
      %226 = vmatpush.msra.mxu0 0.0
      %227 = vmatpush.msra.mxu0 0.0
      %228 = vmatpush.msra.mxu0 0.0
      %229 = vmatpush.msra.mxu0 0.0
      %230 = vmatpush.msra.mxu0 0.0
      %231 = vmatpush.msra.mxu0 0.0
      %232 = vmatpush.msra.mxu0 0.0
      %233 = vmatpush.msra.mxu0 0.0
      %234 = vmatpush.msra.mxu0 0.0
      %235 = vmatpush.msra.mxu0 0.0
      %236 = vmatpush.msra.mxu0 %v197
      %237 = vmatpush.msra.mxu0 %v182
      %238 = vmatmul.f32.gmra.mxu0 %v187
      %v239 = vpop.f32.mrf.mxu0
      %v240 = vadd.f32 0.0, %v239
      %241 = vmatmul.f32.gmra.mxu0 %v190
      %v242 = vpop.f32.mrf.mxu0
      %v243 = vadd.f32 0.0, %v242
      %244 = vdwg.mxu0
      %v246 = vsel %vm185, %v171, 0
      %v249 = vsel %vm185, %v172, 0
      %v252 = vsel %vm192, %v175, 0
      %v255 = vsel %vm192, %v176, 0
      %257 = vmatpush.msra.mxu0 0.0
      %258 = vmatpush.msra.mxu0 0.0
      %259 = vmatpush.msra.mxu0 0.0
      %260 = vmatpush.msra.mxu0 0.0
      %261 = vmatpush.msra.mxu0 0.0
      %262 = vmatpush.msra.mxu0 0.0
      %263 = vmatpush.msra.mxu0 0.0
      %264 = vmatpush.msra.mxu0 0.0
      %265 = vmatpush.msra.mxu0 0.0
      %266 = vmatpush.msra.mxu0 0.0
      %267 = vmatpush.msra.mxu0 0.0
      %268 = vmatpush.msra.mxu0 0.0
      %269 = vmatpush.msra.mxu0 0.0
      %270 = vmatpush.msra.mxu0 0.0
      %271 = vmatpush.msra.mxu0 %v252
      %272 = vmatpush.msra.mxu0 %v173
      %273 = vmatmul.f32.gmra.mxu0 %v246
      %v274 = vpop.f32.mrf.mxu0
      %v275 = vadd.f32 %v217, %v274
      %276 = vmatmul.f32.gmra.mxu0 %v249
      %v277 = vpop.f32.mrf.mxu0
      %v278 = vadd.f32 %v220, %v277
      %279 = vdwg.mxu0
      %280 = vmatpush.msra.mxu0 0.0
      %281 = vmatpush.msra.mxu0 0.0
      %282 = vmatpush.msra.mxu0 0.0
      %283 = vmatpush.msra.mxu0 0.0
      %284 = vmatpush.msra.mxu0 0.0
      %285 = vmatpush.msra.mxu0 0.0
      %286 = vmatpush.msra.mxu0 0.0
      %287 = vmatpush.msra.mxu0 0.0
      %288 = vmatpush.msra.mxu0 0.0
      %289 = vmatpush.msra.mxu0 0.0
      %290 = vmatpush.msra.mxu0 0.0
      %291 = vmatpush.msra.mxu0 0.0
      %292 = vmatpush.msra.mxu0 0.0
      %293 = vmatpush.msra.mxu0 0.0
      %294 = vmatpush.msra.mxu0 %v255
      %295 = vmatpush.msra.mxu0 %v174
      %296 = vmatmul.f32.gmra.mxu0 %v246
      %v297 = vpop.f32.mrf.mxu0
      %v298 = vadd.f32 %v240, %v297
      %299 = vmatmul.f32.gmra.mxu0 %v249
      %v300 = vpop.f32.mrf.mxu0
      %v301 = vadd.f32 %v243, %v300
      %302 = vdwg.mxu0
      %s303 = scalar_lea.vmem %s165, 32
      %v304 = vld [vmem:[%s303] sm:$0xff]
      %v305 = vld [vmem:[%s303 + $0x8] sm:$0x3f]
      %s306 = scalar_lea.vmem %s1, 64
      %v307 = vld [vmem:[%s306] sm:$0xff]
      %v308 = vld [vmem:[%s306 + $0x8] sm:$0xff]
      %v309 = vld [vmem:[%s306 + $0x10] sm:$0x3f]
      %v310 = vld [vmem:[%s306 + $0x18] sm:$0x3f]
      %v312 = vsel %vm185, %v304, 0
      %v315 = vsel %vm185, %v305, 0
      %v318 = vsel %vm192, %v309, 0
      %v321 = vsel %vm192, %v310, 0
      %323 = vmatpush.msra.mxu0 0.0
      %324 = vmatpush.msra.mxu0 0.0
      %325 = vmatpush.msra.mxu0 0.0
      %326 = vmatpush.msra.mxu0 0.0
      %327 = vmatpush.msra.mxu0 0.0
      %328 = vmatpush.msra.mxu0 0.0
      %329 = vmatpush.msra.mxu0 0.0
      %330 = vmatpush.msra.mxu0 0.0
      %331 = vmatpush.msra.mxu0 0.0
      %332 = vmatpush.msra.mxu0 0.0
      %333 = vmatpush.msra.mxu0 0.0
      %334 = vmatpush.msra.mxu0 0.0
      %335 = vmatpush.msra.mxu0 0.0
      %336 = vmatpush.msra.mxu0 0.0
      %337 = vmatpush.msra.mxu0 %v318
      %338 = vmatpush.msra.mxu0 %v307
      %339 = vmatmul.f32.gmra.mxu0 %v312
      %v340 = vpop.f32.mrf.mxu0
      %v341 = vadd.f32 0.0, %v340
      %342 = vmatmul.f32.gmra.mxu0 %v315
      %v343 = vpop.f32.mrf.mxu0
      %v344 = vadd.f32 0.0, %v343
      %345 = vdwg.mxu0
      %346 = vmatpush.msra.mxu0 0.0
      %347 = vmatpush.msra.mxu0 0.0
      %348 = vmatpush.msra.mxu0 0.0
      %349 = vmatpush.msra.mxu0 0.0
      %350 = vmatpush.msra.mxu0 0.0
      %351 = vmatpush.msra.mxu0 0.0
      %352 = vmatpush.msra.mxu0 0.0
      %353 = vmatpush.msra.mxu0 0.0
      %354 = vmatpush.msra.mxu0 0.0
      %355 = vmatpush.msra.mxu0 0.0
      %356 = vmatpush.msra.mxu0 0.0
      %357 = vmatpush.msra.mxu0 0.0
      %358 = vmatpush.msra.mxu0 0.0
      %359 = vmatpush.msra.mxu0 0.0
      %360 = vmatpush.msra.mxu0 %v321
      %361 = vmatpush.msra.mxu0 %v308
      %362 = vmatmul.f32.gmra.mxu0 %v312
      %v363 = vpop.f32.mrf.mxu0
      %v364 = vadd.f32 0.0, %v363
      %365 = vmatmul.f32.gmra.mxu0 %v315
      %v366 = vpop.f32.mrf.mxu0
      %v367 = vadd.f32 0.0, %v366
      %368 = vdwg.mxu0
      %v369 = vadd.f32 %v275, %v341
      %v370 = vadd.f32 %v298, %v364
      %v371 = vadd.f32 %v278, %v344
      %v372 = vadd.f32 %v301, %v367
      %s373 = scalar_lea.vmem %s165, 64
      %v374 = vld [vmem:[%s373] sm:$0xff]
      %v375 = vld [vmem:[%s373 + $0x8] sm:$0x3f]
      %s376 = scalar_lea.vmem %s1, 96
      %v377 = vld [vmem:[%s376] sm:$0xff]
      %v378 = vld [vmem:[%s376 + $0x8] sm:$0xff]
      %v379 = vld [vmem:[%s376 + $0x10] sm:$0x3f]
      %v380 = vld [vmem:[%s376 + $0x18] sm:$0x3f]
      %v382 = vsel %vm185, %v374, 0
      %v385 = vsel %vm185, %v375, 0
      %v388 = vsel %vm192, %v379, 0
      %v391 = vsel %vm192, %v380, 0
      %393 = vmatpush.msra.mxu0 0.0
      %394 = vmatpush.msra.mxu0 0.0
      %395 = vmatpush.msra.mxu0 0.0
      %396 = vmatpush.msra.mxu0 0.0
      %397 = vmatpush.msra.mxu0 0.0
      %398 = vmatpush.msra.mxu0 0.0
      %399 = vmatpush.msra.mxu0 0.0
      %400 = vmatpush.msra.mxu0 0.0
      %401 = vmatpush.msra.mxu0 0.0
      %402 = vmatpush.msra.mxu0 0.0
      %403 = vmatpush.msra.mxu0 0.0
      %404 = vmatpush.msra.mxu0 0.0
      %405 = vmatpush.msra.mxu0 0.0
      %406 = vmatpush.msra.mxu0 0.0
      %407 = vmatpush.msra.mxu0 %v388
      %408 = vmatpush.msra.mxu0 %v377
      %409 = vmatmul.f32.gmra.mxu0 %v382
      %v410 = vpop.f32.mrf.mxu0
      %v411 = vadd.f32 0.0, %v410
      %412 = vmatmul.f32.gmra.mxu0 %v385
      %v413 = vpop.f32.mrf.mxu0
      %v414 = vadd.f32 0.0, %v413
      %415 = vdwg.mxu0
      %416 = vmatpush.msra.mxu0 0.0
      %417 = vmatpush.msra.mxu0 0.0
      %418 = vmatpush.msra.mxu0 0.0
      %419 = vmatpush.msra.mxu0 0.0
      %420 = vmatpush.msra.mxu0 0.0
      %421 = vmatpush.msra.mxu0 0.0
      %422 = vmatpush.msra.mxu0 0.0
      %423 = vmatpush.msra.mxu0 0.0
      %424 = vmatpush.msra.mxu0 0.0
      %425 = vmatpush.msra.mxu0 0.0
      %426 = vmatpush.msra.mxu0 0.0
      %427 = vmatpush.msra.mxu0 0.0
      %428 = vmatpush.msra.mxu0 0.0
      %429 = vmatpush.msra.mxu0 0.0
      %430 = vmatpush.msra.mxu0 %v391
      %431 = vmatpush.msra.mxu0 %v378
      %432 = vmatmul.f32.gmra.mxu0 %v382
      %v433 = vpop.f32.mrf.mxu0
      %v434 = vadd.f32 0.0, %v433
      %435 = vmatmul.f32.gmra.mxu0 %v385
      %v436 = vpop.f32.mrf.mxu0
      %v437 = vadd.f32 0.0, %v436
      %438 = vdwg.mxu0
      %v439 = vadd.f32 %v369, %v411
      %v440 = vadd.f32 %v370, %v434
      %v441 = vadd.f32 %v371, %v414
      %v442 = vadd.f32 %v372, %v437
      %s443 = scalar_lea.vmem %s165, 80
      %v444 = vld [vmem:[%s443] sm:$0xff]
      %v445 = vld [vmem:[%s443 + $0x8] sm:$0x3f]
      %s446 = scalar_lea.vmem %s1, 128
      %v447 = vld [vmem:[%s446] sm:$0xff]
      %v448 = vld [vmem:[%s446 + $0x8] sm:$0xff]
      %v449 = vld [vmem:[%s446 + $0x10] sm:$0x3f]
      %v450 = vld [vmem:[%s446 + $0x18] sm:$0x3f]
      %v452 = vsel %vm185, %v444, 0
      %v455 = vsel %vm185, %v445, 0
      %v458 = vsel %vm192, %v449, 0
      %v461 = vsel %vm192, %v450, 0
      %463 = vmatpush.msra.mxu0 0.0
      %464 = vmatpush.msra.mxu0 0.0
      %465 = vmatpush.msra.mxu0 0.0
      %466 = vmatpush.msra.mxu0 0.0
      %467 = vmatpush.msra.mxu0 0.0
      %468 = vmatpush.msra.mxu0 0.0
      %469 = vmatpush.msra.mxu0 0.0
      %470 = vmatpush.msra.mxu0 0.0
      %471 = vmatpush.msra.mxu0 0.0
      %472 = vmatpush.msra.mxu0 0.0
      %473 = vmatpush.msra.mxu0 0.0
      %474 = vmatpush.msra.mxu0 0.0
      %475 = vmatpush.msra.mxu0 0.0
      %476 = vmatpush.msra.mxu0 0.0
      %477 = vmatpush.msra.mxu0 %v458
      %478 = vmatpush.msra.mxu0 %v447
      %479 = vmatmul.f32.gmra.mxu0 %v452
      %v480 = vpop.f32.mrf.mxu0
      %v481 = vadd.f32 0.0, %v480
      %482 = vmatmul.f32.gmra.mxu0 %v455
      %v483 = vpop.f32.mrf.mxu0
      %v484 = vadd.f32 0.0, %v483
      %485 = vdwg.mxu0
      %486 = vmatpush.msra.mxu0 0.0
      %487 = vmatpush.msra.mxu0 0.0
      %488 = vmatpush.msra.mxu0 0.0
      %489 = vmatpush.msra.mxu0 0.0
      %490 = vmatpush.msra.mxu0 0.0
      %491 = vmatpush.msra.mxu0 0.0
      %492 = vmatpush.msra.mxu0 0.0
      %493 = vmatpush.msra.mxu0 0.0
      %494 = vmatpush.msra.mxu0 0.0
      %495 = vmatpush.msra.mxu0 0.0
      %496 = vmatpush.msra.mxu0 0.0
      %497 = vmatpush.msra.mxu0 0.0
      %498 = vmatpush.msra.mxu0 0.0
      %499 = vmatpush.msra.mxu0 0.0
      %500 = vmatpush.msra.mxu0 %v461
      %501 = vmatpush.msra.mxu0 %v448
      %502 = vmatmul.f32.gmra.mxu0 %v452
      %v503 = vpop.f32.mrf.mxu0
      %v504 = vadd.f32 0.0, %v503
      %505 = vmatmul.f32.gmra.mxu0 %v455
      %v506 = vpop.f32.mrf.mxu0
      %v507 = vadd.f32 0.0, %v506
      %508 = vdwg.mxu0
      %v509 = vadd.f32 %v439, %v481
      %v510 = vadd.f32 %v440, %v504
      %v511 = vadd.f32 %v441, %v484
      %v512 = vadd.f32 %v442, %v507
      %s513 = scalar_lea.vmem %s165, 96
      %v514 = vld [vmem:[%s513] sm:$0xff]
      %v515 = vld [vmem:[%s513 + $0x8] sm:$0x3f]
      %s516 = scalar_lea.vmem %s1, 160
      %v517 = vld [vmem:[%s516] sm:$0xff]
      %v518 = vld [vmem:[%s516 + $0x8] sm:$0xff]
      %v519 = vld [vmem:[%s516 + $0x10] sm:$0x3f]
      %v520 = vld [vmem:[%s516 + $0x18] sm:$0x3f]
      %v522 = vsel %vm185, %v514, 0
      %v525 = vsel %vm185, %v515, 0
      %v528 = vsel %vm192, %v519, 0
      %v531 = vsel %vm192, %v520, 0
      %533 = vmatpush.msra.mxu0 0.0
      %534 = vmatpush.msra.mxu0 0.0
      %535 = vmatpush.msra.mxu0 0.0
      %536 = vmatpush.msra.mxu0 0.0
      %537 = vmatpush.msra.mxu0 0.0
      %538 = vmatpush.msra.mxu0 0.0
      %539 = vmatpush.msra.mxu0 0.0
      %540 = vmatpush.msra.mxu0 0.0
      %541 = vmatpush.msra.mxu0 0.0
      %542 = vmatpush.msra.mxu0 0.0
      %543 = vmatpush.msra.mxu0 0.0
      %544 = vmatpush.msra.mxu0 0.0
      %545 = vmatpush.msra.mxu0 0.0
      %546 = vmatpush.msra.mxu0 0.0
      %547 = vmatpush.msra.mxu0 %v528
      %548 = vmatpush.msra.mxu0 %v517
      %549 = vmatmul.f32.gmra.mxu0 %v522
      %v550 = vpop.f32.mrf.mxu0
      %v551 = vadd.f32 0.0, %v550
      %552 = vmatmul.f32.gmra.mxu0 %v525
      %v553 = vpop.f32.mrf.mxu0
      %v554 = vadd.f32 0.0, %v553
      %555 = vdwg.mxu0
      %556 = vmatpush.msra.mxu0 0.0
      %557 = vmatpush.msra.mxu0 0.0
      %558 = vmatpush.msra.mxu0 0.0
      %559 = vmatpush.msra.mxu0 0.0
      %560 = vmatpush.msra.mxu0 0.0
      %561 = vmatpush.msra.mxu0 0.0
      %562 = vmatpush.msra.mxu0 0.0
      %563 = vmatpush.msra.mxu0 0.0
      %564 = vmatpush.msra.mxu0 0.0
      %565 = vmatpush.msra.mxu0 0.0
      %566 = vmatpush.msra.mxu0 0.0
      %567 = vmatpush.msra.mxu0 0.0
      %568 = vmatpush.msra.mxu0 0.0
      %569 = vmatpush.msra.mxu0 0.0
      %570 = vmatpush.msra.mxu0 %v531
      %571 = vmatpush.msra.mxu0 %v518
      %572 = vmatmul.f32.gmra.mxu0 %v522
      %v573 = vpop.f32.mrf.mxu0
      %v574 = vadd.f32 0.0, %v573
      %575 = vmatmul.f32.gmra.mxu0 %v525
      %v576 = vpop.f32.mrf.mxu0
      %v577 = vadd.f32 0.0, %v576
      %578 = vdwg.mxu0
      %v579 = vadd.f32 %v509, %v551
      %v580 = vadd.f32 %v510, %v574
      %v581 = vadd.f32 %v511, %v554
      %v582 = vadd.f32 %v512, %v577
      %v583 = vld [vmem:[%s165 + $0x1] sm:$0xff]
      %v584 = vld [vmem:[%s165 + $0x9] sm:$0x3f]
      %s585 = scalar_lea.vmem %s1, 192
      %v586 = vld [vmem:[%s585] sm:$0xff]
      %v587 = vld [vmem:[%s585 + $0x8] sm:$0xff]
      %v588 = vld [vmem:[%s585 + $0x10] sm:$0x3f]
      %v589 = vld [vmem:[%s585 + $0x18] sm:$0x3f]
      %v591 = vsel %vm185, %v583, 0
      %v594 = vsel %vm185, %v584, 0
      %v597 = vsel %vm192, %v588, 0
      %v600 = vsel %vm192, %v589, 0
      %602 = vmatpush.msra.mxu0 0.0
      %603 = vmatpush.msra.mxu0 0.0
      %604 = vmatpush.msra.mxu0 0.0
      %605 = vmatpush.msra.mxu0 0.0
      %606 = vmatpush.msra.mxu0 0.0
      %607 = vmatpush.msra.mxu0 0.0
      %608 = vmatpush.msra.mxu0 0.0
      %609 = vmatpush.msra.mxu0 0.0
      %610 = vmatpush.msra.mxu0 0.0
      %611 = vmatpush.msra.mxu0 0.0
      %612 = vmatpush.msra.mxu0 0.0
      %613 = vmatpush.msra.mxu0 0.0
      %614 = vmatpush.msra.mxu0 0.0
      %615 = vmatpush.msra.mxu0 0.0
      %616 = vmatpush.msra.mxu0 %v597
      %617 = vmatpush.msra.mxu0 %v586
      %618 = vmatmul.f32.gmra.mxu0 %v591
      %v619 = vpop.f32.mrf.mxu0
      %v620 = vadd.f32 0.0, %v619
      %621 = vmatmul.f32.gmra.mxu0 %v594
      %v622 = vpop.f32.mrf.mxu0
      %v623 = vadd.f32 0.0, %v622
      %624 = vdwg.mxu0
      %625 = vmatpush.msra.mxu0 0.0
      %626 = vmatpush.msra.mxu0 0.0
      %627 = vmatpush.msra.mxu0 0.0
      %628 = vmatpush.msra.mxu0 0.0
      %629 = vmatpush.msra.mxu0 0.0
      %630 = vmatpush.msra.mxu0 0.0
      %631 = vmatpush.msra.mxu0 0.0
      %632 = vmatpush.msra.mxu0 0.0
      %633 = vmatpush.msra.mxu0 0.0
      %634 = vmatpush.msra.mxu0 0.0
      %635 = vmatpush.msra.mxu0 0.0
      %636 = vmatpush.msra.mxu0 0.0
      %637 = vmatpush.msra.mxu0 0.0
      %638 = vmatpush.msra.mxu0 0.0
      %639 = vmatpush.msra.mxu0 %v600
      %640 = vmatpush.msra.mxu0 %v587
      %641 = vmatmul.f32.gmra.mxu0 %v591
      %v642 = vpop.f32.mrf.mxu0
      %v643 = vadd.f32 0.0, %v642
      %644 = vmatmul.f32.gmra.mxu0 %v594
      %v645 = vpop.f32.mrf.mxu0
      %v646 = vadd.f32 0.0, %v645
      %647 = vdwg.mxu0
      %v648 = vadd.f32 %v579, %v620
      %v649 = vadd.f32 %v580, %v643
      %v650 = vadd.f32 %v581, %v623
      %v651 = vadd.f32 %v582, %v646
      %v652 = vld [vmem:[%s177 + $0x1] sm:$0xff]
      %v653 = vld [vmem:[%s177 + $0x9] sm:$0x3f]
      %s654 = scalar_lea.vmem %s1, 224
      %v655 = vld [vmem:[%s654] sm:$0xff]
      %v656 = vld [vmem:[%s654 + $0x8] sm:$0xff]
      %v657 = vld [vmem:[%s654 + $0x10] sm:$0x3f]
      %v658 = vld [vmem:[%s654 + $0x18] sm:$0x3f]
      %v660 = vsel %vm185, %v652, 0
      %v663 = vsel %vm185, %v653, 0
      %v666 = vsel %vm192, %v657, 0
      %v669 = vsel %vm192, %v658, 0
      %671 = vmatpush.msra.mxu0 0.0
      %672 = vmatpush.msra.mxu0 0.0
      %673 = vmatpush.msra.mxu0 0.0
      %674 = vmatpush.msra.mxu0 0.0
      %675 = vmatpush.msra.mxu0 0.0
      %676 = vmatpush.msra.mxu0 0.0
      %677 = vmatpush.msra.mxu0 0.0
      %678 = vmatpush.msra.mxu0 0.0
      %679 = vmatpush.msra.mxu0 0.0
      %680 = vmatpush.msra.mxu0 0.0
      %681 = vmatpush.msra.mxu0 0.0
      %682 = vmatpush.msra.mxu0 0.0
      %683 = vmatpush.msra.mxu0 0.0
      %684 = vmatpush.msra.mxu0 0.0
      %685 = vmatpush.msra.mxu0 %v666
      %686 = vmatpush.msra.mxu0 %v655
      %687 = vmatmul.f32.gmra.mxu0 %v660
      %v688 = vpop.f32.mrf.mxu0
      %v689 = vadd.f32 0.0, %v688
      %690 = vmatmul.f32.gmra.mxu0 %v663
      %v691 = vpop.f32.mrf.mxu0
      %v692 = vadd.f32 0.0, %v691
      %693 = vdwg.mxu0
      %694 = vmatpush.msra.mxu0 0.0
      %695 = vmatpush.msra.mxu0 0.0
      %696 = vmatpush.msra.mxu0 0.0
      %697 = vmatpush.msra.mxu0 0.0
      %698 = vmatpush.msra.mxu0 0.0
      %699 = vmatpush.msra.mxu0 0.0
      %700 = vmatpush.msra.mxu0 0.0
      %701 = vmatpush.msra.mxu0 0.0
      %702 = vmatpush.msra.mxu0 0.0
      %703 = vmatpush.msra.mxu0 0.0
      %704 = vmatpush.msra.mxu0 0.0
      %705 = vmatpush.msra.mxu0 0.0
      %706 = vmatpush.msra.mxu0 0.0
      %707 = vmatpush.msra.mxu0 0.0
      %708 = vmatpush.msra.mxu0 %v669
      %709 = vmatpush.msra.mxu0 %v656
      %710 = vmatmul.f32.gmra.mxu0 %v660
      %v711 = vpop.f32.mrf.mxu0
      %v712 = vadd.f32 0.0, %v711
      %713 = vmatmul.f32.gmra.mxu0 %v663
      %v714 = vpop.f32.mrf.mxu0
      %v715 = vadd.f32 0.0, %v714
      %716 = vdwg.mxu0
      %v717 = vadd.f32 %v648, %v689
      %v718 = vadd.f32 %v649, %v712
      %v719 = vadd.f32 %v650, %v692
      %v720 = vadd.f32 %v651, %v715
      %v721 = vld [vmem:[%s303 + $0x1] sm:$0xff]
      %v722 = vld [vmem:[%s303 + $0x9] sm:$0x3f]
      %s723 = scalar_lea.vmem %s1, 256
      %v724 = vld [vmem:[%s723] sm:$0xff]
      %v725 = vld [vmem:[%s723 + $0x8] sm:$0xff]
      %v726 = vld [vmem:[%s723 + $0x10] sm:$0x3f]
      %v727 = vld [vmem:[%s723 + $0x18] sm:$0x3f]
      %v729 = vsel %vm185, %v721, 0
      %v732 = vsel %vm185, %v722, 0
      %v735 = vsel %vm192, %v726, 0
      %v738 = vsel %vm192, %v727, 0
      %740 = vmatpush.msra.mxu0 0.0
      %741 = vmatpush.msra.mxu0 0.0
      %742 = vmatpush.msra.mxu0 0.0
      %743 = vmatpush.msra.mxu0 0.0
      %744 = vmatpush.msra.mxu0 0.0
      %745 = vmatpush.msra.mxu0 0.0
      %746 = vmatpush.msra.mxu0 0.0
      %747 = vmatpush.msra.mxu0 0.0
      %748 = vmatpush.msra.mxu0 0.0
      %749 = vmatpush.msra.mxu0 0.0
      %750 = vmatpush.msra.mxu0 0.0
      %751 = vmatpush.msra.mxu0 0.0
      %752 = vmatpush.msra.mxu0 0.0
      %753 = vmatpush.msra.mxu0 0.0
      %754 = vmatpush.msra.mxu0 %v735
      %755 = vmatpush.msra.mxu0 %v724
      %756 = vmatmul.f32.gmra.mxu0 %v729
      %v757 = vpop.f32.mrf.mxu0
      %v758 = vadd.f32 0.0, %v757
      %759 = vmatmul.f32.gmra.mxu0 %v732
      %v760 = vpop.f32.mrf.mxu0
      %v761 = vadd.f32 0.0, %v760
      %762 = vdwg.mxu0
      %763 = vmatpush.msra.mxu0 0.0
      %764 = vmatpush.msra.mxu0 0.0
      %765 = vmatpush.msra.mxu0 0.0
      %766 = vmatpush.msra.mxu0 0.0
      %767 = vmatpush.msra.mxu0 0.0
      %768 = vmatpush.msra.mxu0 0.0
      %769 = vmatpush.msra.mxu0 0.0
      %770 = vmatpush.msra.mxu0 0.0
      %771 = vmatpush.msra.mxu0 0.0
      %772 = vmatpush.msra.mxu0 0.0
      %773 = vmatpush.msra.mxu0 0.0
      %774 = vmatpush.msra.mxu0 0.0
      %775 = vmatpush.msra.mxu0 0.0
      %776 = vmatpush.msra.mxu0 0.0
      %777 = vmatpush.msra.mxu0 %v738
      %778 = vmatpush.msra.mxu0 %v725
      %779 = vmatmul.f32.gmra.mxu0 %v729
      %v780 = vpop.f32.mrf.mxu0
      %v781 = vadd.f32 0.0, %v780
      %782 = vmatmul.f32.gmra.mxu0 %v732
      %v783 = vpop.f32.mrf.mxu0
      %v784 = vadd.f32 0.0, %v783
      %785 = vdwg.mxu0
      %v786 = vadd.f32 %v717, %v758
      %v787 = vadd.f32 %v718, %v781
      %v788 = vadd.f32 %v719, %v761
      %v789 = vadd.f32 %v720, %v784
      %790 = vmatpush.msra.mxu0 0.0
      %791 = vmatpush.msra.mxu0 0.0
      %792 = vmatpush.msra.mxu0 0.0
      %793 = vmatpush.msra.mxu0 0.0
      %794 = vmatpush.msra.mxu0 0.0
      %795 = vmatpush.msra.mxu0 0.0
      %796 = vmatpush.msra.mxu0 0.0
      %797 = vmatpush.msra.mxu0 0.0
      %798 = vmatpush.msra.mxu0 0.0
      %799 = vmatpush.msra.mxu0 0.0
      %800 = vmatpush.msra.mxu0 0.0
      %801 = vmatpush.msra.mxu0 0.0
      %802 = vmatpush.msra.mxu0 0.0
      %803 = vmatpush.msra.mxu0 0.0
      %804 = vmatpush.msra.mxu0 %v194
      %805 = vmatpush.msra.mxu0 %v181
      %806 = vmatmul.f32.gmra.mxu0 %v312
      %v807 = vpop.f32.mrf.mxu0
      %v808 = vadd.f32 0.0, %v807
      %809 = vmatmul.f32.gmra.mxu0 %v315
      %v810 = vpop.f32.mrf.mxu0
      %v811 = vadd.f32 0.0, %v810
      %812 = vdwg.mxu0
      %813 = vmatpush.msra.mxu0 0.0
      %814 = vmatpush.msra.mxu0 0.0
      %815 = vmatpush.msra.mxu0 0.0
      %816 = vmatpush.msra.mxu0 0.0
      %817 = vmatpush.msra.mxu0 0.0
      %818 = vmatpush.msra.mxu0 0.0
      %819 = vmatpush.msra.mxu0 0.0
      %820 = vmatpush.msra.mxu0 0.0
      %821 = vmatpush.msra.mxu0 0.0
      %822 = vmatpush.msra.mxu0 0.0
      %823 = vmatpush.msra.mxu0 0.0
      %824 = vmatpush.msra.mxu0 0.0
      %825 = vmatpush.msra.mxu0 0.0
      %826 = vmatpush.msra.mxu0 0.0
      %827 = vmatpush.msra.mxu0 %v197
      %828 = vmatpush.msra.mxu0 %v182
      %829 = vmatmul.f32.gmra.mxu0 %v312
      %v830 = vpop.f32.mrf.mxu0
      %v831 = vadd.f32 0.0, %v830
      %832 = vmatmul.f32.gmra.mxu0 %v315
      %v833 = vpop.f32.mrf.mxu0
      %v834 = vadd.f32 0.0, %v833
      %835 = vdwg.mxu0
      %836 = vmatpush.msra.mxu0 0.0
      %837 = vmatpush.msra.mxu0 0.0
      %838 = vmatpush.msra.mxu0 0.0
      %839 = vmatpush.msra.mxu0 0.0
      %840 = vmatpush.msra.mxu0 0.0
      %841 = vmatpush.msra.mxu0 0.0
      %842 = vmatpush.msra.mxu0 0.0
      %843 = vmatpush.msra.mxu0 0.0
      %844 = vmatpush.msra.mxu0 0.0
      %845 = vmatpush.msra.mxu0 0.0
      %846 = vmatpush.msra.mxu0 0.0
      %847 = vmatpush.msra.mxu0 0.0
      %848 = vmatpush.msra.mxu0 0.0
      %849 = vmatpush.msra.mxu0 0.0
      %850 = vmatpush.msra.mxu0 %v252
      %851 = vmatpush.msra.mxu0 %v173
      %852 = vmatmul.f32.gmra.mxu0 %v187
      %v853 = vpop.f32.mrf.mxu0
      %v854 = vadd.f32 %v808, %v853
      %855 = vmatmul.f32.gmra.mxu0 %v190
      %v856 = vpop.f32.mrf.mxu0
      %v857 = vadd.f32 %v811, %v856
      %858 = vdwg.mxu0
      %859 = vmatpush.msra.mxu0 0.0
      %860 = vmatpush.msra.mxu0 0.0
      %861 = vmatpush.msra.mxu0 0.0
      %862 = vmatpush.msra.mxu0 0.0
      %863 = vmatpush.msra.mxu0 0.0
      %864 = vmatpush.msra.mxu0 0.0
      %865 = vmatpush.msra.mxu0 0.0
      %866 = vmatpush.msra.mxu0 0.0
      %867 = vmatpush.msra.mxu0 0.0
      %868 = vmatpush.msra.mxu0 0.0
      %869 = vmatpush.msra.mxu0 0.0
      %870 = vmatpush.msra.mxu0 0.0
      %871 = vmatpush.msra.mxu0 0.0
      %872 = vmatpush.msra.mxu0 0.0
      %873 = vmatpush.msra.mxu0 %v255
      %874 = vmatpush.msra.mxu0 %v174
      %875 = vmatmul.f32.gmra.mxu0 %v187
      %v876 = vpop.f32.mrf.mxu0
      %v877 = vadd.f32 %v831, %v876
      %878 = vmatmul.f32.gmra.mxu0 %v190
      %v879 = vpop.f32.mrf.mxu0
      %v880 = vadd.f32 %v834, %v879
      %881 = vdwg.mxu0
      %s882 = scalar_lea.vmem %s165, 48
      %v883 = vld [vmem:[%s882] sm:$0xff]
      %v884 = vld [vmem:[%s882 + $0x8] sm:$0x3f]
      %v886 = vsel %vm185, %v883, 0
      %v889 = vsel %vm185, %v884, 0
      %891 = vmatpush.msra.mxu0 0.0
      %892 = vmatpush.msra.mxu0 0.0
      %893 = vmatpush.msra.mxu0 0.0
      %894 = vmatpush.msra.mxu0 0.0
      %895 = vmatpush.msra.mxu0 0.0
      %896 = vmatpush.msra.mxu0 0.0
      %897 = vmatpush.msra.mxu0 0.0
      %898 = vmatpush.msra.mxu0 0.0
      %899 = vmatpush.msra.mxu0 0.0
      %900 = vmatpush.msra.mxu0 0.0
      %901 = vmatpush.msra.mxu0 0.0
      %902 = vmatpush.msra.mxu0 0.0
      %903 = vmatpush.msra.mxu0 0.0
      %904 = vmatpush.msra.mxu0 0.0
      %905 = vmatpush.msra.mxu0 %v318
      %906 = vmatpush.msra.mxu0 %v307
      %907 = vmatmul.f32.gmra.mxu0 %v886
      %v908 = vpop.f32.mrf.mxu0
      %v909 = vadd.f32 0.0, %v908
      %910 = vmatmul.f32.gmra.mxu0 %v889
      %v911 = vpop.f32.mrf.mxu0
      %v912 = vadd.f32 0.0, %v911
      %913 = vdwg.mxu0
      %914 = vmatpush.msra.mxu0 0.0
      %915 = vmatpush.msra.mxu0 0.0
      %916 = vmatpush.msra.mxu0 0.0
      %917 = vmatpush.msra.mxu0 0.0
      %918 = vmatpush.msra.mxu0 0.0
      %919 = vmatpush.msra.mxu0 0.0
      %920 = vmatpush.msra.mxu0 0.0
      %921 = vmatpush.msra.mxu0 0.0
      %922 = vmatpush.msra.mxu0 0.0
      %923 = vmatpush.msra.mxu0 0.0
      %924 = vmatpush.msra.mxu0 0.0
      %925 = vmatpush.msra.mxu0 0.0
      %926 = vmatpush.msra.mxu0 0.0
      %927 = vmatpush.msra.mxu0 0.0
      %928 = vmatpush.msra.mxu0 %v321
      %929 = vmatpush.msra.mxu0 %v308
      %930 = vmatmul.f32.gmra.mxu0 %v886
      %v931 = vpop.f32.mrf.mxu0
      %v932 = vadd.f32 0.0, %v931
      %933 = vmatmul.f32.gmra.mxu0 %v889
      %v934 = vpop.f32.mrf.mxu0
      %v935 = vadd.f32 0.0, %v934
      %936 = vdwg.mxu0
      %v937 = vadd.f32 %v854, %v909
      %v938 = vadd.f32 %v877, %v932
      %v939 = vadd.f32 %v857, %v912
      %v940 = vadd.f32 %v880, %v935
      %941 = vmatpush.msra.mxu0 0.0
      %942 = vmatpush.msra.mxu0 0.0
      %943 = vmatpush.msra.mxu0 0.0
      %944 = vmatpush.msra.mxu0 0.0
      %945 = vmatpush.msra.mxu0 0.0
      %946 = vmatpush.msra.mxu0 0.0
      %947 = vmatpush.msra.mxu0 0.0
      %948 = vmatpush.msra.mxu0 0.0
      %949 = vmatpush.msra.mxu0 0.0
      %950 = vmatpush.msra.mxu0 0.0
      %951 = vmatpush.msra.mxu0 0.0
      %952 = vmatpush.msra.mxu0 0.0
      %953 = vmatpush.msra.mxu0 0.0
      %954 = vmatpush.msra.mxu0 0.0
      %955 = vmatpush.msra.mxu0 %v388
      %956 = vmatpush.msra.mxu0 %v377
      %957 = vmatmul.f32.gmra.mxu0 %v452
      %v958 = vpop.f32.mrf.mxu0
      %v959 = vadd.f32 0.0, %v958
      %960 = vmatmul.f32.gmra.mxu0 %v455
      %v961 = vpop.f32.mrf.mxu0
      %v962 = vadd.f32 0.0, %v961
      %963 = vdwg.mxu0
      %964 = vmatpush.msra.mxu0 0.0
      %965 = vmatpush.msra.mxu0 0.0
      %966 = vmatpush.msra.mxu0 0.0
      %967 = vmatpush.msra.mxu0 0.0
      %968 = vmatpush.msra.mxu0 0.0
      %969 = vmatpush.msra.mxu0 0.0
      %970 = vmatpush.msra.mxu0 0.0
      %971 = vmatpush.msra.mxu0 0.0
      %972 = vmatpush.msra.mxu0 0.0
      %973 = vmatpush.msra.mxu0 0.0
      %974 = vmatpush.msra.mxu0 0.0
      %975 = vmatpush.msra.mxu0 0.0
      %976 = vmatpush.msra.mxu0 0.0
      %977 = vmatpush.msra.mxu0 0.0
      %978 = vmatpush.msra.mxu0 %v391
      %979 = vmatpush.msra.mxu0 %v378
      %980 = vmatmul.f32.gmra.mxu0 %v452
      %v981 = vpop.f32.mrf.mxu0
      %v982 = vadd.f32 0.0, %v981
      %983 = vmatmul.f32.gmra.mxu0 %v455
      %v984 = vpop.f32.mrf.mxu0
      %v985 = vadd.f32 0.0, %v984
      %986 = vdwg.mxu0
      %v987 = vadd.f32 %v937, %v959
      %v988 = vadd.f32 %v938, %v982
      %v989 = vadd.f32 %v939, %v962
      %v990 = vadd.f32 %v940, %v985
      %991 = vmatpush.msra.mxu0 0.0
      %992 = vmatpush.msra.mxu0 0.0
      %993 = vmatpush.msra.mxu0 0.0
      %994 = vmatpush.msra.mxu0 0.0
      %995 = vmatpush.msra.mxu0 0.0
      %996 = vmatpush.msra.mxu0 0.0
      %997 = vmatpush.msra.mxu0 0.0
      %998 = vmatpush.msra.mxu0 0.0
      %999 = vmatpush.msra.mxu0 0.0
      %1000 = vmatpush.msra.mxu0 0.0
      %1001 = vmatpush.msra.mxu0 0.0
      %1002 = vmatpush.msra.mxu0 0.0
      %1003 = vmatpush.msra.mxu0 0.0
      %1004 = vmatpush.msra.mxu0 0.0
      %1005 = vmatpush.msra.mxu0 %v458
      %1006 = vmatpush.msra.mxu0 %v447
      %1007 = vmatmul.f32.gmra.mxu0 %v522
      %v1008 = vpop.f32.mrf.mxu0
      %v1009 = vadd.f32 0.0, %v1008
      %1010 = vmatmul.f32.gmra.mxu0 %v525
      %v1011 = vpop.f32.mrf.mxu0
      %v1012 = vadd.f32 0.0, %v1011
      %1013 = vdwg.mxu0
      %1014 = vmatpush.msra.mxu0 0.0
      %1015 = vmatpush.msra.mxu0 0.0
      %1016 = vmatpush.msra.mxu0 0.0
      %1017 = vmatpush.msra.mxu0 0.0
      %1018 = vmatpush.msra.mxu0 0.0
      %1019 = vmatpush.msra.mxu0 0.0
      %1020 = vmatpush.msra.mxu0 0.0
      %1021 = vmatpush.msra.mxu0 0.0
      %1022 = vmatpush.msra.mxu0 0.0
      %1023 = vmatpush.msra.mxu0 0.0
      %1024 = vmatpush.msra.mxu0 0.0
      %1025 = vmatpush.msra.mxu0 0.0
      %1026 = vmatpush.msra.mxu0 0.0
      %1027 = vmatpush.msra.mxu0 0.0
      %1028 = vmatpush.msra.mxu0 %v461
      %1029 = vmatpush.msra.mxu0 %v448
      %1030 = vmatmul.f32.gmra.mxu0 %v522
      %v1031 = vpop.f32.mrf.mxu0
      %v1032 = vadd.f32 0.0, %v1031
      %1033 = vmatmul.f32.gmra.mxu0 %v525
      %v1034 = vpop.f32.mrf.mxu0
      %v1035 = vadd.f32 0.0, %v1034
      %1036 = vdwg.mxu0
      %v1037 = vadd.f32 %v987, %v1009
      %v1038 = vadd.f32 %v988, %v1032
      %v1039 = vadd.f32 %v989, %v1012
      %v1040 = vadd.f32 %v990, %v1035
      %s1041 = scalar_lea.vmem %s165, 112
      %v1042 = vld [vmem:[%s1041] sm:$0xff]
      %v1043 = vld [vmem:[%s1041 + $0x8] sm:$0x3f]
      %v1045 = vsel %vm185, %v1042, 0
      %v1048 = vsel %vm185, %v1043, 0
      %1050 = vmatpush.msra.mxu0 0.0
      %1051 = vmatpush.msra.mxu0 0.0
      %1052 = vmatpush.msra.mxu0 0.0
      %1053 = vmatpush.msra.mxu0 0.0
      %1054 = vmatpush.msra.mxu0 0.0
      %1055 = vmatpush.msra.mxu0 0.0
      %1056 = vmatpush.msra.mxu0 0.0
      %1057 = vmatpush.msra.mxu0 0.0
      %1058 = vmatpush.msra.mxu0 0.0
      %1059 = vmatpush.msra.mxu0 0.0
      %1060 = vmatpush.msra.mxu0 0.0
      %1061 = vmatpush.msra.mxu0 0.0
      %1062 = vmatpush.msra.mxu0 0.0
      %1063 = vmatpush.msra.mxu0 0.0
      %1064 = vmatpush.msra.mxu0 %v528
      %1065 = vmatpush.msra.mxu0 %v517
      %1066 = vmatmul.f32.gmra.mxu0 %v1045
      %v1067 = vpop.f32.mrf.mxu0
      %v1068 = vadd.f32 0.0, %v1067
      %1069 = vmatmul.f32.gmra.mxu0 %v1048
      %v1070 = vpop.f32.mrf.mxu0
      %v1071 = vadd.f32 0.0, %v1070
      %1072 = vdwg.mxu0
      %1073 = vmatpush.msra.mxu0 0.0
      %1074 = vmatpush.msra.mxu0 0.0
      %1075 = vmatpush.msra.mxu0 0.0
      %1076 = vmatpush.msra.mxu0 0.0
      %1077 = vmatpush.msra.mxu0 0.0
      %1078 = vmatpush.msra.mxu0 0.0
      %1079 = vmatpush.msra.mxu0 0.0
      %1080 = vmatpush.msra.mxu0 0.0
      %1081 = vmatpush.msra.mxu0 0.0
      %1082 = vmatpush.msra.mxu0 0.0
      %1083 = vmatpush.msra.mxu0 0.0
      %1084 = vmatpush.msra.mxu0 0.0
      %1085 = vmatpush.msra.mxu0 0.0
      %1086 = vmatpush.msra.mxu0 0.0
      %1087 = vmatpush.msra.mxu0 %v531
      %1088 = vmatpush.msra.mxu0 %v518
      %1089 = vmatmul.f32.gmra.mxu0 %v1045
      %v1090 = vpop.f32.mrf.mxu0
      %v1091 = vadd.f32 0.0, %v1090
      %1092 = vmatmul.f32.gmra.mxu0 %v1048
      %v1093 = vpop.f32.mrf.mxu0
      %v1094 = vadd.f32 0.0, %v1093
      %1095 = vdwg.mxu0
      %v1096 = vadd.f32 %v1037, %v1068
      %v1097 = vadd.f32 %v1038, %v1091
      %v1098 = vadd.f32 %v1039, %v1071
      %v1099 = vadd.f32 %v1040, %v1094
      %1100 = vmatpush.msra.mxu0 0.0
      %1101 = vmatpush.msra.mxu0 0.0
      %1102 = vmatpush.msra.mxu0 0.0
      %1103 = vmatpush.msra.mxu0 0.0
      %1104 = vmatpush.msra.mxu0 0.0
      %1105 = vmatpush.msra.mxu0 0.0
      %1106 = vmatpush.msra.mxu0 0.0
      %1107 = vmatpush.msra.mxu0 0.0
      %1108 = vmatpush.msra.mxu0 0.0
      %1109 = vmatpush.msra.mxu0 0.0
      %1110 = vmatpush.msra.mxu0 0.0
      %1111 = vmatpush.msra.mxu0 0.0
      %1112 = vmatpush.msra.mxu0 0.0
      %1113 = vmatpush.msra.mxu0 0.0
      %1114 = vmatpush.msra.mxu0 %v597
      %1115 = vmatpush.msra.mxu0 %v586
      %1116 = vmatmul.f32.gmra.mxu0 %v660
      %v1117 = vpop.f32.mrf.mxu0
      %v1118 = vadd.f32 0.0, %v1117
      %1119 = vmatmul.f32.gmra.mxu0 %v663
      %v1120 = vpop.f32.mrf.mxu0
      %v1121 = vadd.f32 0.0, %v1120
      %1122 = vdwg.mxu0
      %1123 = vmatpush.msra.mxu0 0.0
      %1124 = vmatpush.msra.mxu0 0.0
      %1125 = vmatpush.msra.mxu0 0.0
      %1126 = vmatpush.msra.mxu0 0.0
      %1127 = vmatpush.msra.mxu0 0.0
      %1128 = vmatpush.msra.mxu0 0.0
      %1129 = vmatpush.msra.mxu0 0.0
      %1130 = vmatpush.msra.mxu0 0.0
      %1131 = vmatpush.msra.mxu0 0.0
      %1132 = vmatpush.msra.mxu0 0.0
      %1133 = vmatpush.msra.mxu0 0.0
      %1134 = vmatpush.msra.mxu0 0.0
      %1135 = vmatpush.msra.mxu0 0.0
      %1136 = vmatpush.msra.mxu0 0.0
      %1137 = vmatpush.msra.mxu0 %v600
      %1138 = vmatpush.msra.mxu0 %v587
      %1139 = vmatmul.f32.gmra.mxu0 %v660
      %v1140 = vpop.f32.mrf.mxu0
      %v1141 = vadd.f32 0.0, %v1140
      %1142 = vmatmul.f32.gmra.mxu0 %v663
      %v1143 = vpop.f32.mrf.mxu0
      %v1144 = vadd.f32 0.0, %v1143
      %1145 = vdwg.mxu0
      %v1146 = vadd.f32 %v1096, %v1118
      %v1147 = vadd.f32 %v1097, %v1141
      %v1148 = vadd.f32 %v1098, %v1121
      %v1149 = vadd.f32 %v1099, %v1144
      %1150 = vmatpush.msra.mxu0 0.0
      %1151 = vmatpush.msra.mxu0 0.0
      %1152 = vmatpush.msra.mxu0 0.0
      %1153 = vmatpush.msra.mxu0 0.0
      %1154 = vmatpush.msra.mxu0 0.0
      %1155 = vmatpush.msra.mxu0 0.0
      %1156 = vmatpush.msra.mxu0 0.0
      %1157 = vmatpush.msra.mxu0 0.0
      %1158 = vmatpush.msra.mxu0 0.0
      %1159 = vmatpush.msra.mxu0 0.0
      %1160 = vmatpush.msra.mxu0 0.0
      %1161 = vmatpush.msra.mxu0 0.0
      %1162 = vmatpush.msra.mxu0 0.0
      %1163 = vmatpush.msra.mxu0 0.0
      %1164 = vmatpush.msra.mxu0 %v666
      %1165 = vmatpush.msra.mxu0 %v655
      %1166 = vmatmul.f32.gmra.mxu0 %v729
      %v1167 = vpop.f32.mrf.mxu0
      %v1168 = vadd.f32 0.0, %v1167
      %1169 = vmatmul.f32.gmra.mxu0 %v732
      %v1170 = vpop.f32.mrf.mxu0
      %v1171 = vadd.f32 0.0, %v1170
      %1172 = vdwg.mxu0
      %1173 = vmatpush.msra.mxu0 0.0
      %1174 = vmatpush.msra.mxu0 0.0
      %1175 = vmatpush.msra.mxu0 0.0
      %1176 = vmatpush.msra.mxu0 0.0
      %1177 = vmatpush.msra.mxu0 0.0
      %1178 = vmatpush.msra.mxu0 0.0
      %1179 = vmatpush.msra.mxu0 0.0
      %1180 = vmatpush.msra.mxu0 0.0
      %1181 = vmatpush.msra.mxu0 0.0
      %1182 = vmatpush.msra.mxu0 0.0
      %1183 = vmatpush.msra.mxu0 0.0
      %1184 = vmatpush.msra.mxu0 0.0
      %1185 = vmatpush.msra.mxu0 0.0
      %1186 = vmatpush.msra.mxu0 0.0
      %1187 = vmatpush.msra.mxu0 %v669
      %1188 = vmatpush.msra.mxu0 %v656
      %1189 = vmatmul.f32.gmra.mxu0 %v729
      %v1190 = vpop.f32.mrf.mxu0
      %v1191 = vadd.f32 0.0, %v1190
      %1192 = vmatmul.f32.gmra.mxu0 %v732
      %v1193 = vpop.f32.mrf.mxu0
      %v1194 = vadd.f32 0.0, %v1193
      %1195 = vdwg.mxu0
      %v1196 = vadd.f32 %v1146, %v1168
      %v1197 = vadd.f32 %v1147, %v1191
      %v1198 = vadd.f32 %v1148, %v1171
      %v1199 = vadd.f32 %v1149, %v1194
      %v1200 = vld [vmem:[%s882 + $0x1] sm:$0xff]
      %v1201 = vld [vmem:[%s882 + $0x9] sm:$0x3f]
      %v1203 = vsel %vm185, %v1200, 0
      %v1206 = vsel %vm185, %v1201, 0
      %1208 = vmatpush.msra.mxu0 0.0
      %1209 = vmatpush.msra.mxu0 0.0
      %1210 = vmatpush.msra.mxu0 0.0
      %1211 = vmatpush.msra.mxu0 0.0
      %1212 = vmatpush.msra.mxu0 0.0
      %1213 = vmatpush.msra.mxu0 0.0
      %1214 = vmatpush.msra.mxu0 0.0
      %1215 = vmatpush.msra.mxu0 0.0
      %1216 = vmatpush.msra.mxu0 0.0
      %1217 = vmatpush.msra.mxu0 0.0
      %1218 = vmatpush.msra.mxu0 0.0
      %1219 = vmatpush.msra.mxu0 0.0
      %1220 = vmatpush.msra.mxu0 0.0
      %1221 = vmatpush.msra.mxu0 0.0
      %1222 = vmatpush.msra.mxu0 %v735
      %1223 = vmatpush.msra.mxu0 %v724
      %1224 = vmatmul.f32.gmra.mxu0 %v1203
      %v1225 = vpop.f32.mrf.mxu0
      %v1226 = vadd.f32 0.0, %v1225
      %1227 = vmatmul.f32.gmra.mxu0 %v1206
      %v1228 = vpop.f32.mrf.mxu0
      %v1229 = vadd.f32 0.0, %v1228
      %1230 = vdwg.mxu0
      %1231 = vmatpush.msra.mxu0 0.0
      %1232 = vmatpush.msra.mxu0 0.0
      %1233 = vmatpush.msra.mxu0 0.0
      %1234 = vmatpush.msra.mxu0 0.0
      %1235 = vmatpush.msra.mxu0 0.0
      %1236 = vmatpush.msra.mxu0 0.0
      %1237 = vmatpush.msra.mxu0 0.0
      %1238 = vmatpush.msra.mxu0 0.0
      %1239 = vmatpush.msra.mxu0 0.0
      %1240 = vmatpush.msra.mxu0 0.0
      %1241 = vmatpush.msra.mxu0 0.0
      %1242 = vmatpush.msra.mxu0 0.0
      %1243 = vmatpush.msra.mxu0 0.0
      %1244 = vmatpush.msra.mxu0 0.0
      %1245 = vmatpush.msra.mxu0 %v738
      %1246 = vmatpush.msra.mxu0 %v725
      %1247 = vmatmul.f32.gmra.mxu0 %v1203
      %v1248 = vpop.f32.mrf.mxu0
      %v1249 = vadd.f32 0.0, %v1248
      %1250 = vmatmul.f32.gmra.mxu0 %v1206
      %v1251 = vpop.f32.mrf.mxu0
      %v1252 = vadd.f32 0.0, %v1251
      %1253 = vdwg.mxu0
      %v1254 = vadd.f32 %v1196, %v1226
      %v1255 = vadd.f32 %v1197, %v1249
      %v1256 = vadd.f32 %v1198, %v1229
      %v1257 = vadd.f32 %v1199, %v1252
      %v1258 = vmax.f32 %v786, %v1254
      %v1259 = vmax.f32 %v787, %v1255
      %v1260 = vmax.f32 %v788, %v1256
      %v1261 = vmax.f32 %v789, %v1257
      %1262 = vmatpush.msra.mxu0 0.0
      %1263 = vmatpush.msra.mxu0 0.0
      %1264 = vmatpush.msra.mxu0 0.0
      %1265 = vmatpush.msra.mxu0 0.0
      %1266 = vmatpush.msra.mxu0 0.0
      %1267 = vmatpush.msra.mxu0 0.0
      %1268 = vmatpush.msra.mxu0 0.0
      %1269 = vmatpush.msra.mxu0 0.0
      %1270 = vmatpush.msra.mxu0 0.0
      %1271 = vmatpush.msra.mxu0 0.0
      %1272 = vmatpush.msra.mxu0 0.0
      %1273 = vmatpush.msra.mxu0 0.0
      %1274 = vmatpush.msra.mxu0 0.0
      %1275 = vmatpush.msra.mxu0 0.0
      %1276 = vmatpush.msra.mxu0 %v194
      %1277 = vmatpush.msra.mxu0 %v181
      %1278 = vmatmul.f32.gmra.mxu0 %v452
      %v1279 = vpop.f32.mrf.mxu0
      %v1280 = vadd.f32 0.0, %v1279
      %1281 = vmatmul.f32.gmra.mxu0 %v455
      %v1282 = vpop.f32.mrf.mxu0
      %v1283 = vadd.f32 0.0, %v1282
      %1284 = vdwg.mxu0
      %1285 = vmatpush.msra.mxu0 0.0
      %1286 = vmatpush.msra.mxu0 0.0
      %1287 = vmatpush.msra.mxu0 0.0
      %1288 = vmatpush.msra.mxu0 0.0
      %1289 = vmatpush.msra.mxu0 0.0
      %1290 = vmatpush.msra.mxu0 0.0
      %1291 = vmatpush.msra.mxu0 0.0
      %1292 = vmatpush.msra.mxu0 0.0
      %1293 = vmatpush.msra.mxu0 0.0
      %1294 = vmatpush.msra.mxu0 0.0
      %1295 = vmatpush.msra.mxu0 0.0
      %1296 = vmatpush.msra.mxu0 0.0
      %1297 = vmatpush.msra.mxu0 0.0
      %1298 = vmatpush.msra.mxu0 0.0
      %1299 = vmatpush.msra.mxu0 %v197
      %1300 = vmatpush.msra.mxu0 %v182
      %1301 = vmatmul.f32.gmra.mxu0 %v452
      %v1302 = vpop.f32.mrf.mxu0
      %v1303 = vadd.f32 0.0, %v1302
      %1304 = vmatmul.f32.gmra.mxu0 %v455
      %v1305 = vpop.f32.mrf.mxu0
      %v1306 = vadd.f32 0.0, %v1305
      %1307 = vdwg.mxu0
      %1308 = vmatpush.msra.mxu0 0.0
      %1309 = vmatpush.msra.mxu0 0.0
      %1310 = vmatpush.msra.mxu0 0.0
      %1311 = vmatpush.msra.mxu0 0.0
      %1312 = vmatpush.msra.mxu0 0.0
      %1313 = vmatpush.msra.mxu0 0.0
      %1314 = vmatpush.msra.mxu0 0.0
      %1315 = vmatpush.msra.mxu0 0.0
      %1316 = vmatpush.msra.mxu0 0.0
      %1317 = vmatpush.msra.mxu0 0.0
      %1318 = vmatpush.msra.mxu0 0.0
      %1319 = vmatpush.msra.mxu0 0.0
      %1320 = vmatpush.msra.mxu0 0.0
      %1321 = vmatpush.msra.mxu0 0.0
      %1322 = vmatpush.msra.mxu0 %v252
      %1323 = vmatpush.msra.mxu0 %v173
      %1324 = vmatmul.f32.gmra.mxu0 %v382
      %v1325 = vpop.f32.mrf.mxu0
      %v1326 = vadd.f32 %v1280, %v1325
      %1327 = vmatmul.f32.gmra.mxu0 %v385
      %v1328 = vpop.f32.mrf.mxu0
      %v1329 = vadd.f32 %v1283, %v1328
      %1330 = vdwg.mxu0
      %1331 = vmatpush.msra.mxu0 0.0
      %1332 = vmatpush.msra.mxu0 0.0
      %1333 = vmatpush.msra.mxu0 0.0
      %1334 = vmatpush.msra.mxu0 0.0
      %1335 = vmatpush.msra.mxu0 0.0
      %1336 = vmatpush.msra.mxu0 0.0
      %1337 = vmatpush.msra.mxu0 0.0
      %1338 = vmatpush.msra.mxu0 0.0
      %1339 = vmatpush.msra.mxu0 0.0
      %1340 = vmatpush.msra.mxu0 0.0
      %1341 = vmatpush.msra.mxu0 0.0
      %1342 = vmatpush.msra.mxu0 0.0
      %1343 = vmatpush.msra.mxu0 0.0
      %1344 = vmatpush.msra.mxu0 0.0
      %1345 = vmatpush.msra.mxu0 %v255
      %1346 = vmatpush.msra.mxu0 %v174
      %1347 = vmatmul.f32.gmra.mxu0 %v382
      %v1348 = vpop.f32.mrf.mxu0
      %v1349 = vadd.f32 %v1303, %v1348
      %1350 = vmatmul.f32.gmra.mxu0 %v385
      %v1351 = vpop.f32.mrf.mxu0
      %v1352 = vadd.f32 %v1306, %v1351
      %1353 = vdwg.mxu0
      %1354 = vmatpush.msra.mxu0 0.0
      %1355 = vmatpush.msra.mxu0 0.0
      %1356 = vmatpush.msra.mxu0 0.0
      %1357 = vmatpush.msra.mxu0 0.0
      %1358 = vmatpush.msra.mxu0 0.0
      %1359 = vmatpush.msra.mxu0 0.0
      %1360 = vmatpush.msra.mxu0 0.0
      %1361 = vmatpush.msra.mxu0 0.0
      %1362 = vmatpush.msra.mxu0 0.0
      %1363 = vmatpush.msra.mxu0 0.0
      %1364 = vmatpush.msra.mxu0 0.0
      %1365 = vmatpush.msra.mxu0 0.0
      %1366 = vmatpush.msra.mxu0 0.0
      %1367 = vmatpush.msra.mxu0 0.0
      %1368 = vmatpush.msra.mxu0 %v318
      %1369 = vmatpush.msra.mxu0 %v307
      %1370 = vmatmul.f32.gmra.mxu0 %v522
      %v1371 = vpop.f32.mrf.mxu0
      %v1372 = vadd.f32 0.0, %v1371
      %1373 = vmatmul.f32.gmra.mxu0 %v525
      %v1374 = vpop.f32.mrf.mxu0
      %v1375 = vadd.f32 0.0, %v1374
      %1376 = vdwg.mxu0
      %1377 = vmatpush.msra.mxu0 0.0
      %1378 = vmatpush.msra.mxu0 0.0
      %1379 = vmatpush.msra.mxu0 0.0
      %1380 = vmatpush.msra.mxu0 0.0
      %1381 = vmatpush.msra.mxu0 0.0
      %1382 = vmatpush.msra.mxu0 0.0
      %1383 = vmatpush.msra.mxu0 0.0
      %1384 = vmatpush.msra.mxu0 0.0
      %1385 = vmatpush.msra.mxu0 0.0
      %1386 = vmatpush.msra.mxu0 0.0
      %1387 = vmatpush.msra.mxu0 0.0
      %1388 = vmatpush.msra.mxu0 0.0
      %1389 = vmatpush.msra.mxu0 0.0
      %1390 = vmatpush.msra.mxu0 0.0
      %1391 = vmatpush.msra.mxu0 %v321
      %1392 = vmatpush.msra.mxu0 %v308
      %1393 = vmatmul.f32.gmra.mxu0 %v522
      %v1394 = vpop.f32.mrf.mxu0
      %v1395 = vadd.f32 0.0, %v1394
      %1396 = vmatmul.f32.gmra.mxu0 %v525
      %v1397 = vpop.f32.mrf.mxu0
      %v1398 = vadd.f32 0.0, %v1397
      %1399 = vdwg.mxu0
      %v1400 = vadd.f32 %v1326, %v1372
      %v1401 = vadd.f32 %v1349, %v1395
      %v1402 = vadd.f32 %v1329, %v1375
      %v1403 = vadd.f32 %v1352, %v1398
      %1404 = vmatpush.msra.mxu0 0.0
      %1405 = vmatpush.msra.mxu0 0.0
      %1406 = vmatpush.msra.mxu0 0.0
      %1407 = vmatpush.msra.mxu0 0.0
      %1408 = vmatpush.msra.mxu0 0.0
      %1409 = vmatpush.msra.mxu0 0.0
      %1410 = vmatpush.msra.mxu0 0.0
      %1411 = vmatpush.msra.mxu0 0.0
      %1412 = vmatpush.msra.mxu0 0.0
      %1413 = vmatpush.msra.mxu0 0.0
      %1414 = vmatpush.msra.mxu0 0.0
      %1415 = vmatpush.msra.mxu0 0.0
      %1416 = vmatpush.msra.mxu0 0.0
      %1417 = vmatpush.msra.mxu0 0.0
      %1418 = vmatpush.msra.mxu0 %v388
      %1419 = vmatpush.msra.mxu0 %v377
      %1420 = vmatmul.f32.gmra.mxu0 %v591
      %v1421 = vpop.f32.mrf.mxu0
      %v1422 = vadd.f32 0.0, %v1421
      %1423 = vmatmul.f32.gmra.mxu0 %v594
      %v1424 = vpop.f32.mrf.mxu0
      %v1425 = vadd.f32 0.0, %v1424
      %1426 = vdwg.mxu0
      %1427 = vmatpush.msra.mxu0 0.0
      %1428 = vmatpush.msra.mxu0 0.0
      %1429 = vmatpush.msra.mxu0 0.0
      %1430 = vmatpush.msra.mxu0 0.0
      %1431 = vmatpush.msra.mxu0 0.0
      %1432 = vmatpush.msra.mxu0 0.0
      %1433 = vmatpush.msra.mxu0 0.0
      %1434 = vmatpush.msra.mxu0 0.0
      %1435 = vmatpush.msra.mxu0 0.0
      %1436 = vmatpush.msra.mxu0 0.0
      %1437 = vmatpush.msra.mxu0 0.0
      %1438 = vmatpush.msra.mxu0 0.0
      %1439 = vmatpush.msra.mxu0 0.0
      %1440 = vmatpush.msra.mxu0 0.0
      %1441 = vmatpush.msra.mxu0 %v391
      %1442 = vmatpush.msra.mxu0 %v378
      %1443 = vmatmul.f32.gmra.mxu0 %v591
      %v1444 = vpop.f32.mrf.mxu0
      %v1445 = vadd.f32 0.0, %v1444
      %1446 = vmatmul.f32.gmra.mxu0 %v594
      %v1447 = vpop.f32.mrf.mxu0
      %v1448 = vadd.f32 0.0, %v1447
      %1449 = vdwg.mxu0
      %v1450 = vadd.f32 %v1400, %v1422
      %v1451 = vadd.f32 %v1401, %v1445
      %v1452 = vadd.f32 %v1402, %v1425
      %v1453 = vadd.f32 %v1403, %v1448
      %1454 = vmatpush.msra.mxu0 0.0
      %1455 = vmatpush.msra.mxu0 0.0
      %1456 = vmatpush.msra.mxu0 0.0
      %1457 = vmatpush.msra.mxu0 0.0
      %1458 = vmatpush.msra.mxu0 0.0
      %1459 = vmatpush.msra.mxu0 0.0
      %1460 = vmatpush.msra.mxu0 0.0
      %1461 = vmatpush.msra.mxu0 0.0
      %1462 = vmatpush.msra.mxu0 0.0
      %1463 = vmatpush.msra.mxu0 0.0
      %1464 = vmatpush.msra.mxu0 0.0
      %1465 = vmatpush.msra.mxu0 0.0
      %1466 = vmatpush.msra.mxu0 0.0
      %1467 = vmatpush.msra.mxu0 0.0
      %1468 = vmatpush.msra.mxu0 %v458
      %1469 = vmatpush.msra.mxu0 %v447
      %1470 = vmatmul.f32.gmra.mxu0 %v660
      %v1471 = vpop.f32.mrf.mxu0
      %v1472 = vadd.f32 0.0, %v1471
      %1473 = vmatmul.f32.gmra.mxu0 %v663
      %v1474 = vpop.f32.mrf.mxu0
      %v1475 = vadd.f32 0.0, %v1474
      %1476 = vdwg.mxu0
      %1477 = vmatpush.msra.mxu0 0.0
      %1478 = vmatpush.msra.mxu0 0.0
      %1479 = vmatpush.msra.mxu0 0.0
      %1480 = vmatpush.msra.mxu0 0.0
      %1481 = vmatpush.msra.mxu0 0.0
      %1482 = vmatpush.msra.mxu0 0.0
      %1483 = vmatpush.msra.mxu0 0.0
      %1484 = vmatpush.msra.mxu0 0.0
      %1485 = vmatpush.msra.mxu0 0.0
      %1486 = vmatpush.msra.mxu0 0.0
      %1487 = vmatpush.msra.mxu0 0.0
      %1488 = vmatpush.msra.mxu0 0.0
      %1489 = vmatpush.msra.mxu0 0.0
      %1490 = vmatpush.msra.mxu0 0.0
      %1491 = vmatpush.msra.mxu0 %v461
      %1492 = vmatpush.msra.mxu0 %v448
      %1493 = vmatmul.f32.gmra.mxu0 %v660
      %v1494 = vpop.f32.mrf.mxu0
      %v1495 = vadd.f32 0.0, %v1494
      %1496 = vmatmul.f32.gmra.mxu0 %v663
      %v1497 = vpop.f32.mrf.mxu0
      %v1498 = vadd.f32 0.0, %v1497
      %1499 = vdwg.mxu0
      %v1500 = vadd.f32 %v1450, %v1472
      %v1501 = vadd.f32 %v1451, %v1495
      %v1502 = vadd.f32 %v1452, %v1475
      %v1503 = vadd.f32 %v1453, %v1498
      %1504 = vmatpush.msra.mxu0 0.0
      %1505 = vmatpush.msra.mxu0 0.0
      %1506 = vmatpush.msra.mxu0 0.0
      %1507 = vmatpush.msra.mxu0 0.0
      %1508 = vmatpush.msra.mxu0 0.0
      %1509 = vmatpush.msra.mxu0 0.0
      %1510 = vmatpush.msra.mxu0 0.0
      %1511 = vmatpush.msra.mxu0 0.0
      %1512 = vmatpush.msra.mxu0 0.0
      %1513 = vmatpush.msra.mxu0 0.0
      %1514 = vmatpush.msra.mxu0 0.0
      %1515 = vmatpush.msra.mxu0 0.0
      %1516 = vmatpush.msra.mxu0 0.0
      %1517 = vmatpush.msra.mxu0 0.0
      %1518 = vmatpush.msra.mxu0 %v528
      %1519 = vmatpush.msra.mxu0 %v517
      %1520 = vmatmul.f32.gmra.mxu0 %v729
      %v1521 = vpop.f32.mrf.mxu0
      %v1522 = vadd.f32 0.0, %v1521
      %1523 = vmatmul.f32.gmra.mxu0 %v732
      %v1524 = vpop.f32.mrf.mxu0
      %v1525 = vadd.f32 0.0, %v1524
      %1526 = vdwg.mxu0
      %1527 = vmatpush.msra.mxu0 0.0
      %1528 = vmatpush.msra.mxu0 0.0
      %1529 = vmatpush.msra.mxu0 0.0
      %1530 = vmatpush.msra.mxu0 0.0
      %1531 = vmatpush.msra.mxu0 0.0
      %1532 = vmatpush.msra.mxu0 0.0
      %1533 = vmatpush.msra.mxu0 0.0
      %1534 = vmatpush.msra.mxu0 0.0
      %1535 = vmatpush.msra.mxu0 0.0
      %1536 = vmatpush.msra.mxu0 0.0
      %1537 = vmatpush.msra.mxu0 0.0
      %1538 = vmatpush.msra.mxu0 0.0
      %1539 = vmatpush.msra.mxu0 0.0
      %1540 = vmatpush.msra.mxu0 0.0
      %1541 = vmatpush.msra.mxu0 %v531
      %1542 = vmatpush.msra.mxu0 %v518
      %1543 = vmatmul.f32.gmra.mxu0 %v729
      %v1544 = vpop.f32.mrf.mxu0
      %v1545 = vadd.f32 0.0, %v1544
      %1546 = vmatmul.f32.gmra.mxu0 %v732
      %v1547 = vpop.f32.mrf.mxu0
      %v1548 = vadd.f32 0.0, %v1547
      %1549 = vdwg.mxu0
      %v1550 = vadd.f32 %v1500, %v1522
      %v1551 = vadd.f32 %v1501, %v1545
      %v1552 = vadd.f32 %v1502, %v1525
      %v1553 = vadd.f32 %v1503, %v1548
      %v1554 = vld [vmem:[%s373 + $0x1] sm:$0xff]
      %v1555 = vld [vmem:[%s373 + $0x9] sm:$0x3f]
      %v1557 = vsel %vm185, %v1554, 0
      %v1560 = vsel %vm185, %v1555, 0
      %1562 = vmatpush.msra.mxu0 0.0
      %1563 = vmatpush.msra.mxu0 0.0
      %1564 = vmatpush.msra.mxu0 0.0
      %1565 = vmatpush.msra.mxu0 0.0
      %1566 = vmatpush.msra.mxu0 0.0
      %1567 = vmatpush.msra.mxu0 0.0
      %1568 = vmatpush.msra.mxu0 0.0
      %1569 = vmatpush.msra.mxu0 0.0
      %1570 = vmatpush.msra.mxu0 0.0
      %1571 = vmatpush.msra.mxu0 0.0
      %1572 = vmatpush.msra.mxu0 0.0
      %1573 = vmatpush.msra.mxu0 0.0
      %1574 = vmatpush.msra.mxu0 0.0
      %1575 = vmatpush.msra.mxu0 0.0
      %1576 = vmatpush.msra.mxu0 %v597
      %1577 = vmatpush.msra.mxu0 %v586
      %1578 = vmatmul.f32.gmra.mxu0 %v1557
      %v1579 = vpop.f32.mrf.mxu0
      %v1580 = vadd.f32 0.0, %v1579
      %1581 = vmatmul.f32.gmra.mxu0 %v1560
      %v1582 = vpop.f32.mrf.mxu0
      %v1583 = vadd.f32 0.0, %v1582
      %1584 = vdwg.mxu0
      %1585 = vmatpush.msra.mxu0 0.0
      %1586 = vmatpush.msra.mxu0 0.0
      %1587 = vmatpush.msra.mxu0 0.0
      %1588 = vmatpush.msra.mxu0 0.0
      %1589 = vmatpush.msra.mxu0 0.0
      %1590 = vmatpush.msra.mxu0 0.0
      %1591 = vmatpush.msra.mxu0 0.0
      %1592 = vmatpush.msra.mxu0 0.0
      %1593 = vmatpush.msra.mxu0 0.0
      %1594 = vmatpush.msra.mxu0 0.0
      %1595 = vmatpush.msra.mxu0 0.0
      %1596 = vmatpush.msra.mxu0 0.0
      %1597 = vmatpush.msra.mxu0 0.0
      %1598 = vmatpush.msra.mxu0 0.0
      %1599 = vmatpush.msra.mxu0 %v600
      %1600 = vmatpush.msra.mxu0 %v587
      %1601 = vmatmul.f32.gmra.mxu0 %v1557
      %v1602 = vpop.f32.mrf.mxu0
      %v1603 = vadd.f32 0.0, %v1602
      %1604 = vmatmul.f32.gmra.mxu0 %v1560
      %v1605 = vpop.f32.mrf.mxu0
      %v1606 = vadd.f32 0.0, %v1605
      %1607 = vdwg.mxu0
      %v1608 = vadd.f32 %v1550, %v1580
      %v1609 = vadd.f32 %v1551, %v1603
      %v1610 = vadd.f32 %v1552, %v1583
      %v1611 = vadd.f32 %v1553, %v1606
      %v1612 = vld [vmem:[%s443 + $0x1] sm:$0xff]
      %v1613 = vld [vmem:[%s443 + $0x9] sm:$0x3f]
      %v1615 = vsel %vm185, %v1612, 0
      %v1618 = vsel %vm185, %v1613, 0
      %1620 = vmatpush.msra.mxu0 0.0
      %1621 = vmatpush.msra.mxu0 0.0
      %1622 = vmatpush.msra.mxu0 0.0
      %1623 = vmatpush.msra.mxu0 0.0
      %1624 = vmatpush.msra.mxu0 0.0
      %1625 = vmatpush.msra.mxu0 0.0
      %1626 = vmatpush.msra.mxu0 0.0
      %1627 = vmatpush.msra.mxu0 0.0
      %1628 = vmatpush.msra.mxu0 0.0
      %1629 = vmatpush.msra.mxu0 0.0
      %1630 = vmatpush.msra.mxu0 0.0
      %1631 = vmatpush.msra.mxu0 0.0
      %1632 = vmatpush.msra.mxu0 0.0
      %1633 = vmatpush.msra.mxu0 0.0
      %1634 = vmatpush.msra.mxu0 %v666
      %1635 = vmatpush.msra.mxu0 %v655
      %1636 = vmatmul.f32.gmra.mxu0 %v1615
      %v1637 = vpop.f32.mrf.mxu0
      %v1638 = vadd.f32 0.0, %v1637
      %1639 = vmatmul.f32.gmra.mxu0 %v1618
      %v1640 = vpop.f32.mrf.mxu0
      %v1641 = vadd.f32 0.0, %v1640
      %1642 = vdwg.mxu0
      %1643 = vmatpush.msra.mxu0 0.0
      %1644 = vmatpush.msra.mxu0 0.0
      %1645 = vmatpush.msra.mxu0 0.0
      %1646 = vmatpush.msra.mxu0 0.0
      %1647 = vmatpush.msra.mxu0 0.0
      %1648 = vmatpush.msra.mxu0 0.0
      %1649 = vmatpush.msra.mxu0 0.0
      %1650 = vmatpush.msra.mxu0 0.0
      %1651 = vmatpush.msra.mxu0 0.0
      %1652 = vmatpush.msra.mxu0 0.0
      %1653 = vmatpush.msra.mxu0 0.0
      %1654 = vmatpush.msra.mxu0 0.0
      %1655 = vmatpush.msra.mxu0 0.0
      %1656 = vmatpush.msra.mxu0 0.0
      %1657 = vmatpush.msra.mxu0 %v669
      %1658 = vmatpush.msra.mxu0 %v656
      %1659 = vmatmul.f32.gmra.mxu0 %v1615
      %v1660 = vpop.f32.mrf.mxu0
      %v1661 = vadd.f32 0.0, %v1660
      %1662 = vmatmul.f32.gmra.mxu0 %v1618
      %v1663 = vpop.f32.mrf.mxu0
      %v1664 = vadd.f32 0.0, %v1663
      %1665 = vdwg.mxu0
      %v1666 = vadd.f32 %v1608, %v1638
      %v1667 = vadd.f32 %v1609, %v1661
      %v1668 = vadd.f32 %v1610, %v1641
      %v1669 = vadd.f32 %v1611, %v1664
      %v1670 = vld [vmem:[%s513 + $0x1] sm:$0xff]
      %v1671 = vld [vmem:[%s513 + $0x9] sm:$0x3f]
      %v1673 = vsel %vm185, %v1670, 0
      %v1676 = vsel %vm185, %v1671, 0
      %1678 = vmatpush.msra.mxu0 0.0
      %1679 = vmatpush.msra.mxu0 0.0
      %1680 = vmatpush.msra.mxu0 0.0
      %1681 = vmatpush.msra.mxu0 0.0
      %1682 = vmatpush.msra.mxu0 0.0
      %1683 = vmatpush.msra.mxu0 0.0
      %1684 = vmatpush.msra.mxu0 0.0
      %1685 = vmatpush.msra.mxu0 0.0
      %1686 = vmatpush.msra.mxu0 0.0
      %1687 = vmatpush.msra.mxu0 0.0
      %1688 = vmatpush.msra.mxu0 0.0
      %1689 = vmatpush.msra.mxu0 0.0
      %1690 = vmatpush.msra.mxu0 0.0
      %1691 = vmatpush.msra.mxu0 0.0
      %1692 = vmatpush.msra.mxu0 %v735
      %1693 = vmatpush.msra.mxu0 %v724
      %1694 = vmatmul.f32.gmra.mxu0 %v1673
      %v1695 = vpop.f32.mrf.mxu0
      %v1696 = vadd.f32 0.0, %v1695
      %1697 = vmatmul.f32.gmra.mxu0 %v1676
      %v1698 = vpop.f32.mrf.mxu0
      %v1699 = vadd.f32 0.0, %v1698
      %1700 = vdwg.mxu0
      %1701 = vmatpush.msra.mxu0 0.0
      %1702 = vmatpush.msra.mxu0 0.0
      %1703 = vmatpush.msra.mxu0 0.0
      %1704 = vmatpush.msra.mxu0 0.0
      %1705 = vmatpush.msra.mxu0 0.0
      %1706 = vmatpush.msra.mxu0 0.0
      %1707 = vmatpush.msra.mxu0 0.0
      %1708 = vmatpush.msra.mxu0 0.0
      %1709 = vmatpush.msra.mxu0 0.0
      %1710 = vmatpush.msra.mxu0 0.0
      %1711 = vmatpush.msra.mxu0 0.0
      %1712 = vmatpush.msra.mxu0 0.0
      %1713 = vmatpush.msra.mxu0 0.0
      %1714 = vmatpush.msra.mxu0 0.0
      %1715 = vmatpush.msra.mxu0 %v738
      %1716 = vmatpush.msra.mxu0 %v725
      %1717 = vmatmul.f32.gmra.mxu0 %v1673
      %v1718 = vpop.f32.mrf.mxu0
      %v1719 = vadd.f32 0.0, %v1718
      %1720 = vmatmul.f32.gmra.mxu0 %v1676
      %v1721 = vpop.f32.mrf.mxu0
      %v1722 = vadd.f32 0.0, %v1721
      %1723 = vdwg.mxu0
      %v1724 = vadd.f32 %v1666, %v1696
      %v1725 = vadd.f32 %v1667, %v1719
      %v1726 = vadd.f32 %v1668, %v1699
      %v1727 = vadd.f32 %v1669, %v1722
      %v1728 = vmax.f32 %v1258, %v1724
      %v1729 = vmax.f32 %v1259, %v1725
      %v1730 = vmax.f32 %v1260, %v1726
      %v1731 = vmax.f32 %v1261, %v1727
      %1732 = vmatpush.msra.mxu0 0.0
      %1733 = vmatpush.msra.mxu0 0.0
      %1734 = vmatpush.msra.mxu0 0.0
      %1735 = vmatpush.msra.mxu0 0.0
      %1736 = vmatpush.msra.mxu0 0.0
      %1737 = vmatpush.msra.mxu0 0.0
      %1738 = vmatpush.msra.mxu0 0.0
      %1739 = vmatpush.msra.mxu0 0.0
      %1740 = vmatpush.msra.mxu0 0.0
      %1741 = vmatpush.msra.mxu0 0.0
      %1742 = vmatpush.msra.mxu0 0.0
      %1743 = vmatpush.msra.mxu0 0.0
      %1744 = vmatpush.msra.mxu0 0.0
      %1745 = vmatpush.msra.mxu0 0.0
      %1746 = vmatpush.msra.mxu0 %v194
      %1747 = vmatpush.msra.mxu0 %v181
      %1748 = vmatmul.f32.gmra.mxu0 %v522
      %v1749 = vpop.f32.mrf.mxu0
      %v1750 = vadd.f32 0.0, %v1749
      %1751 = vmatmul.f32.gmra.mxu0 %v525
      %v1752 = vpop.f32.mrf.mxu0
      %v1753 = vadd.f32 0.0, %v1752
      %1754 = vdwg.mxu0
      %1755 = vmatpush.msra.mxu0 0.0
      %1756 = vmatpush.msra.mxu0 0.0
      %1757 = vmatpush.msra.mxu0 0.0
      %1758 = vmatpush.msra.mxu0 0.0
      %1759 = vmatpush.msra.mxu0 0.0
      %1760 = vmatpush.msra.mxu0 0.0
      %1761 = vmatpush.msra.mxu0 0.0
      %1762 = vmatpush.msra.mxu0 0.0
      %1763 = vmatpush.msra.mxu0 0.0
      %1764 = vmatpush.msra.mxu0 0.0
      %1765 = vmatpush.msra.mxu0 0.0
      %1766 = vmatpush.msra.mxu0 0.0
      %1767 = vmatpush.msra.mxu0 0.0
      %1768 = vmatpush.msra.mxu0 0.0
      %1769 = vmatpush.msra.mxu0 %v197
      %1770 = vmatpush.msra.mxu0 %v182
      %1771 = vmatmul.f32.gmra.mxu0 %v522
      %v1772 = vpop.f32.mrf.mxu0
      %v1773 = vadd.f32 0.0, %v1772
      %1774 = vmatmul.f32.gmra.mxu0 %v525
      %v1775 = vpop.f32.mrf.mxu0
      %v1776 = vadd.f32 0.0, %v1775
      %1777 = vdwg.mxu0
      %1778 = vmatpush.msra.mxu0 0.0
      %1779 = vmatpush.msra.mxu0 0.0
      %1780 = vmatpush.msra.mxu0 0.0
      %1781 = vmatpush.msra.mxu0 0.0
      %1782 = vmatpush.msra.mxu0 0.0
      %1783 = vmatpush.msra.mxu0 0.0
      %1784 = vmatpush.msra.mxu0 0.0
      %1785 = vmatpush.msra.mxu0 0.0
      %1786 = vmatpush.msra.mxu0 0.0
      %1787 = vmatpush.msra.mxu0 0.0
      %1788 = vmatpush.msra.mxu0 0.0
      %1789 = vmatpush.msra.mxu0 0.0
      %1790 = vmatpush.msra.mxu0 0.0
      %1791 = vmatpush.msra.mxu0 0.0
      %1792 = vmatpush.msra.mxu0 %v252
      %1793 = vmatpush.msra.mxu0 %v173
      %1794 = vmatmul.f32.gmra.mxu0 %v452
      %v1795 = vpop.f32.mrf.mxu0
      %v1796 = vadd.f32 %v1750, %v1795
      %1797 = vmatmul.f32.gmra.mxu0 %v455
      %v1798 = vpop.f32.mrf.mxu0
      %v1799 = vadd.f32 %v1753, %v1798
      %1800 = vdwg.mxu0
      %1801 = vmatpush.msra.mxu0 0.0
      %1802 = vmatpush.msra.mxu0 0.0
      %1803 = vmatpush.msra.mxu0 0.0
      %1804 = vmatpush.msra.mxu0 0.0
      %1805 = vmatpush.msra.mxu0 0.0
      %1806 = vmatpush.msra.mxu0 0.0
      %1807 = vmatpush.msra.mxu0 0.0
      %1808 = vmatpush.msra.mxu0 0.0
      %1809 = vmatpush.msra.mxu0 0.0
      %1810 = vmatpush.msra.mxu0 0.0
      %1811 = vmatpush.msra.mxu0 0.0
      %1812 = vmatpush.msra.mxu0 0.0
      %1813 = vmatpush.msra.mxu0 0.0
      %1814 = vmatpush.msra.mxu0 0.0
      %1815 = vmatpush.msra.mxu0 %v255
      %1816 = vmatpush.msra.mxu0 %v174
      %1817 = vmatmul.f32.gmra.mxu0 %v452
      %v1818 = vpop.f32.mrf.mxu0
      %v1819 = vadd.f32 %v1773, %v1818
      %1820 = vmatmul.f32.gmra.mxu0 %v455
      %v1821 = vpop.f32.mrf.mxu0
      %v1822 = vadd.f32 %v1776, %v1821
      %1823 = vdwg.mxu0
      %1824 = vmatpush.msra.mxu0 0.0
      %1825 = vmatpush.msra.mxu0 0.0
      %1826 = vmatpush.msra.mxu0 0.0
      %1827 = vmatpush.msra.mxu0 0.0
      %1828 = vmatpush.msra.mxu0 0.0
      %1829 = vmatpush.msra.mxu0 0.0
      %1830 = vmatpush.msra.mxu0 0.0
      %1831 = vmatpush.msra.mxu0 0.0
      %1832 = vmatpush.msra.mxu0 0.0
      %1833 = vmatpush.msra.mxu0 0.0
      %1834 = vmatpush.msra.mxu0 0.0
      %1835 = vmatpush.msra.mxu0 0.0
      %1836 = vmatpush.msra.mxu0 0.0
      %1837 = vmatpush.msra.mxu0 0.0
      %1838 = vmatpush.msra.mxu0 %v318
      %1839 = vmatpush.msra.mxu0 %v307
      %1840 = vmatmul.f32.gmra.mxu0 %v1045
      %v1841 = vpop.f32.mrf.mxu0
      %v1842 = vadd.f32 0.0, %v1841
      %1843 = vmatmul.f32.gmra.mxu0 %v1048
      %v1844 = vpop.f32.mrf.mxu0
      %v1845 = vadd.f32 0.0, %v1844
      %1846 = vdwg.mxu0
      %1847 = vmatpush.msra.mxu0 0.0
      %1848 = vmatpush.msra.mxu0 0.0
      %1849 = vmatpush.msra.mxu0 0.0
      %1850 = vmatpush.msra.mxu0 0.0
      %1851 = vmatpush.msra.mxu0 0.0
      %1852 = vmatpush.msra.mxu0 0.0
      %1853 = vmatpush.msra.mxu0 0.0
      %1854 = vmatpush.msra.mxu0 0.0
      %1855 = vmatpush.msra.mxu0 0.0
      %1856 = vmatpush.msra.mxu0 0.0
      %1857 = vmatpush.msra.mxu0 0.0
      %1858 = vmatpush.msra.mxu0 0.0
      %1859 = vmatpush.msra.mxu0 0.0
      %1860 = vmatpush.msra.mxu0 0.0
      %1861 = vmatpush.msra.mxu0 %v321
      %1862 = vmatpush.msra.mxu0 %v308
      %1863 = vmatmul.f32.gmra.mxu0 %v1045
      %v1864 = vpop.f32.mrf.mxu0
      %v1865 = vadd.f32 0.0, %v1864
      %1866 = vmatmul.f32.gmra.mxu0 %v1048
      %v1867 = vpop.f32.mrf.mxu0
      %v1868 = vadd.f32 0.0, %v1867
      %1869 = vdwg.mxu0
      %v1870 = vadd.f32 %v1796, %v1842
      %v1871 = vadd.f32 %v1819, %v1865
      %v1872 = vadd.f32 %v1799, %v1845
      %v1873 = vadd.f32 %v1822, %v1868
      %1874 = vmatpush.msra.mxu0 0.0
      %1875 = vmatpush.msra.mxu0 0.0
      %1876 = vmatpush.msra.mxu0 0.0
      %1877 = vmatpush.msra.mxu0 0.0
      %1878 = vmatpush.msra.mxu0 0.0
      %1879 = vmatpush.msra.mxu0 0.0
      %1880 = vmatpush.msra.mxu0 0.0
      %1881 = vmatpush.msra.mxu0 0.0
      %1882 = vmatpush.msra.mxu0 0.0
      %1883 = vmatpush.msra.mxu0 0.0
      %1884 = vmatpush.msra.mxu0 0.0
      %1885 = vmatpush.msra.mxu0 0.0
      %1886 = vmatpush.msra.mxu0 0.0
      %1887 = vmatpush.msra.mxu0 0.0
      %1888 = vmatpush.msra.mxu0 %v388
      %1889 = vmatpush.msra.mxu0 %v377
      %1890 = vmatmul.f32.gmra.mxu0 %v660
      %v1891 = vpop.f32.mrf.mxu0
      %v1892 = vadd.f32 0.0, %v1891
      %1893 = vmatmul.f32.gmra.mxu0 %v663
      %v1894 = vpop.f32.mrf.mxu0
      %v1895 = vadd.f32 0.0, %v1894
      %1896 = vdwg.mxu0
      %1897 = vmatpush.msra.mxu0 0.0
      %1898 = vmatpush.msra.mxu0 0.0
      %1899 = vmatpush.msra.mxu0 0.0
      %1900 = vmatpush.msra.mxu0 0.0
      %1901 = vmatpush.msra.mxu0 0.0
      %1902 = vmatpush.msra.mxu0 0.0
      %1903 = vmatpush.msra.mxu0 0.0
      %1904 = vmatpush.msra.mxu0 0.0
      %1905 = vmatpush.msra.mxu0 0.0
      %1906 = vmatpush.msra.mxu0 0.0
      %1907 = vmatpush.msra.mxu0 0.0
      %1908 = vmatpush.msra.mxu0 0.0
      %1909 = vmatpush.msra.mxu0 0.0
      %1910 = vmatpush.msra.mxu0 0.0
      %1911 = vmatpush.msra.mxu0 %v391
      %1912 = vmatpush.msra.mxu0 %v378
      %1913 = vmatmul.f32.gmra.mxu0 %v660
      %v1914 = vpop.f32.mrf.mxu0
      %v1915 = vadd.f32 0.0, %v1914
      %1916 = vmatmul.f32.gmra.mxu0 %v663
      %v1917 = vpop.f32.mrf.mxu0
      %v1918 = vadd.f32 0.0, %v1917
      %1919 = vdwg.mxu0
      %v1920 = vadd.f32 %v1870, %v1892
      %v1921 = vadd.f32 %v1871, %v1915
      %v1922 = vadd.f32 %v1872, %v1895
      %v1923 = vadd.f32 %v1873, %v1918
      %1924 = vmatpush.msra.mxu0 0.0
      %1925 = vmatpush.msra.mxu0 0.0
      %1926 = vmatpush.msra.mxu0 0.0
      %1927 = vmatpush.msra.mxu0 0.0
      %1928 = vmatpush.msra.mxu0 0.0
      %1929 = vmatpush.msra.mxu0 0.0
      %1930 = vmatpush.msra.mxu0 0.0
      %1931 = vmatpush.msra.mxu0 0.0
      %1932 = vmatpush.msra.mxu0 0.0
      %1933 = vmatpush.msra.mxu0 0.0
      %1934 = vmatpush.msra.mxu0 0.0
      %1935 = vmatpush.msra.mxu0 0.0
      %1936 = vmatpush.msra.mxu0 0.0
      %1937 = vmatpush.msra.mxu0 0.0
      %1938 = vmatpush.msra.mxu0 %v458
      %1939 = vmatpush.msra.mxu0 %v447
      %1940 = vmatmul.f32.gmra.mxu0 %v729
      %v1941 = vpop.f32.mrf.mxu0
      %v1942 = vadd.f32 0.0, %v1941
      %1943 = vmatmul.f32.gmra.mxu0 %v732
      %v1944 = vpop.f32.mrf.mxu0
      %v1945 = vadd.f32 0.0, %v1944
      %1946 = vdwg.mxu0
      %1947 = vmatpush.msra.mxu0 0.0
      %1948 = vmatpush.msra.mxu0 0.0
      %1949 = vmatpush.msra.mxu0 0.0
      %1950 = vmatpush.msra.mxu0 0.0
      %1951 = vmatpush.msra.mxu0 0.0
      %1952 = vmatpush.msra.mxu0 0.0
      %1953 = vmatpush.msra.mxu0 0.0
      %1954 = vmatpush.msra.mxu0 0.0
      %1955 = vmatpush.msra.mxu0 0.0
      %1956 = vmatpush.msra.mxu0 0.0
      %1957 = vmatpush.msra.mxu0 0.0
      %1958 = vmatpush.msra.mxu0 0.0
      %1959 = vmatpush.msra.mxu0 0.0
      %1960 = vmatpush.msra.mxu0 0.0
      %1961 = vmatpush.msra.mxu0 %v461
      %1962 = vmatpush.msra.mxu0 %v448
      %1963 = vmatmul.f32.gmra.mxu0 %v729
      %v1964 = vpop.f32.mrf.mxu0
      %v1965 = vadd.f32 0.0, %v1964
      %1966 = vmatmul.f32.gmra.mxu0 %v732
      %v1967 = vpop.f32.mrf.mxu0
      %v1968 = vadd.f32 0.0, %v1967
      %1969 = vdwg.mxu0
      %v1970 = vadd.f32 %v1920, %v1942
      %v1971 = vadd.f32 %v1921, %v1965
      %v1972 = vadd.f32 %v1922, %v1945
      %v1973 = vadd.f32 %v1923, %v1968
      %1974 = vmatpush.msra.mxu0 0.0
      %1975 = vmatpush.msra.mxu0 0.0
      %1976 = vmatpush.msra.mxu0 0.0
      %1977 = vmatpush.msra.mxu0 0.0
      %1978 = vmatpush.msra.mxu0 0.0
      %1979 = vmatpush.msra.mxu0 0.0
      %1980 = vmatpush.msra.mxu0 0.0
      %1981 = vmatpush.msra.mxu0 0.0
      %1982 = vmatpush.msra.mxu0 0.0
      %1983 = vmatpush.msra.mxu0 0.0
      %1984 = vmatpush.msra.mxu0 0.0
      %1985 = vmatpush.msra.mxu0 0.0
      %1986 = vmatpush.msra.mxu0 0.0
      %1987 = vmatpush.msra.mxu0 0.0
      %1988 = vmatpush.msra.mxu0 %v528
      %1989 = vmatpush.msra.mxu0 %v517
      %1990 = vmatmul.f32.gmra.mxu0 %v1203
      %v1991 = vpop.f32.mrf.mxu0
      %v1992 = vadd.f32 0.0, %v1991
      %1993 = vmatmul.f32.gmra.mxu0 %v1206
      %v1994 = vpop.f32.mrf.mxu0
      %v1995 = vadd.f32 0.0, %v1994
      %1996 = vdwg.mxu0
      %1997 = vmatpush.msra.mxu0 0.0
      %1998 = vmatpush.msra.mxu0 0.0
      %1999 = vmatpush.msra.mxu0 0.0
      %2000 = vmatpush.msra.mxu0 0.0
      %2001 = vmatpush.msra.mxu0 0.0
      %2002 = vmatpush.msra.mxu0 0.0
      %2003 = vmatpush.msra.mxu0 0.0
      %2004 = vmatpush.msra.mxu0 0.0
      %2005 = vmatpush.msra.mxu0 0.0
      %2006 = vmatpush.msra.mxu0 0.0
      %2007 = vmatpush.msra.mxu0 0.0
      %2008 = vmatpush.msra.mxu0 0.0
      %2009 = vmatpush.msra.mxu0 0.0
      %2010 = vmatpush.msra.mxu0 0.0
      %2011 = vmatpush.msra.mxu0 %v531
      %2012 = vmatpush.msra.mxu0 %v518
      %2013 = vmatmul.f32.gmra.mxu0 %v1203
      %v2014 = vpop.f32.mrf.mxu0
      %v2015 = vadd.f32 0.0, %v2014
      %2016 = vmatmul.f32.gmra.mxu0 %v1206
      %v2017 = vpop.f32.mrf.mxu0
      %v2018 = vadd.f32 0.0, %v2017
      %2019 = vdwg.mxu0
      %v2020 = vadd.f32 %v1970, %v1992
      %v2021 = vadd.f32 %v1971, %v2015
      %v2022 = vadd.f32 %v1972, %v1995
      %v2023 = vadd.f32 %v1973, %v2018
      %2024 = vmatpush.msra.mxu0 0.0
      %2025 = vmatpush.msra.mxu0 0.0
      %2026 = vmatpush.msra.mxu0 0.0
      %2027 = vmatpush.msra.mxu0 0.0
      %2028 = vmatpush.msra.mxu0 0.0
      %2029 = vmatpush.msra.mxu0 0.0
      %2030 = vmatpush.msra.mxu0 0.0
      %2031 = vmatpush.msra.mxu0 0.0
      %2032 = vmatpush.msra.mxu0 0.0
      %2033 = vmatpush.msra.mxu0 0.0
      %2034 = vmatpush.msra.mxu0 0.0
      %2035 = vmatpush.msra.mxu0 0.0
      %2036 = vmatpush.msra.mxu0 0.0
      %2037 = vmatpush.msra.mxu0 0.0
      %2038 = vmatpush.msra.mxu0 %v597
      %2039 = vmatpush.msra.mxu0 %v586
      %2040 = vmatmul.f32.gmra.mxu0 %v1615
      %v2041 = vpop.f32.mrf.mxu0
      %v2042 = vadd.f32 0.0, %v2041
      %2043 = vmatmul.f32.gmra.mxu0 %v1618
      %v2044 = vpop.f32.mrf.mxu0
      %v2045 = vadd.f32 0.0, %v2044
      %2046 = vdwg.mxu0
      %2047 = vmatpush.msra.mxu0 0.0
      %2048 = vmatpush.msra.mxu0 0.0
      %2049 = vmatpush.msra.mxu0 0.0
      %2050 = vmatpush.msra.mxu0 0.0
      %2051 = vmatpush.msra.mxu0 0.0
      %2052 = vmatpush.msra.mxu0 0.0
      %2053 = vmatpush.msra.mxu0 0.0
      %2054 = vmatpush.msra.mxu0 0.0
      %2055 = vmatpush.msra.mxu0 0.0
      %2056 = vmatpush.msra.mxu0 0.0
      %2057 = vmatpush.msra.mxu0 0.0
      %2058 = vmatpush.msra.mxu0 0.0
      %2059 = vmatpush.msra.mxu0 0.0
      %2060 = vmatpush.msra.mxu0 0.0
      %2061 = vmatpush.msra.mxu0 %v600
      %2062 = vmatpush.msra.mxu0 %v587
      %2063 = vmatmul.f32.gmra.mxu0 %v1615
      %v2064 = vpop.f32.mrf.mxu0
      %v2065 = vadd.f32 0.0, %v2064
      %2066 = vmatmul.f32.gmra.mxu0 %v1618
      %v2067 = vpop.f32.mrf.mxu0
      %v2068 = vadd.f32 0.0, %v2067
      %2069 = vdwg.mxu0
      %v2070 = vadd.f32 %v2020, %v2042
      %v2071 = vadd.f32 %v2021, %v2065
      %v2072 = vadd.f32 %v2022, %v2045
      %v2073 = vadd.f32 %v2023, %v2068
      %2074 = vmatpush.msra.mxu0 0.0
      %2075 = vmatpush.msra.mxu0 0.0
      %2076 = vmatpush.msra.mxu0 0.0
      %2077 = vmatpush.msra.mxu0 0.0
      %2078 = vmatpush.msra.mxu0 0.0
      %2079 = vmatpush.msra.mxu0 0.0
      %2080 = vmatpush.msra.mxu0 0.0
      %2081 = vmatpush.msra.mxu0 0.0
      %2082 = vmatpush.msra.mxu0 0.0
      %2083 = vmatpush.msra.mxu0 0.0
      %2084 = vmatpush.msra.mxu0 0.0
      %2085 = vmatpush.msra.mxu0 0.0
      %2086 = vmatpush.msra.mxu0 0.0
      %2087 = vmatpush.msra.mxu0 0.0
      %2088 = vmatpush.msra.mxu0 %v666
      %2089 = vmatpush.msra.mxu0 %v655
      %2090 = vmatmul.f32.gmra.mxu0 %v1673
      %v2091 = vpop.f32.mrf.mxu0
      %v2092 = vadd.f32 0.0, %v2091
      %2093 = vmatmul.f32.gmra.mxu0 %v1676
      %v2094 = vpop.f32.mrf.mxu0
      %v2095 = vadd.f32 0.0, %v2094
      %2096 = vdwg.mxu0
      %2097 = vmatpush.msra.mxu0 0.0
      %2098 = vmatpush.msra.mxu0 0.0
      %2099 = vmatpush.msra.mxu0 0.0
      %2100 = vmatpush.msra.mxu0 0.0
      %2101 = vmatpush.msra.mxu0 0.0
      %2102 = vmatpush.msra.mxu0 0.0
      %2103 = vmatpush.msra.mxu0 0.0
      %2104 = vmatpush.msra.mxu0 0.0
      %2105 = vmatpush.msra.mxu0 0.0
      %2106 = vmatpush.msra.mxu0 0.0
      %2107 = vmatpush.msra.mxu0 0.0
      %2108 = vmatpush.msra.mxu0 0.0
      %2109 = vmatpush.msra.mxu0 0.0
      %2110 = vmatpush.msra.mxu0 0.0
      %2111 = vmatpush.msra.mxu0 %v669
      %2112 = vmatpush.msra.mxu0 %v656
      %2113 = vmatmul.f32.gmra.mxu0 %v1673
      %v2114 = vpop.f32.mrf.mxu0
      %v2115 = vadd.f32 0.0, %v2114
      %2116 = vmatmul.f32.gmra.mxu0 %v1676
      %v2117 = vpop.f32.mrf.mxu0
      %v2118 = vadd.f32 0.0, %v2117
      %2119 = vdwg.mxu0
      %v2120 = vadd.f32 %v2070, %v2092
      %v2121 = vadd.f32 %v2071, %v2115
      %v2122 = vadd.f32 %v2072, %v2095
      %v2123 = vadd.f32 %v2073, %v2118
      %v2124 = vld [vmem:[%s1041 + $0x1] sm:$0xff]
      %v2125 = vld [vmem:[%s1041 + $0x9] sm:$0x3f]
      %v2127 = vsel %vm185, %v2124, 0
      %v2130 = vsel %vm185, %v2125, 0
      %2132 = vmatpush.msra.mxu0 0.0
      %2133 = vmatpush.msra.mxu0 0.0
      %2134 = vmatpush.msra.mxu0 0.0
      %2135 = vmatpush.msra.mxu0 0.0
      %2136 = vmatpush.msra.mxu0 0.0
      %2137 = vmatpush.msra.mxu0 0.0
      %2138 = vmatpush.msra.mxu0 0.0
      %2139 = vmatpush.msra.mxu0 0.0
      %2140 = vmatpush.msra.mxu0 0.0
      %2141 = vmatpush.msra.mxu0 0.0
      %2142 = vmatpush.msra.mxu0 0.0
      %2143 = vmatpush.msra.mxu0 0.0
      %2144 = vmatpush.msra.mxu0 0.0
      %2145 = vmatpush.msra.mxu0 0.0
      %2146 = vmatpush.msra.mxu0 %v735
      %2147 = vmatpush.msra.mxu0 %v724
      %2148 = vmatmul.f32.gmra.mxu0 %v2127
      %v2149 = vpop.f32.mrf.mxu0
      %v2150 = vadd.f32 0.0, %v2149
      %2151 = vmatmul.f32.gmra.mxu0 %v2130
      %v2152 = vpop.f32.mrf.mxu0
      %v2153 = vadd.f32 0.0, %v2152
      %2154 = vdwg.mxu0
      %2155 = vmatpush.msra.mxu0 0.0
      %2156 = vmatpush.msra.mxu0 0.0
      %2157 = vmatpush.msra.mxu0 0.0
      %2158 = vmatpush.msra.mxu0 0.0
      %2159 = vmatpush.msra.mxu0 0.0
      %2160 = vmatpush.msra.mxu0 0.0
      %2161 = vmatpush.msra.mxu0 0.0
      %2162 = vmatpush.msra.mxu0 0.0
      %2163 = vmatpush.msra.mxu0 0.0
      %2164 = vmatpush.msra.mxu0 0.0
      %2165 = vmatpush.msra.mxu0 0.0
      %2166 = vmatpush.msra.mxu0 0.0
      %2167 = vmatpush.msra.mxu0 0.0
      %2168 = vmatpush.msra.mxu0 0.0
      %2169 = vmatpush.msra.mxu0 %v738
      %2170 = vmatpush.msra.mxu0 %v725
      %2171 = vmatmul.f32.gmra.mxu0 %v2127
      %v2172 = vpop.f32.mrf.mxu0
      %v2173 = vadd.f32 0.0, %v2172
      %2174 = vmatmul.f32.gmra.mxu0 %v2130
      %v2175 = vpop.f32.mrf.mxu0
      %v2176 = vadd.f32 0.0, %v2175
      %2177 = vdwg.mxu0
      %v2178 = vadd.f32 %v2120, %v2150
      %v2179 = vadd.f32 %v2121, %v2173
      %v2180 = vadd.f32 %v2122, %v2153
      %v2181 = vadd.f32 %v2123, %v2176
      %v2182 = vmax.f32 %v1728, %v2178
      %v2183 = vmax.f32 %v1729, %v2179
      %v2184 = vmax.f32 %v1730, %v2180
      %v2185 = vmax.f32 %v1731, %v2181
      %v2186 = vld [vmem:[%s2] sm:$0x3]
      %v2188 = vperm.slane %v2186, 0
      %v2189 = vperm.slane %v2186, 1
      %v2192 = vadd.f32 %v2182, %v2188
      %v2193 = vadd.f32 %v2183, %v2189
      %v2194 = vadd.f32 %v2184, %v2188
      %v2195 = vadd.f32 %v2185, %v2189
      %v2196 = vmax.f32 %v2192, 0.0
      %v2197 = vmax.f32 %v2193, 0.0
      %v2198 = vmax.f32 %v2194, 0.0
      %v2199 = vmax.f32 %v2195, 0.0
      %2200 = vst [vmem:[%s170] sm:$0xff] %v2196
      %vm2201 = vcmask 785408
      %2202 = vst.msk [vmem:[%s170 + $0x8] sm:$0xff] %vm2201, %v2197
      %2203 = vst [vmem:[%s170 + $0x10] sm:$0x3f] %v2198
      %vm2204 = vcmask 783360
      %2205 = vst.msk [vmem:[%s170 + $0x18] sm:$0x3f] %vm2204, %v2199
      %p2206 = scmp.lt.s32.totalorder %s14, 1
      %s2207 = scalar_select %p2206, %s14, 1
      %s2208 = smul.addr %s2207, 4
      %s2209 = smul.addr %s2208, 8
      %s2210 = scalar_lea.vmem %s3, %s2209
      // Predicated region
      $region33: #{cnn_forward.3} parent=31 // pred_check
        %p2211 = pneg %p100
      $region34: #{cnn_forward.3} parent=31 // pred_check_branch
        %2213 = sbr.rel (%p2211) target = $region36
      $region35: #{cnn_forward.3} parent=31 // pred_region
        _
      $region36: #{cnn_forward.3} parent=31 // pred_fallthru
        _
    $region32: #{cnn_forward.3} parent=5 // pred_fallthru
      _
    %p2214 = scmp.le.s32.totalorder 2, %s9
    // Predicated region
    $region37: #{cnn_forward.3} parent=5 // pred_check
      %p2215 = pneg %p2214
    $region38: #{cnn_forward.3} parent=5 // pred_check_branch
      %2217 = sbr.rel (%p2215) target = $region40
    $region39: #{cnn_forward.3} parent=5 // pred_region
      %s2218 = ssub.s32 %s9, 2
      // Predicated region
      $region41: #{cnn_forward.3} parent=39 // pred_check
        %p2219 = pneg %p106
      $region42: #{cnn_forward.3} parent=39 // pred_check_branch
        %2221 = sbr.rel (%p2219) target = $region44
      $region43: #{cnn_forward.3} parent=39 // pred_region
        %p2222 = scmp.lt.s32.totalorder %s15, 1
        %s2223 = scalar_select %p2222, %s15, 1
        %s2224 = smul.addr %s2223, 4
        %s2225 = smul.addr %s2224, 8
        %s2226 = scalar_lea.vmem %s3, %s2225
      $region44: #{cnn_forward.3} parent=39 // pred_fallthru
        _
    $region40: #{cnn_forward.3} parent=5 // pred_fallthru
      _
  $region6: #{cnn_forward.3} parent=0 // loop_footer
    %s13 = sadd.s32 1, %s9
  $region7: #{cnn_forward.3} parent=0 // loop_footer_branch
    %8 = sbr.rel target = $region3
  $region8: #{cnn_forward.3} parent=0 // loop_exit
    _

// kernel: cnn_forward.4
$region0: #{cnn_forward.4}
  #allocation0 [shape = 'u32[]', space=smem, size = 0x4, offset = 0x4, fixed_abs, tag = 'smem constant byte address 0x4 - core index']
  #allocation1 [shape = 'u32[72,128]{1,0:T(1,128)}', space=vmem, size = 0x9000, scoped, tag = 'internal scratch']
  %s0 = inlined_call_operand.vmem [shape: f32[2,8,8,112], index: 0, kind: input, shape index: {}]
  %s1 = inlined_call_operand.vmem [shape: f32[9,112,224], index: 1, kind: input, shape index: {}]
  %s2 = inlined_call_operand.vmem [shape: f32[1,224], index: 2, kind: input, shape index: {}]
  %s3 = inlined_call_operand.vmem [shape: f32[2,7,224], index: 3, kind: output, shape index: {}]
  %s4 = sld [smem:[#allocation0]]
  $region45: #{cnn_forward.4} parent=0
    _
  %s6 = ssub.s32 1, %s4
  %s7 = scalar_select 0, %s6, %s4
  loop: start=0, step=1, limit=4
  $region2: #{cnn_forward.4} parent=0 // loop_pre_header
    _
  $region3: #{cnn_forward.4} parent=0 // loop_header
    %s9 = sphi 0, %s13
    %p10 = scmp.ge.s32.totalorder %s9, 4
    %s19 = sphi 0, %s21
    %s22 = sphi 0, %s19
    %s23 = sphi 0, %s22
    %s39 = sphi 0, %s23
    %s43 = sphi 0, %s43
    %s45 = sphi 0, %s43
    %s46 = sphi 0, %s45
    %s60 = sphi 0, %s46
    %s64 = sphi 0, %s64
    %s66 = sphi 0, %s64
    %s67 = sphi 0, %s66
    %s81 = sphi 0, %s67
    %s87 = sphi 0, %s89
    %s90 = sphi 0, %s87
    %s91 = sphi 0, %s90
    %s107 = sphi 0, %s91
  $region4: #{cnn_forward.4} parent=0 // loop_header_branch
    %12 = sbr.rel (%p10) target = $region8
  $region5: #{cnn_forward.4} parent=0 // loop_body
    %s14 = ssub.s32 %s9, 1
    %s15 = ssub.s32 %s9, 2
    %s16 = sadd.s32 %s9, 1
    %s17 = ssub.s32 %s9, %s16
    %p18 = scmp.eq.s32.totalorder %s17, 0
    %s20 = sadd.s32 %s19, 1
    %s21 = scalar_select %p18, %s19, %s20
    %p24 = pneg %p18
    %p25 = scmp.eq.s32.totalorder %s9, 1
    %p26 = por %p24, %p25
    %p27 = scmp.ne.s32.totalorder %s19, %s22
    %p28 = scmp.eq.s32.totalorder %s9, 0
    %p29 = por %p27, %p28
    %p30 = scmp.ne.s32.totalorder %s19, %s22
    %p31 = scmp.eq.s32.totalorder %s14, 1
    %p32 = por %p30, %p31
    %p33 = scmp.ne.s32.totalorder %s22, %s23
    %p34 = scmp.eq.s32.totalorder %s14, 0
    %p35 = por %p33, %p34
    %p36 = scmp.ne.s32.totalorder %s22, %s23
    %p37 = scmp.eq.s32.totalorder %s15, 1
    %p38 = por %p36, %p37
    %p40 = scmp.ne.s32.totalorder %s23, %s39
    %p41 = scmp.eq.s32.totalorder %s15, 0
    %p42 = por %p40, %p41
    %s44 = sadd.s32 %s43, 1
    %p47 = scmp.eq.s32.totalorder %s9, 1
    %p48 = scmp.ne.s32.totalorder %s43, %s45
    %p49 = scmp.eq.s32.totalorder %s9, 0
    %p50 = por %p48, %p49
    %p51 = scmp.ne.s32.totalorder %s43, %s45
    %p52 = scmp.eq.s32.totalorder %s14, 1
    %p53 = por %p51, %p52
    %p54 = scmp.ne.s32.totalorder %s45, %s46
    %p55 = scmp.eq.s32.totalorder %s14, 0
    %p56 = por %p54, %p55
    %p57 = scmp.ne.s32.totalorder %s45, %s46
    %p58 = scmp.eq.s32.totalorder %s15, 1
    %p59 = por %p57, %p58
    %p61 = scmp.ne.s32.totalorder %s46, %s60
    %p62 = scmp.eq.s32.totalorder %s15, 0
    %p63 = por %p61, %p62
    %s65 = sadd.s32 %s64, 1
    %p68 = scmp.eq.s32.totalorder %s9, 1
    %p69 = scmp.ne.s32.totalorder %s64, %s66
    %p70 = scmp.eq.s32.totalorder %s9, 0
    %p71 = por %p69, %p70
    %p72 = scmp.ne.s32.totalorder %s64, %s66
    %p73 = scmp.eq.s32.totalorder %s14, 1
    %p74 = por %p72, %p73
    %p75 = scmp.ne.s32.totalorder %s66, %s67
    %p76 = scmp.eq.s32.totalorder %s14, 0
    %p77 = por %p75, %p76
    %p78 = scmp.ne.s32.totalorder %s66, %s67
    %p79 = scmp.eq.s32.totalorder %s15, 1
    %p80 = por %p78, %p79
    %p82 = scmp.ne.s32.totalorder %s67, %s81
    %p83 = scmp.eq.s32.totalorder %s15, 0
    %p84 = por %p82, %p83
    %s85 = ssub.s32 %s9, %s16
    %p86 = scmp.eq.s32.totalorder %s85, 0
    %s88 = sadd.s32 %s87, 1
    %s89 = scalar_select %p86, %s87, %s88
    %p92 = pneg %p86
    %p93 = scmp.eq.s32.totalorder %s9, 1
    %p94 = por %p92, %p93
    %p95 = scmp.ne.s32.totalorder %s87, %s90
    %p96 = scmp.eq.s32.totalorder %s9, 0
    %p97 = por %p95, %p96
    %p98 = scmp.ne.s32.totalorder %s87, %s90
    %p99 = scmp.eq.s32.totalorder %s14, 1
    %p100 = por %p98, %p99
    %p101 = scmp.ne.s32.totalorder %s90, %s91
    %p102 = scmp.eq.s32.totalorder %s14, 0
    %p103 = por %p101, %p102
    %p104 = scmp.ne.s32.totalorder %s90, %s91
    %p105 = scmp.eq.s32.totalorder %s15, 1
    %p106 = por %p104, %p105
    %p108 = scmp.ne.s32.totalorder %s91, %s107
    %p109 = scmp.eq.s32.totalorder %s15, 0
    %p110 = por %p108, %p109
    %p111 = scmp.le.s32.totalorder 1, %s9
    %p112 = scmp.lt.s32.totalorder %s9, 3
    %p113 = pnand %p111, %p112
    %p114 = pneg %p113
    // Predicated region
    $region9: #{cnn_forward.4} parent=5 // pred_check
      _
    $region10: #{cnn_forward.4} parent=5 // pred_check_branch
      %116 = sbr.rel (%p113) target = $region12
    $region11: #{cnn_forward.4} parent=5 // pred_region
      %s117 = ssub.s32 %s9, 1
      // Predicated region
      $region13: #{cnn_forward.4} parent=11 // pred_check
        %p118 = pneg %p56
      $region14: #{cnn_forward.4} parent=11 // pred_check_branch
        %120 = sbr.rel (%p118) target = $region16
      $region15: #{cnn_forward.4} parent=11 // pred_region
        _
      $region16: #{cnn_forward.4} parent=11 // pred_fallthru
        _
      // Predicated region
      $region17: #{cnn_forward.4} parent=11 // pred_check
        %p121 = pneg %p77
      $region18: #{cnn_forward.4} parent=11 // pred_check_branch
        %123 = sbr.rel (%p121) target = $region20
      $region19: #{cnn_forward.4} parent=11 // pred_region
        _
      $region20: #{cnn_forward.4} parent=11 // pred_fallthru
        _
    $region12: #{cnn_forward.4} parent=5 // pred_fallthru
      _
    %p124 = scmp.lt.s32.totalorder %s9, 2
    // Predicated region
    $region21: #{cnn_forward.4} parent=5 // pred_check
      %p125 = pneg %p124
    $region22: #{cnn_forward.4} parent=5 // pred_check_branch
      %127 = sbr.rel (%p125) target = $region24
    $region23: #{cnn_forward.4} parent=5 // pred_region
      // Predicated region
      $region25: #{cnn_forward.4} parent=23 // pred_check
        %p128 = pneg %p29
      $region26: #{cnn_forward.4} parent=23 // pred_check_branch
        %130 = sbr.rel (%p128) target = $region28
      $region27: #{cnn_forward.4} parent=23 // pred_region
        %p131 = scmp.lt.s32.totalorder %s9, 1
        %s132 = scalar_select %p131, %s9, 1
        %s133 = smul.addr %s132, 8
        %s134 = smul.addr %s133, 8
        %s135 = scalar_lea.vmem %s0, %s134
      $region28: #{cnn_forward.4} parent=23 // pred_fallthru
        _
    $region24: #{cnn_forward.4} parent=5 // pred_fallthru
      _
    %p136 = scmp.le.s32.totalorder 1, %s9
    %p137 = scmp.lt.s32.totalorder %s9, 3
    %p138 = pnand %p136, %p137
    %p139 = pneg %p138
    // Predicated region
    $region29: #{cnn_forward.4} parent=5 // pred_check
      _
    $region30: #{cnn_forward.4} parent=5 // pred_check_branch
      %141 = sbr.rel (%p138) target = $region32
    $region31: #{cnn_forward.4} parent=5 // pred_region
      %s142 = ssub.s32 %s9, 1
      %p143 = scmp.lt.s32.totalorder %s14, 1
      %s144 = scalar_select %p143, %s14, 1
      %s145 = smul.addr %s144, 8
      %s146 = smul.addr %s145, 8
      %s147 = scalar_lea.vmem %s0, %s146
      %p148 = pneg %p35
      %p149 = pneg %p32
      %p150 = pneg %p56
      %p151 = pneg %p53
      %p152 = pneg %p77
      %p153 = pneg %p74
      %p154 = pneg %p103
      %p155 = pneg %p100
      %p156 = scmp.lt.s32.totalorder %s14, 1
      %s157 = scalar_select %p156, %s14, 1
      %s158 = smul.addr %s157, 2
      %s159 = smul.addr %s158, 8
      %s160 = scalar_lea.vmem %s3, %s159
      %p161 = scmp.lt.s32.totalorder %s14, 1
      %s162 = scalar_select %p161, %s14, 1
      %s163 = smul.addr %s162, 8
      %s164 = smul.addr %s163, 8
      %s165 = scalar_lea.vmem %s0, %s164
      %p166 = scmp.lt.s32.totalorder %s14, 1
      %s167 = scalar_select %p166, %s14, 1
      %s168 = smul.addr %s167, 2
      %s169 = smul.addr %s168, 8
      %s170 = scalar_lea.vmem %s3, %s169
      %v171 = vld [vmem:[%s165] sm:$0x7f]
      %v172 = vld [vmem:[%s1] sm:$0xff]
      %v173 = vld [vmem:[%s1 + $0x8] sm:$0xff]
      %v174 = vld [vmem:[%s1 + $0x10] sm:$0xff]
      %v175 = vld [vmem:[%s1 + $0x18] sm:$0xff]
      %v176 = vld [vmem:[%s1 + $0x20] sm:$0xff]
      %v177 = vld [vmem:[%s1 + $0x28] sm:$0xff]
      %v178 = vld [vmem:[%s1 + $0x30] sm:$0xff]
      %v179 = vld [vmem:[%s1 + $0x38] sm:$0xff]
      %v180 = vld [vmem:[%s1 + $0x40] sm:$0xff]
      %v181 = vld [vmem:[%s1 + $0x48] sm:$0xff]
      %v182 = vld [vmem:[%s1 + $0x50] sm:$0xff]
      %v183 = vld [vmem:[%s1 + $0x58] sm:$0xff]
      %v184 = vld [vmem:[%s1 + $0x60] sm:$0xff]
      %v185 = vld [vmem:[%s1 + $0x68] sm:$0xff]
      %v186 = vld [vmem:[%s1 + $0x70] sm:$0xff]
      %v187 = vld [vmem:[%s1 + $0x78] sm:$0xff]
      %v188 = vld [vmem:[%s1 + $0x80] sm:$0xff]
      %v189 = vld [vmem:[%s1 + $0x88] sm:$0xff]
      %v190 = vld [vmem:[%s1 + $0x90] sm:$0xff]
      %v191 = vld [vmem:[%s1 + $0x98] sm:$0xff]
      %v192 = vld [vmem:[%s1 + $0xa0] sm:$0xff]
      %v193 = vld [vmem:[%s1 + $0xa8] sm:$0xff]
      %v194 = vld [vmem:[%s1 + $0xb0] sm:$0xff]
      %v195 = vld [vmem:[%s1 + $0xb8] sm:$0xff]
      %v196 = vld [vmem:[%s1 + $0xc0] sm:$0xff]
      %v197 = vld [vmem:[%s1 + $0xc8] sm:$0xff]
      %v198 = vld [vmem:[%s1 + $0xd0] sm:$0xff]
      %v199 = vld [vmem:[%s1 + $0xd8] sm:$0xff]
      %s200 = scalar_lea.vmem %s165, 8
      %v201 = vld [vmem:[%s200] sm:$0x7f]
      %s202 = scalar_lea.vmem %s1, 224
      %v203 = vld [vmem:[%s202] sm:$0xff]
      %v204 = vld [vmem:[%s202 + $0x8] sm:$0xff]
      %v205 = vld [vmem:[%s202 + $0x10] sm:$0xff]
      %v206 = vld [vmem:[%s202 + $0x18] sm:$0xff]
      %v207 = vld [vmem:[%s202 + $0x20] sm:$0xff]
      %v208 = vld [vmem:[%s202 + $0x28] sm:$0xff]
      %v209 = vld [vmem:[%s202 + $0x30] sm:$0xff]
      %v210 = vld [vmem:[%s202 + $0x38] sm:$0xff]
      %v211 = vld [vmem:[%s202 + $0x40] sm:$0xff]
      %v212 = vld [vmem:[%s202 + $0x48] sm:$0xff]
      %v213 = vld [vmem:[%s202 + $0x50] sm:$0xff]
      %v214 = vld [vmem:[%s202 + $0x58] sm:$0xff]
      %v215 = vld [vmem:[%s202 + $0x60] sm:$0xff]
      %v216 = vld [vmem:[%s202 + $0x68] sm:$0xff]
      %v217 = vld [vmem:[%s202 + $0x70] sm:$0xff]
      %v218 = vld [vmem:[%s202 + $0x78] sm:$0xff]
      %v219 = vld [vmem:[%s202 + $0x80] sm:$0xff]
      %v220 = vld [vmem:[%s202 + $0x88] sm:$0xff]
      %v221 = vld [vmem:[%s202 + $0x90] sm:$0xff]
      %v222 = vld [vmem:[%s202 + $0x98] sm:$0xff]
      %v223 = vld [vmem:[%s202 + $0xa0] sm:$0xff]
      %v224 = vld [vmem:[%s202 + $0xa8] sm:$0xff]
      %v225 = vld [vmem:[%s202 + $0xb0] sm:$0xff]
      %v226 = vld [vmem:[%s202 + $0xb8] sm:$0xff]
      %v227 = vld [vmem:[%s202 + $0xc0] sm:$0xff]
      %v228 = vld [vmem:[%s202 + $0xc8] sm:$0xff]
      %v229 = vld [vmem:[%s202 + $0xd0] sm:$0xff]
      %v230 = vld [vmem:[%s202 + $0xd8] sm:$0xff]
      %vm231 = vcmask 916480
      %v233 = vsel %vm231, %v201, 0
      %235 = vmatpush.msra.mxu0 0.0
      %236 = vmatpush.msra.mxu0 0.0
      %237 = vmatpush.msra.mxu0 %v229
      %238 = vmatpush.msra.mxu0 %v227
      %239 = vmatpush.msra.mxu0 %v225
      %240 = vmatpush.msra.mxu0 %v223
      %241 = vmatpush.msra.mxu0 %v221
      %242 = vmatpush.msra.mxu0 %v219
      %243 = vmatpush.msra.mxu0 %v217
      %244 = vmatpush.msra.mxu0 %v215
      %245 = vmatpush.msra.mxu0 %v213
      %246 = vmatpush.msra.mxu0 %v211
      %247 = vmatpush.msra.mxu0 %v209
      %248 = vmatpush.msra.mxu0 %v207
      %249 = vmatpush.msra.mxu0 %v205
      %250 = vmatpush.msra.mxu0 %v203
      %251 = vmatmul.f32.gmra.mxu0 %v233
      %v252 = vpop.f32.mrf.mxu0
      %v253 = vadd.f32 0.0, %v252
      %254 = vdwg.mxu0
      %255 = vmatpush.msra.mxu0 0.0
      %256 = vmatpush.msra.mxu0 0.0
      %257 = vmatpush.msra.mxu0 %v230
      %258 = vmatpush.msra.mxu0 %v228
      %259 = vmatpush.msra.mxu0 %v226
      %260 = vmatpush.msra.mxu0 %v224
      %261 = vmatpush.msra.mxu0 %v222
      %262 = vmatpush.msra.mxu0 %v220
      %263 = vmatpush.msra.mxu0 %v218
      %264 = vmatpush.msra.mxu0 %v216
      %265 = vmatpush.msra.mxu0 %v214
      %266 = vmatpush.msra.mxu0 %v212
      %267 = vmatpush.msra.mxu0 %v210
      %268 = vmatpush.msra.mxu0 %v208
      %269 = vmatpush.msra.mxu0 %v206
      %270 = vmatpush.msra.mxu0 %v204
      %271 = vmatmul.f32.gmra.mxu0 %v233
      %v272 = vpop.f32.mrf.mxu0
      %v273 = vadd.f32 0.0, %v272
      %274 = vdwg.mxu0
      %v276 = vsel %vm231, %v171, 0
      %278 = vmatpush.msra.mxu0 0.0
      %279 = vmatpush.msra.mxu0 0.0
      %280 = vmatpush.msra.mxu0 %v198
      %281 = vmatpush.msra.mxu0 %v196
      %282 = vmatpush.msra.mxu0 %v194
      %283 = vmatpush.msra.mxu0 %v192
      %284 = vmatpush.msra.mxu0 %v190
      %285 = vmatpush.msra.mxu0 %v188
      %286 = vmatpush.msra.mxu0 %v186
      %287 = vmatpush.msra.mxu0 %v184
      %288 = vmatpush.msra.mxu0 %v182
      %289 = vmatpush.msra.mxu0 %v180
      %290 = vmatpush.msra.mxu0 %v178
      %291 = vmatpush.msra.mxu0 %v176
      %292 = vmatpush.msra.mxu0 %v174
      %293 = vmatpush.msra.mxu0 %v172
      %294 = vmatmul.f32.gmra.mxu0 %v276
      %v295 = vpop.f32.mrf.mxu0
      %v296 = vadd.f32 %v253, %v295
      %297 = vdwg.mxu0
      %298 = vmatpush.msra.mxu0 0.0
      %299 = vmatpush.msra.mxu0 0.0
      %300 = vmatpush.msra.mxu0 %v199
      %301 = vmatpush.msra.mxu0 %v197
      %302 = vmatpush.msra.mxu0 %v195
      %303 = vmatpush.msra.mxu0 %v193
      %304 = vmatpush.msra.mxu0 %v191
      %305 = vmatpush.msra.mxu0 %v189
      %306 = vmatpush.msra.mxu0 %v187
      %307 = vmatpush.msra.mxu0 %v185
      %308 = vmatpush.msra.mxu0 %v183
      %309 = vmatpush.msra.mxu0 %v181
      %310 = vmatpush.msra.mxu0 %v179
      %311 = vmatpush.msra.mxu0 %v177
      %312 = vmatpush.msra.mxu0 %v175
      %313 = vmatpush.msra.mxu0 %v173
      %314 = vmatmul.f32.gmra.mxu0 %v276
      %v315 = vpop.f32.mrf.mxu0
      %v316 = vadd.f32 %v273, %v315
      %317 = vdwg.mxu0
      %s318 = scalar_lea.vmem %s165, 16
      %v319 = vld [vmem:[%s318] sm:$0x7f]
      %s320 = scalar_lea.vmem %s1, 448
      %v321 = vld [vmem:[%s320] sm:$0xff]
      %v322 = vld [vmem:[%s320 + $0x8] sm:$0xff]
      %v323 = vld [vmem:[%s320 + $0x10] sm:$0xff]
      %v324 = vld [vmem:[%s320 + $0x18] sm:$0xff]
      %v325 = vld [vmem:[%s320 + $0x20] sm:$0xff]
      %v326 = vld [vmem:[%s320 + $0x28] sm:$0xff]
      %v327 = vld [vmem:[%s320 + $0x30] sm:$0xff]
      %v328 = vld [vmem:[%s320 + $0x38] sm:$0xff]
      %v329 = vld [vmem:[%s320 + $0x40] sm:$0xff]
      %v330 = vld [vmem:[%s320 + $0x48] sm:$0xff]
      %v331 = vld [vmem:[%s320 + $0x50] sm:$0xff]
      %v332 = vld [vmem:[%s320 + $0x58] sm:$0xff]
      %v333 = vld [vmem:[%s320 + $0x60] sm:$0xff]
      %v334 = vld [vmem:[%s320 + $0x68] sm:$0xff]
      %v335 = vld [vmem:[%s320 + $0x70] sm:$0xff]
      %v336 = vld [vmem:[%s320 + $0x78] sm:$0xff]
      %v337 = vld [vmem:[%s320 + $0x80] sm:$0xff]
      %v338 = vld [vmem:[%s320 + $0x88] sm:$0xff]
      %v339 = vld [vmem:[%s320 + $0x90] sm:$0xff]
      %v340 = vld [vmem:[%s320 + $0x98] sm:$0xff]
      %v341 = vld [vmem:[%s320 + $0xa0] sm:$0xff]
      %v342 = vld [vmem:[%s320 + $0xa8] sm:$0xff]
      %v343 = vld [vmem:[%s320 + $0xb0] sm:$0xff]
      %v344 = vld [vmem:[%s320 + $0xb8] sm:$0xff]
      %v345 = vld [vmem:[%s320 + $0xc0] sm:$0xff]
      %v346 = vld [vmem:[%s320 + $0xc8] sm:$0xff]
      %v347 = vld [vmem:[%s320 + $0xd0] sm:$0xff]
      %v348 = vld [vmem:[%s320 + $0xd8] sm:$0xff]
      %v350 = vsel %vm231, %v319, 0
      %352 = vmatpush.msra.mxu0 0.0
      %353 = vmatpush.msra.mxu0 0.0
      %354 = vmatpush.msra.mxu0 %v347
      %355 = vmatpush.msra.mxu0 %v345
      %356 = vmatpush.msra.mxu0 %v343
      %357 = vmatpush.msra.mxu0 %v341
      %358 = vmatpush.msra.mxu0 %v339
      %359 = vmatpush.msra.mxu0 %v337
      %360 = vmatpush.msra.mxu0 %v335
      %361 = vmatpush.msra.mxu0 %v333
      %362 = vmatpush.msra.mxu0 %v331
      %363 = vmatpush.msra.mxu0 %v329
      %364 = vmatpush.msra.mxu0 %v327
      %365 = vmatpush.msra.mxu0 %v325
      %366 = vmatpush.msra.mxu0 %v323
      %367 = vmatpush.msra.mxu0 %v321
      %368 = vmatmul.f32.gmra.mxu0 %v350
      %v369 = vpop.f32.mrf.mxu0
      %v370 = vadd.f32 0.0, %v369
      %371 = vdwg.mxu0
      %372 = vmatpush.msra.mxu0 0.0
      %373 = vmatpush.msra.mxu0 0.0
      %374 = vmatpush.msra.mxu0 %v348
      %375 = vmatpush.msra.mxu0 %v346
      %376 = vmatpush.msra.mxu0 %v344
      %377 = vmatpush.msra.mxu0 %v342
      %378 = vmatpush.msra.mxu0 %v340
      %379 = vmatpush.msra.mxu0 %v338
      %380 = vmatpush.msra.mxu0 %v336
      %381 = vmatpush.msra.mxu0 %v334
      %382 = vmatpush.msra.mxu0 %v332
      %383 = vmatpush.msra.mxu0 %v330
      %384 = vmatpush.msra.mxu0 %v328
      %385 = vmatpush.msra.mxu0 %v326
      %386 = vmatpush.msra.mxu0 %v324
      %387 = vmatpush.msra.mxu0 %v322
      %388 = vmatmul.f32.gmra.mxu0 %v350
      %v389 = vpop.f32.mrf.mxu0
      %v390 = vadd.f32 0.0, %v389
      %391 = vdwg.mxu0
      %v392 = vadd.f32 %v296, %v370
      %v393 = vadd.f32 %v316, %v390
      %s394 = scalar_lea.vmem %s165, 32
      %v395 = vld [vmem:[%s394] sm:$0x7f]
      %s396 = scalar_lea.vmem %s1, 672
      %v397 = vld [vmem:[%s396] sm:$0xff]
      %v398 = vld [vmem:[%s396 + $0x8] sm:$0xff]
      %v399 = vld [vmem:[%s396 + $0x10] sm:$0xff]
      %v400 = vld [vmem:[%s396 + $0x18] sm:$0xff]
      %v401 = vld [vmem:[%s396 + $0x20] sm:$0xff]
      %v402 = vld [vmem:[%s396 + $0x28] sm:$0xff]
      %v403 = vld [vmem:[%s396 + $0x30] sm:$0xff]
      %v404 = vld [vmem:[%s396 + $0x38] sm:$0xff]
      %v405 = vld [vmem:[%s396 + $0x40] sm:$0xff]
      %v406 = vld [vmem:[%s396 + $0x48] sm:$0xff]
      %v407 = vld [vmem:[%s396 + $0x50] sm:$0xff]
      %v408 = vld [vmem:[%s396 + $0x58] sm:$0xff]
      %v409 = vld [vmem:[%s396 + $0x60] sm:$0xff]
      %v410 = vld [vmem:[%s396 + $0x68] sm:$0xff]
      %v411 = vld [vmem:[%s396 + $0x70] sm:$0xff]
      %v412 = vld [vmem:[%s396 + $0x78] sm:$0xff]
      %v413 = vld [vmem:[%s396 + $0x80] sm:$0xff]
      %v414 = vld [vmem:[%s396 + $0x88] sm:$0xff]
      %v415 = vld [vmem:[%s396 + $0x90] sm:$0xff]
      %v416 = vld [vmem:[%s396 + $0x98] sm:$0xff]
      %v417 = vld [vmem:[%s396 + $0xa0] sm:$0xff]
      %v418 = vld [vmem:[%s396 + $0xa8] sm:$0xff]
      %v419 = vld [vmem:[%s396 + $0xb0] sm:$0xff]
      %v420 = vld [vmem:[%s396 + $0xb8] sm:$0xff]
      %v421 = vld [vmem:[%s396 + $0xc0] sm:$0xff]
      %v422 = vld [vmem:[%s396 + $0xc8] sm:$0xff]
      %v423 = vld [vmem:[%s396 + $0xd0] sm:$0xff]
      %v424 = vld [vmem:[%s396 + $0xd8] sm:$0xff]
      %v426 = vsel %vm231, %v395, 0
      %428 = vmatpush.msra.mxu0 0.0
      %429 = vmatpush.msra.mxu0 0.0
      %430 = vmatpush.msra.mxu0 %v423
      %431 = vmatpush.msra.mxu0 %v421
      %432 = vmatpush.msra.mxu0 %v419
      %433 = vmatpush.msra.mxu0 %v417
      %434 = vmatpush.msra.mxu0 %v415
      %435 = vmatpush.msra.mxu0 %v413
      %436 = vmatpush.msra.mxu0 %v411
      %437 = vmatpush.msra.mxu0 %v409
      %438 = vmatpush.msra.mxu0 %v407
      %439 = vmatpush.msra.mxu0 %v405
      %440 = vmatpush.msra.mxu0 %v403
      %441 = vmatpush.msra.mxu0 %v401
      %442 = vmatpush.msra.mxu0 %v399
      %443 = vmatpush.msra.mxu0 %v397
      %444 = vmatmul.f32.gmra.mxu0 %v426
      %v445 = vpop.f32.mrf.mxu0
      %v446 = vadd.f32 0.0, %v445
      %447 = vdwg.mxu0
      %448 = vmatpush.msra.mxu0 0.0
      %449 = vmatpush.msra.mxu0 0.0
      %450 = vmatpush.msra.mxu0 %v424
      %451 = vmatpush.msra.mxu0 %v422
      %452 = vmatpush.msra.mxu0 %v420
      %453 = vmatpush.msra.mxu0 %v418
      %454 = vmatpush.msra.mxu0 %v416
      %455 = vmatpush.msra.mxu0 %v414
      %456 = vmatpush.msra.mxu0 %v412
      %457 = vmatpush.msra.mxu0 %v410
      %458 = vmatpush.msra.mxu0 %v408
      %459 = vmatpush.msra.mxu0 %v406
      %460 = vmatpush.msra.mxu0 %v404
      %461 = vmatpush.msra.mxu0 %v402
      %462 = vmatpush.msra.mxu0 %v400
      %463 = vmatpush.msra.mxu0 %v398
      %464 = vmatmul.f32.gmra.mxu0 %v426
      %v465 = vpop.f32.mrf.mxu0
      %v466 = vadd.f32 0.0, %v465
      %467 = vdwg.mxu0
      %v468 = vadd.f32 %v392, %v446
      %v469 = vadd.f32 %v393, %v466
      %s470 = scalar_lea.vmem %s165, 40
      %v471 = vld [vmem:[%s470] sm:$0x7f]
      %s472 = scalar_lea.vmem %s1, 896
      %v473 = vld [vmem:[%s472] sm:$0xff]
      %v474 = vld [vmem:[%s472 + $0x8] sm:$0xff]
      %v475 = vld [vmem:[%s472 + $0x10] sm:$0xff]
      %v476 = vld [vmem:[%s472 + $0x18] sm:$0xff]
      %v477 = vld [vmem:[%s472 + $0x20] sm:$0xff]
      %v478 = vld [vmem:[%s472 + $0x28] sm:$0xff]
      %v479 = vld [vmem:[%s472 + $0x30] sm:$0xff]
      %v480 = vld [vmem:[%s472 + $0x38] sm:$0xff]
      %v481 = vld [vmem:[%s472 + $0x40] sm:$0xff]
      %v482 = vld [vmem:[%s472 + $0x48] sm:$0xff]
      %v483 = vld [vmem:[%s472 + $0x50] sm:$0xff]
      %v484 = vld [vmem:[%s472 + $0x58] sm:$0xff]
      %v485 = vld [vmem:[%s472 + $0x60] sm:$0xff]
      %v486 = vld [vmem:[%s472 + $0x68] sm:$0xff]
      %v487 = vld [vmem:[%s472 + $0x70] sm:$0xff]
      %v488 = vld [vmem:[%s472 + $0x78] sm:$0xff]
      %v489 = vld [vmem:[%s472 + $0x80] sm:$0xff]
      %v490 = vld [vmem:[%s472 + $0x88] sm:$0xff]
      %v491 = vld [vmem:[%s472 + $0x90] sm:$0xff]
      %v492 = vld [vmem:[%s472 + $0x98] sm:$0xff]
      %v493 = vld [vmem:[%s472 + $0xa0] sm:$0xff]
      %v494 = vld [vmem:[%s472 + $0xa8] sm:$0xff]
      %v495 = vld [vmem:[%s472 + $0xb0] sm:$0xff]
      %v496 = vld [vmem:[%s472 + $0xb8] sm:$0xff]
      %v497 = vld [vmem:[%s472 + $0xc0] sm:$0xff]
      %v498 = vld [vmem:[%s472 + $0xc8] sm:$0xff]
      %v499 = vld [vmem:[%s472 + $0xd0] sm:$0xff]
      %v500 = vld [vmem:[%s472 + $0xd8] sm:$0xff]
      %v502 = vsel %vm231, %v471, 0
      %504 = vmatpush.msra.mxu0 0.0
      %505 = vmatpush.msra.mxu0 0.0
      %506 = vmatpush.msra.mxu0 %v499
      %507 = vmatpush.msra.mxu0 %v497
      %508 = vmatpush.msra.mxu0 %v495
      %509 = vmatpush.msra.mxu0 %v493
      %510 = vmatpush.msra.mxu0 %v491
      %511 = vmatpush.msra.mxu0 %v489
      %512 = vmatpush.msra.mxu0 %v487
      %513 = vmatpush.msra.mxu0 %v485
      %514 = vmatpush.msra.mxu0 %v483
      %515 = vmatpush.msra.mxu0 %v481
      %516 = vmatpush.msra.mxu0 %v479
      %517 = vmatpush.msra.mxu0 %v477
      %518 = vmatpush.msra.mxu0 %v475
      %519 = vmatpush.msra.mxu0 %v473
      %520 = vmatmul.f32.gmra.mxu0 %v502
      %v521 = vpop.f32.mrf.mxu0
      %v522 = vadd.f32 0.0, %v521
      %523 = vdwg.mxu0
      %524 = vmatpush.msra.mxu0 0.0
      %525 = vmatpush.msra.mxu0 0.0
      %526 = vmatpush.msra.mxu0 %v500
      %527 = vmatpush.msra.mxu0 %v498
      %528 = vmatpush.msra.mxu0 %v496
      %529 = vmatpush.msra.mxu0 %v494
      %530 = vmatpush.msra.mxu0 %v492
      %531 = vmatpush.msra.mxu0 %v490
      %532 = vmatpush.msra.mxu0 %v488
      %533 = vmatpush.msra.mxu0 %v486
      %534 = vmatpush.msra.mxu0 %v484
      %535 = vmatpush.msra.mxu0 %v482
      %536 = vmatpush.msra.mxu0 %v480
      %537 = vmatpush.msra.mxu0 %v478
      %538 = vmatpush.msra.mxu0 %v476
      %539 = vmatpush.msra.mxu0 %v474
      %540 = vmatmul.f32.gmra.mxu0 %v502
      %v541 = vpop.f32.mrf.mxu0
      %v542 = vadd.f32 0.0, %v541
      %543 = vdwg.mxu0
      %v544 = vadd.f32 %v468, %v522
      %v545 = vadd.f32 %v469, %v542
      %s546 = scalar_lea.vmem %s165, 48
      %v547 = vld [vmem:[%s546] sm:$0x7f]
      %s548 = scalar_lea.vmem %s1, 1120
      %v549 = vld [vmem:[%s548] sm:$0xff]
      %v550 = vld [vmem:[%s548 + $0x8] sm:$0xff]
      %v551 = vld [vmem:[%s548 + $0x10] sm:$0xff]
      %v552 = vld [vmem:[%s548 + $0x18] sm:$0xff]
      %v553 = vld [vmem:[%s548 + $0x20] sm:$0xff]
      %v554 = vld [vmem:[%s548 + $0x28] sm:$0xff]
      %v555 = vld [vmem:[%s548 + $0x30] sm:$0xff]
      %v556 = vld [vmem:[%s548 + $0x38] sm:$0xff]
      %v557 = vld [vmem:[%s548 + $0x40] sm:$0xff]
      %v558 = vld [vmem:[%s548 + $0x48] sm:$0xff]
      %v559 = vld [vmem:[%s548 + $0x50] sm:$0xff]
      %v560 = vld [vmem:[%s548 + $0x58] sm:$0xff]
      %v561 = vld [vmem:[%s548 + $0x60] sm:$0xff]
      %v562 = vld [vmem:[%s548 + $0x68] sm:$0xff]
      %v563 = vld [vmem:[%s548 + $0x70] sm:$0xff]
      %v564 = vld [vmem:[%s548 + $0x78] sm:$0xff]
      %v565 = vld [vmem:[%s548 + $0x80] sm:$0xff]
      %v566 = vld [vmem:[%s548 + $0x88] sm:$0xff]
      %v567 = vld [vmem:[%s548 + $0x90] sm:$0xff]
      %v568 = vld [vmem:[%s548 + $0x98] sm:$0xff]
      %v569 = vld [vmem:[%s548 + $0xa0] sm:$0xff]
      %v570 = vld [vmem:[%s548 + $0xa8] sm:$0xff]
      %v571 = vld [vmem:[%s548 + $0xb0] sm:$0xff]
      %v572 = vld [vmem:[%s548 + $0xb8] sm:$0xff]
      %v573 = vld [vmem:[%s548 + $0xc0] sm:$0xff]
      %v574 = vld [vmem:[%s548 + $0xc8] sm:$0xff]
      %v575 = vld [vmem:[%s548 + $0xd0] sm:$0xff]
      %v576 = vld [vmem:[%s548 + $0xd8] sm:$0xff]
      %v578 = vsel %vm231, %v547, 0
      %580 = vmatpush.msra.mxu0 0.0
      %581 = vmatpush.msra.mxu0 0.0
      %582 = vmatpush.msra.mxu0 %v575
      %583 = vmatpush.msra.mxu0 %v573
      %584 = vmatpush.msra.mxu0 %v571
      %585 = vmatpush.msra.mxu0 %v569
      %586 = vmatpush.msra.mxu0 %v567
      %587 = vmatpush.msra.mxu0 %v565
      %588 = vmatpush.msra.mxu0 %v563
      %589 = vmatpush.msra.mxu0 %v561
      %590 = vmatpush.msra.mxu0 %v559
      %591 = vmatpush.msra.mxu0 %v557
      %592 = vmatpush.msra.mxu0 %v555
      %593 = vmatpush.msra.mxu0 %v553
      %594 = vmatpush.msra.mxu0 %v551
      %595 = vmatpush.msra.mxu0 %v549
      %596 = vmatmul.f32.gmra.mxu0 %v578
      %v597 = vpop.f32.mrf.mxu0
      %v598 = vadd.f32 0.0, %v597
      %599 = vdwg.mxu0
      %600 = vmatpush.msra.mxu0 0.0
      %601 = vmatpush.msra.mxu0 0.0
      %602 = vmatpush.msra.mxu0 %v576
      %603 = vmatpush.msra.mxu0 %v574
      %604 = vmatpush.msra.mxu0 %v572
      %605 = vmatpush.msra.mxu0 %v570
      %606 = vmatpush.msra.mxu0 %v568
      %607 = vmatpush.msra.mxu0 %v566
      %608 = vmatpush.msra.mxu0 %v564
      %609 = vmatpush.msra.mxu0 %v562
      %610 = vmatpush.msra.mxu0 %v560
      %611 = vmatpush.msra.mxu0 %v558
      %612 = vmatpush.msra.mxu0 %v556
      %613 = vmatpush.msra.mxu0 %v554
      %614 = vmatpush.msra.mxu0 %v552
      %615 = vmatpush.msra.mxu0 %v550
      %616 = vmatmul.f32.gmra.mxu0 %v578
      %v617 = vpop.f32.mrf.mxu0
      %v618 = vadd.f32 0.0, %v617
      %619 = vdwg.mxu0
      %v620 = vadd.f32 %v544, %v598
      %v621 = vadd.f32 %v545, %v618
      %v622 = vld [vmem:[%s165 + $0x1] sm:$0x7f]
      %s623 = scalar_lea.vmem %s1, 1344
      %v624 = vld [vmem:[%s623] sm:$0xff]
      %v625 = vld [vmem:[%s623 + $0x8] sm:$0xff]
      %v626 = vld [vmem:[%s623 + $0x10] sm:$0xff]
      %v627 = vld [vmem:[%s623 + $0x18] sm:$0xff]
      %v628 = vld [vmem:[%s623 + $0x20] sm:$0xff]
      %v629 = vld [vmem:[%s623 + $0x28] sm:$0xff]
      %v630 = vld [vmem:[%s623 + $0x30] sm:$0xff]
      %v631 = vld [vmem:[%s623 + $0x38] sm:$0xff]
      %v632 = vld [vmem:[%s623 + $0x40] sm:$0xff]
      %v633 = vld [vmem:[%s623 + $0x48] sm:$0xff]
      %v634 = vld [vmem:[%s623 + $0x50] sm:$0xff]
      %v635 = vld [vmem:[%s623 + $0x58] sm:$0xff]
      %v636 = vld [vmem:[%s623 + $0x60] sm:$0xff]
      %v637 = vld [vmem:[%s623 + $0x68] sm:$0xff]
      %v638 = vld [vmem:[%s623 + $0x70] sm:$0xff]
      %v639 = vld [vmem:[%s623 + $0x78] sm:$0xff]
      %v640 = vld [vmem:[%s623 + $0x80] sm:$0xff]
      %v641 = vld [vmem:[%s623 + $0x88] sm:$0xff]
      %v642 = vld [vmem:[%s623 + $0x90] sm:$0xff]
      %v643 = vld [vmem:[%s623 + $0x98] sm:$0xff]
      %v644 = vld [vmem:[%s623 + $0xa0] sm:$0xff]
      %v645 = vld [vmem:[%s623 + $0xa8] sm:$0xff]
      %v646 = vld [vmem:[%s623 + $0xb0] sm:$0xff]
      %v647 = vld [vmem:[%s623 + $0xb8] sm:$0xff]
      %v648 = vld [vmem:[%s623 + $0xc0] sm:$0xff]
      %v649 = vld [vmem:[%s623 + $0xc8] sm:$0xff]
      %v650 = vld [vmem:[%s623 + $0xd0] sm:$0xff]
      %v651 = vld [vmem:[%s623 + $0xd8] sm:$0xff]
      %v653 = vsel %vm231, %v622, 0
      %655 = vmatpush.msra.mxu0 0.0
      %656 = vmatpush.msra.mxu0 0.0
      %657 = vmatpush.msra.mxu0 %v650
      %658 = vmatpush.msra.mxu0 %v648
      %659 = vmatpush.msra.mxu0 %v646
      %660 = vmatpush.msra.mxu0 %v644
      %661 = vmatpush.msra.mxu0 %v642
      %662 = vmatpush.msra.mxu0 %v640
      %663 = vmatpush.msra.mxu0 %v638
      %664 = vmatpush.msra.mxu0 %v636
      %665 = vmatpush.msra.mxu0 %v634
      %666 = vmatpush.msra.mxu0 %v632
      %667 = vmatpush.msra.mxu0 %v630
      %668 = vmatpush.msra.mxu0 %v628
      %669 = vmatpush.msra.mxu0 %v626
      %670 = vmatpush.msra.mxu0 %v624
      %671 = vmatmul.f32.gmra.mxu0 %v653
      %v672 = vpop.f32.mrf.mxu0
      %v673 = vadd.f32 0.0, %v672
      %674 = vdwg.mxu0
      %675 = vmatpush.msra.mxu0 0.0
      %676 = vmatpush.msra.mxu0 0.0
      %677 = vmatpush.msra.mxu0 %v651
      %678 = vmatpush.msra.mxu0 %v649
      %679 = vmatpush.msra.mxu0 %v647
      %680 = vmatpush.msra.mxu0 %v645
      %681 = vmatpush.msra.mxu0 %v643
      %682 = vmatpush.msra.mxu0 %v641
      %683 = vmatpush.msra.mxu0 %v639
      %684 = vmatpush.msra.mxu0 %v637
      %685 = vmatpush.msra.mxu0 %v635
      %686 = vmatpush.msra.mxu0 %v633
      %687 = vmatpush.msra.mxu0 %v631
      %688 = vmatpush.msra.mxu0 %v629
      %689 = vmatpush.msra.mxu0 %v627
      %690 = vmatpush.msra.mxu0 %v625
      %691 = vmatmul.f32.gmra.mxu0 %v653
      %v692 = vpop.f32.mrf.mxu0
      %v693 = vadd.f32 0.0, %v692
      %694 = vdwg.mxu0
      %v695 = vadd.f32 %v620, %v673
      %v696 = vadd.f32 %v621, %v693
      %v697 = vld [vmem:[%s200 + $0x1] sm:$0x7f]
      %s698 = scalar_lea.vmem %s1, 1568
      %v699 = vld [vmem:[%s698] sm:$0xff]
      %v700 = vld [vmem:[%s698 + $0x8] sm:$0xff]
      %v701 = vld [vmem:[%s698 + $0x10] sm:$0xff]
      %v702 = vld [vmem:[%s698 + $0x18] sm:$0xff]
      %v703 = vld [vmem:[%s698 + $0x20] sm:$0xff]
      %v704 = vld [vmem:[%s698 + $0x28] sm:$0xff]
      %v705 = vld [vmem:[%s698 + $0x30] sm:$0xff]
      %v706 = vld [vmem:[%s698 + $0x38] sm:$0xff]
      %v707 = vld [vmem:[%s698 + $0x40] sm:$0xff]
      %v708 = vld [vmem:[%s698 + $0x48] sm:$0xff]
      %v709 = vld [vmem:[%s698 + $0x50] sm:$0xff]
      %v710 = vld [vmem:[%s698 + $0x58] sm:$0xff]
      %v711 = vld [vmem:[%s698 + $0x60] sm:$0xff]
      %v712 = vld [vmem:[%s698 + $0x68] sm:$0xff]
      %v713 = vld [vmem:[%s698 + $0x70] sm:$0xff]
      %v714 = vld [vmem:[%s698 + $0x78] sm:$0xff]
      %v715 = vld [vmem:[%s698 + $0x80] sm:$0xff]
      %v716 = vld [vmem:[%s698 + $0x88] sm:$0xff]
      %v717 = vld [vmem:[%s698 + $0x90] sm:$0xff]
      %v718 = vld [vmem:[%s698 + $0x98] sm:$0xff]
      %v719 = vld [vmem:[%s698 + $0xa0] sm:$0xff]
      %v720 = vld [vmem:[%s698 + $0xa8] sm:$0xff]
      %v721 = vld [vmem:[%s698 + $0xb0] sm:$0xff]
      %v722 = vld [vmem:[%s698 + $0xb8] sm:$0xff]
      %v723 = vld [vmem:[%s698 + $0xc0] sm:$0xff]
      %v724 = vld [vmem:[%s698 + $0xc8] sm:$0xff]
      %v725 = vld [vmem:[%s698 + $0xd0] sm:$0xff]
      %v726 = vld [vmem:[%s698 + $0xd8] sm:$0xff]
      %v728 = vsel %vm231, %v697, 0
      %730 = vmatpush.msra.mxu0 0.0
      %731 = vmatpush.msra.mxu0 0.0
      %732 = vmatpush.msra.mxu0 %v725
      %733 = vmatpush.msra.mxu0 %v723
      %734 = vmatpush.msra.mxu0 %v721
      %735 = vmatpush.msra.mxu0 %v719
      %736 = vmatpush.msra.mxu0 %v717
      %737 = vmatpush.msra.mxu0 %v715
      %738 = vmatpush.msra.mxu0 %v713
      %739 = vmatpush.msra.mxu0 %v711
      %740 = vmatpush.msra.mxu0 %v709
      %741 = vmatpush.msra.mxu0 %v707
      %742 = vmatpush.msra.mxu0 %v705
      %743 = vmatpush.msra.mxu0 %v703
      %744 = vmatpush.msra.mxu0 %v701
      %745 = vmatpush.msra.mxu0 %v699
      %746 = vmatmul.f32.gmra.mxu0 %v728
      %v747 = vpop.f32.mrf.mxu0
      %v748 = vadd.f32 0.0, %v747
      %749 = vdwg.mxu0
      %750 = vmatpush.msra.mxu0 0.0
      %751 = vmatpush.msra.mxu0 0.0
      %752 = vmatpush.msra.mxu0 %v726
      %753 = vmatpush.msra.mxu0 %v724
      %754 = vmatpush.msra.mxu0 %v722
      %755 = vmatpush.msra.mxu0 %v720
      %756 = vmatpush.msra.mxu0 %v718
      %757 = vmatpush.msra.mxu0 %v716
      %758 = vmatpush.msra.mxu0 %v714
      %759 = vmatpush.msra.mxu0 %v712
      %760 = vmatpush.msra.mxu0 %v710
      %761 = vmatpush.msra.mxu0 %v708
      %762 = vmatpush.msra.mxu0 %v706
      %763 = vmatpush.msra.mxu0 %v704
      %764 = vmatpush.msra.mxu0 %v702
      %765 = vmatpush.msra.mxu0 %v700
      %766 = vmatmul.f32.gmra.mxu0 %v728
      %v767 = vpop.f32.mrf.mxu0
      %v768 = vadd.f32 0.0, %v767
      %769 = vdwg.mxu0
      %v770 = vadd.f32 %v695, %v748
      %v771 = vadd.f32 %v696, %v768
      %v772 = vld [vmem:[%s318 + $0x1] sm:$0x7f]
      %s773 = scalar_lea.vmem %s1, 1792
      %v774 = vld [vmem:[%s773] sm:$0xff]
      %v775 = vld [vmem:[%s773 + $0x8] sm:$0xff]
      %v776 = vld [vmem:[%s773 + $0x10] sm:$0xff]
      %v777 = vld [vmem:[%s773 + $0x18] sm:$0xff]
      %v778 = vld [vmem:[%s773 + $0x20] sm:$0xff]
      %v779 = vld [vmem:[%s773 + $0x28] sm:$0xff]
      %v780 = vld [vmem:[%s773 + $0x30] sm:$0xff]
      %v781 = vld [vmem:[%s773 + $0x38] sm:$0xff]
      %v782 = vld [vmem:[%s773 + $0x40] sm:$0xff]
      %v783 = vld [vmem:[%s773 + $0x48] sm:$0xff]
      %v784 = vld [vmem:[%s773 + $0x50] sm:$0xff]
      %v785 = vld [vmem:[%s773 + $0x58] sm:$0xff]
      %v786 = vld [vmem:[%s773 + $0x60] sm:$0xff]
      %v787 = vld [vmem:[%s773 + $0x68] sm:$0xff]
      %v788 = vld [vmem:[%s773 + $0x70] sm:$0xff]
      %v789 = vld [vmem:[%s773 + $0x78] sm:$0xff]
      %v790 = vld [vmem:[%s773 + $0x80] sm:$0xff]
      %v791 = vld [vmem:[%s773 + $0x88] sm:$0xff]
      %v792 = vld [vmem:[%s773 + $0x90] sm:$0xff]
      %v793 = vld [vmem:[%s773 + $0x98] sm:$0xff]
      %v794 = vld [vmem:[%s773 + $0xa0] sm:$0xff]
      %v795 = vld [vmem:[%s773 + $0xa8] sm:$0xff]
      %v796 = vld [vmem:[%s773 + $0xb0] sm:$0xff]
      %v797 = vld [vmem:[%s773 + $0xb8] sm:$0xff]
      %v798 = vld [vmem:[%s773 + $0xc0] sm:$0xff]
      %v799 = vld [vmem:[%s773 + $0xc8] sm:$0xff]
      %v800 = vld [vmem:[%s773 + $0xd0] sm:$0xff]
      %v801 = vld [vmem:[%s773 + $0xd8] sm:$0xff]
      %v803 = vsel %vm231, %v772, 0
      %805 = vmatpush.msra.mxu0 0.0
      %806 = vmatpush.msra.mxu0 0.0
      %807 = vmatpush.msra.mxu0 %v800
      %808 = vmatpush.msra.mxu0 %v798
      %809 = vmatpush.msra.mxu0 %v796
      %810 = vmatpush.msra.mxu0 %v794
      %811 = vmatpush.msra.mxu0 %v792
      %812 = vmatpush.msra.mxu0 %v790
      %813 = vmatpush.msra.mxu0 %v788
      %814 = vmatpush.msra.mxu0 %v786
      %815 = vmatpush.msra.mxu0 %v784
      %816 = vmatpush.msra.mxu0 %v782
      %817 = vmatpush.msra.mxu0 %v780
      %818 = vmatpush.msra.mxu0 %v778
      %819 = vmatpush.msra.mxu0 %v776
      %820 = vmatpush.msra.mxu0 %v774
      %821 = vmatmul.f32.gmra.mxu0 %v803
      %v822 = vpop.f32.mrf.mxu0
      %v823 = vadd.f32 0.0, %v822
      %824 = vdwg.mxu0
      %825 = vmatpush.msra.mxu0 0.0
      %826 = vmatpush.msra.mxu0 0.0
      %827 = vmatpush.msra.mxu0 %v801
      %828 = vmatpush.msra.mxu0 %v799
      %829 = vmatpush.msra.mxu0 %v797
      %830 = vmatpush.msra.mxu0 %v795
      %831 = vmatpush.msra.mxu0 %v793
      %832 = vmatpush.msra.mxu0 %v791
      %833 = vmatpush.msra.mxu0 %v789
      %834 = vmatpush.msra.mxu0 %v787
      %835 = vmatpush.msra.mxu0 %v785
      %836 = vmatpush.msra.mxu0 %v783
      %837 = vmatpush.msra.mxu0 %v781
      %838 = vmatpush.msra.mxu0 %v779
      %839 = vmatpush.msra.mxu0 %v777
      %840 = vmatpush.msra.mxu0 %v775
      %841 = vmatmul.f32.gmra.mxu0 %v803
      %v842 = vpop.f32.mrf.mxu0
      %v843 = vadd.f32 0.0, %v842
      %844 = vdwg.mxu0
      %v845 = vadd.f32 %v770, %v823
      %v846 = vadd.f32 %v771, %v843
      %847 = vmatpush.msra.mxu0 0.0
      %848 = vmatpush.msra.mxu0 0.0
      %849 = vmatpush.msra.mxu0 %v229
      %850 = vmatpush.msra.mxu0 %v227
      %851 = vmatpush.msra.mxu0 %v225
      %852 = vmatpush.msra.mxu0 %v223
      %853 = vmatpush.msra.mxu0 %v221
      %854 = vmatpush.msra.mxu0 %v219
      %855 = vmatpush.msra.mxu0 %v217
      %856 = vmatpush.msra.mxu0 %v215
      %857 = vmatpush.msra.mxu0 %v213
      %858 = vmatpush.msra.mxu0 %v211
      %859 = vmatpush.msra.mxu0 %v209
      %860 = vmatpush.msra.mxu0 %v207
      %861 = vmatpush.msra.mxu0 %v205
      %862 = vmatpush.msra.mxu0 %v203
      %863 = vmatmul.f32.gmra.mxu0 %v350
      %v864 = vpop.f32.mrf.mxu0
      %v865 = vadd.f32 0.0, %v864
      %866 = vdwg.mxu0
      %867 = vmatpush.msra.mxu0 0.0
      %868 = vmatpush.msra.mxu0 0.0
      %869 = vmatpush.msra.mxu0 %v230
      %870 = vmatpush.msra.mxu0 %v228
      %871 = vmatpush.msra.mxu0 %v226
      %872 = vmatpush.msra.mxu0 %v224
      %873 = vmatpush.msra.mxu0 %v222
      %874 = vmatpush.msra.mxu0 %v220
      %875 = vmatpush.msra.mxu0 %v218
      %876 = vmatpush.msra.mxu0 %v216
      %877 = vmatpush.msra.mxu0 %v214
      %878 = vmatpush.msra.mxu0 %v212
      %879 = vmatpush.msra.mxu0 %v210
      %880 = vmatpush.msra.mxu0 %v208
      %881 = vmatpush.msra.mxu0 %v206
      %882 = vmatpush.msra.mxu0 %v204
      %883 = vmatmul.f32.gmra.mxu0 %v350
      %v884 = vpop.f32.mrf.mxu0
      %v885 = vadd.f32 0.0, %v884
      %886 = vdwg.mxu0
      %887 = vmatpush.msra.mxu0 0.0
      %888 = vmatpush.msra.mxu0 0.0
      %889 = vmatpush.msra.mxu0 %v198
      %890 = vmatpush.msra.mxu0 %v196
      %891 = vmatpush.msra.mxu0 %v194
      %892 = vmatpush.msra.mxu0 %v192
      %893 = vmatpush.msra.mxu0 %v190
      %894 = vmatpush.msra.mxu0 %v188
      %895 = vmatpush.msra.mxu0 %v186
      %896 = vmatpush.msra.mxu0 %v184
      %897 = vmatpush.msra.mxu0 %v182
      %898 = vmatpush.msra.mxu0 %v180
      %899 = vmatpush.msra.mxu0 %v178
      %900 = vmatpush.msra.mxu0 %v176
      %901 = vmatpush.msra.mxu0 %v174
      %902 = vmatpush.msra.mxu0 %v172
      %903 = vmatmul.f32.gmra.mxu0 %v233
      %v904 = vpop.f32.mrf.mxu0
      %v905 = vadd.f32 %v865, %v904
      %906 = vdwg.mxu0
      %907 = vmatpush.msra.mxu0 0.0
      %908 = vmatpush.msra.mxu0 0.0
      %909 = vmatpush.msra.mxu0 %v199
      %910 = vmatpush.msra.mxu0 %v197
      %911 = vmatpush.msra.mxu0 %v195
      %912 = vmatpush.msra.mxu0 %v193
      %913 = vmatpush.msra.mxu0 %v191
      %914 = vmatpush.msra.mxu0 %v189
      %915 = vmatpush.msra.mxu0 %v187
      %916 = vmatpush.msra.mxu0 %v185
      %917 = vmatpush.msra.mxu0 %v183
      %918 = vmatpush.msra.mxu0 %v181
      %919 = vmatpush.msra.mxu0 %v179
      %920 = vmatpush.msra.mxu0 %v177
      %921 = vmatpush.msra.mxu0 %v175
      %922 = vmatpush.msra.mxu0 %v173
      %923 = vmatmul.f32.gmra.mxu0 %v233
      %v924 = vpop.f32.mrf.mxu0
      %v925 = vadd.f32 %v885, %v924
      %926 = vdwg.mxu0
      %s927 = scalar_lea.vmem %s165, 24
      %v928 = vld [vmem:[%s927] sm:$0x7f]
      %v930 = vsel %vm231, %v928, 0
      %932 = vmatpush.msra.mxu0 0.0
      %933 = vmatpush.msra.mxu0 0.0
      %934 = vmatpush.msra.mxu0 %v347
      %935 = vmatpush.msra.mxu0 %v345
      %936 = vmatpush.msra.mxu0 %v343
      %937 = vmatpush.msra.mxu0 %v341
      %938 = vmatpush.msra.mxu0 %v339
      %939 = vmatpush.msra.mxu0 %v337
      %940 = vmatpush.msra.mxu0 %v335
      %941 = vmatpush.msra.mxu0 %v333
      %942 = vmatpush.msra.mxu0 %v331
      %943 = vmatpush.msra.mxu0 %v329
      %944 = vmatpush.msra.mxu0 %v327
      %945 = vmatpush.msra.mxu0 %v325
      %946 = vmatpush.msra.mxu0 %v323
      %947 = vmatpush.msra.mxu0 %v321
      %948 = vmatmul.f32.gmra.mxu0 %v930
      %v949 = vpop.f32.mrf.mxu0
      %v950 = vadd.f32 0.0, %v949
      %951 = vdwg.mxu0
      %952 = vmatpush.msra.mxu0 0.0
      %953 = vmatpush.msra.mxu0 0.0
      %954 = vmatpush.msra.mxu0 %v348
      %955 = vmatpush.msra.mxu0 %v346
      %956 = vmatpush.msra.mxu0 %v344
      %957 = vmatpush.msra.mxu0 %v342
      %958 = vmatpush.msra.mxu0 %v340
      %959 = vmatpush.msra.mxu0 %v338
      %960 = vmatpush.msra.mxu0 %v336
      %961 = vmatpush.msra.mxu0 %v334
      %962 = vmatpush.msra.mxu0 %v332
      %963 = vmatpush.msra.mxu0 %v330
      %964 = vmatpush.msra.mxu0 %v328
      %965 = vmatpush.msra.mxu0 %v326
      %966 = vmatpush.msra.mxu0 %v324
      %967 = vmatpush.msra.mxu0 %v322
      %968 = vmatmul.f32.gmra.mxu0 %v930
      %v969 = vpop.f32.mrf.mxu0
      %v970 = vadd.f32 0.0, %v969
      %971 = vdwg.mxu0
      %v972 = vadd.f32 %v905, %v950
      %v973 = vadd.f32 %v925, %v970
      %974 = vmatpush.msra.mxu0 0.0
      %975 = vmatpush.msra.mxu0 0.0
      %976 = vmatpush.msra.mxu0 %v423
      %977 = vmatpush.msra.mxu0 %v421
      %978 = vmatpush.msra.mxu0 %v419
      %979 = vmatpush.msra.mxu0 %v417
      %980 = vmatpush.msra.mxu0 %v415
      %981 = vmatpush.msra.mxu0 %v413
      %982 = vmatpush.msra.mxu0 %v411
      %983 = vmatpush.msra.mxu0 %v409
      %984 = vmatpush.msra.mxu0 %v407
      %985 = vmatpush.msra.mxu0 %v405
      %986 = vmatpush.msra.mxu0 %v403
      %987 = vmatpush.msra.mxu0 %v401
      %988 = vmatpush.msra.mxu0 %v399
      %989 = vmatpush.msra.mxu0 %v397
      %990 = vmatmul.f32.gmra.mxu0 %v502
      %v991 = vpop.f32.mrf.mxu0
      %v992 = vadd.f32 0.0, %v991
      %993 = vdwg.mxu0
      %994 = vmatpush.msra.mxu0 0.0
      %995 = vmatpush.msra.mxu0 0.0
      %996 = vmatpush.msra.mxu0 %v424
      %997 = vmatpush.msra.mxu0 %v422
      %998 = vmatpush.msra.mxu0 %v420
      %999 = vmatpush.msra.mxu0 %v418
      %1000 = vmatpush.msra.mxu0 %v416
      %1001 = vmatpush.msra.mxu0 %v414
      %1002 = vmatpush.msra.mxu0 %v412
      %1003 = vmatpush.msra.mxu0 %v410
      %1004 = vmatpush.msra.mxu0 %v408
      %1005 = vmatpush.msra.mxu0 %v406
      %1006 = vmatpush.msra.mxu0 %v404
      %1007 = vmatpush.msra.mxu0 %v402
      %1008 = vmatpush.msra.mxu0 %v400
      %1009 = vmatpush.msra.mxu0 %v398
      %1010 = vmatmul.f32.gmra.mxu0 %v502
      %v1011 = vpop.f32.mrf.mxu0
      %v1012 = vadd.f32 0.0, %v1011
      %1013 = vdwg.mxu0
      %v1014 = vadd.f32 %v972, %v992
      %v1015 = vadd.f32 %v973, %v1012
      %1016 = vmatpush.msra.mxu0 0.0
      %1017 = vmatpush.msra.mxu0 0.0
      %1018 = vmatpush.msra.mxu0 %v499
      %1019 = vmatpush.msra.mxu0 %v497
      %1020 = vmatpush.msra.mxu0 %v495
      %1021 = vmatpush.msra.mxu0 %v493
      %1022 = vmatpush.msra.mxu0 %v491
      %1023 = vmatpush.msra.mxu0 %v489
      %1024 = vmatpush.msra.mxu0 %v487
      %1025 = vmatpush.msra.mxu0 %v485
      %1026 = vmatpush.msra.mxu0 %v483
      %1027 = vmatpush.msra.mxu0 %v481
      %1028 = vmatpush.msra.mxu0 %v479
      %1029 = vmatpush.msra.mxu0 %v477
      %1030 = vmatpush.msra.mxu0 %v475
      %1031 = vmatpush.msra.mxu0 %v473
      %1032 = vmatmul.f32.gmra.mxu0 %v578
      %v1033 = vpop.f32.mrf.mxu0
      %v1034 = vadd.f32 0.0, %v1033
      %1035 = vdwg.mxu0
      %1036 = vmatpush.msra.mxu0 0.0
      %1037 = vmatpush.msra.mxu0 0.0
      %1038 = vmatpush.msra.mxu0 %v500
      %1039 = vmatpush.msra.mxu0 %v498
      %1040 = vmatpush.msra.mxu0 %v496
      %1041 = vmatpush.msra.mxu0 %v494
      %1042 = vmatpush.msra.mxu0 %v492
      %1043 = vmatpush.msra.mxu0 %v490
      %1044 = vmatpush.msra.mxu0 %v488
      %1045 = vmatpush.msra.mxu0 %v486
      %1046 = vmatpush.msra.mxu0 %v484
      %1047 = vmatpush.msra.mxu0 %v482
      %1048 = vmatpush.msra.mxu0 %v480
      %1049 = vmatpush.msra.mxu0 %v478
      %1050 = vmatpush.msra.mxu0 %v476
      %1051 = vmatpush.msra.mxu0 %v474
      %1052 = vmatmul.f32.gmra.mxu0 %v578
      %v1053 = vpop.f32.mrf.mxu0
      %v1054 = vadd.f32 0.0, %v1053
      %1055 = vdwg.mxu0
      %v1056 = vadd.f32 %v1014, %v1034
      %v1057 = vadd.f32 %v1015, %v1054
      %s1058 = scalar_lea.vmem %s165, 56
      %v1059 = vld [vmem:[%s1058] sm:$0x7f]
      %v1061 = vsel %vm231, %v1059, 0
      %1063 = vmatpush.msra.mxu0 0.0
      %1064 = vmatpush.msra.mxu0 0.0
      %1065 = vmatpush.msra.mxu0 %v575
      %1066 = vmatpush.msra.mxu0 %v573
      %1067 = vmatpush.msra.mxu0 %v571
      %1068 = vmatpush.msra.mxu0 %v569
      %1069 = vmatpush.msra.mxu0 %v567
      %1070 = vmatpush.msra.mxu0 %v565
      %1071 = vmatpush.msra.mxu0 %v563
      %1072 = vmatpush.msra.mxu0 %v561
      %1073 = vmatpush.msra.mxu0 %v559
      %1074 = vmatpush.msra.mxu0 %v557
      %1075 = vmatpush.msra.mxu0 %v555
      %1076 = vmatpush.msra.mxu0 %v553
      %1077 = vmatpush.msra.mxu0 %v551
      %1078 = vmatpush.msra.mxu0 %v549
      %1079 = vmatmul.f32.gmra.mxu0 %v1061
      %v1080 = vpop.f32.mrf.mxu0
      %v1081 = vadd.f32 0.0, %v1080
      %1082 = vdwg.mxu0
      %1083 = vmatpush.msra.mxu0 0.0
      %1084 = vmatpush.msra.mxu0 0.0
      %1085 = vmatpush.msra.mxu0 %v576
      %1086 = vmatpush.msra.mxu0 %v574
      %1087 = vmatpush.msra.mxu0 %v572
      %1088 = vmatpush.msra.mxu0 %v570
      %1089 = vmatpush.msra.mxu0 %v568
      %1090 = vmatpush.msra.mxu0 %v566
      %1091 = vmatpush.msra.mxu0 %v564
      %1092 = vmatpush.msra.mxu0 %v562
      %1093 = vmatpush.msra.mxu0 %v560
      %1094 = vmatpush.msra.mxu0 %v558
      %1095 = vmatpush.msra.mxu0 %v556
      %1096 = vmatpush.msra.mxu0 %v554
      %1097 = vmatpush.msra.mxu0 %v552
      %1098 = vmatpush.msra.mxu0 %v550
      %1099 = vmatmul.f32.gmra.mxu0 %v1061
      %v1100 = vpop.f32.mrf.mxu0
      %v1101 = vadd.f32 0.0, %v1100
      %1102 = vdwg.mxu0
      %v1103 = vadd.f32 %v1056, %v1081
      %v1104 = vadd.f32 %v1057, %v1101
      %1105 = vmatpush.msra.mxu0 0.0
      %1106 = vmatpush.msra.mxu0 0.0
      %1107 = vmatpush.msra.mxu0 %v650
      %1108 = vmatpush.msra.mxu0 %v648
      %1109 = vmatpush.msra.mxu0 %v646
      %1110 = vmatpush.msra.mxu0 %v644
      %1111 = vmatpush.msra.mxu0 %v642
      %1112 = vmatpush.msra.mxu0 %v640
      %1113 = vmatpush.msra.mxu0 %v638
      %1114 = vmatpush.msra.mxu0 %v636
      %1115 = vmatpush.msra.mxu0 %v634
      %1116 = vmatpush.msra.mxu0 %v632
      %1117 = vmatpush.msra.mxu0 %v630
      %1118 = vmatpush.msra.mxu0 %v628
      %1119 = vmatpush.msra.mxu0 %v626
      %1120 = vmatpush.msra.mxu0 %v624
      %1121 = vmatmul.f32.gmra.mxu0 %v728
      %v1122 = vpop.f32.mrf.mxu0
      %v1123 = vadd.f32 0.0, %v1122
      %1124 = vdwg.mxu0
      %1125 = vmatpush.msra.mxu0 0.0
      %1126 = vmatpush.msra.mxu0 0.0
      %1127 = vmatpush.msra.mxu0 %v651
      %1128 = vmatpush.msra.mxu0 %v649
      %1129 = vmatpush.msra.mxu0 %v647
      %1130 = vmatpush.msra.mxu0 %v645
      %1131 = vmatpush.msra.mxu0 %v643
      %1132 = vmatpush.msra.mxu0 %v641
      %1133 = vmatpush.msra.mxu0 %v639
      %1134 = vmatpush.msra.mxu0 %v637
      %1135 = vmatpush.msra.mxu0 %v635
      %1136 = vmatpush.msra.mxu0 %v633
      %1137 = vmatpush.msra.mxu0 %v631
      %1138 = vmatpush.msra.mxu0 %v629
      %1139 = vmatpush.msra.mxu0 %v627
      %1140 = vmatpush.msra.mxu0 %v625
      %1141 = vmatmul.f32.gmra.mxu0 %v728
      %v1142 = vpop.f32.mrf.mxu0
      %v1143 = vadd.f32 0.0, %v1142
      %1144 = vdwg.mxu0
      %v1145 = vadd.f32 %v1103, %v1123
      %v1146 = vadd.f32 %v1104, %v1143
      %1147 = vmatpush.msra.mxu0 0.0
      %1148 = vmatpush.msra.mxu0 0.0
      %1149 = vmatpush.msra.mxu0 %v725
      %1150 = vmatpush.msra.mxu0 %v723
      %1151 = vmatpush.msra.mxu0 %v721
      %1152 = vmatpush.msra.mxu0 %v719
      %1153 = vmatpush.msra.mxu0 %v717
      %1154 = vmatpush.msra.mxu0 %v715
      %1155 = vmatpush.msra.mxu0 %v713
      %1156 = vmatpush.msra.mxu0 %v711
      %1157 = vmatpush.msra.mxu0 %v709
      %1158 = vmatpush.msra.mxu0 %v707
      %1159 = vmatpush.msra.mxu0 %v705
      %1160 = vmatpush.msra.mxu0 %v703
      %1161 = vmatpush.msra.mxu0 %v701
      %1162 = vmatpush.msra.mxu0 %v699
      %1163 = vmatmul.f32.gmra.mxu0 %v803
      %v1164 = vpop.f32.mrf.mxu0
      %v1165 = vadd.f32 0.0, %v1164
      %1166 = vdwg.mxu0
      %1167 = vmatpush.msra.mxu0 0.0
      %1168 = vmatpush.msra.mxu0 0.0
      %1169 = vmatpush.msra.mxu0 %v726
      %1170 = vmatpush.msra.mxu0 %v724
      %1171 = vmatpush.msra.mxu0 %v722
      %1172 = vmatpush.msra.mxu0 %v720
      %1173 = vmatpush.msra.mxu0 %v718
      %1174 = vmatpush.msra.mxu0 %v716
      %1175 = vmatpush.msra.mxu0 %v714
      %1176 = vmatpush.msra.mxu0 %v712
      %1177 = vmatpush.msra.mxu0 %v710
      %1178 = vmatpush.msra.mxu0 %v708
      %1179 = vmatpush.msra.mxu0 %v706
      %1180 = vmatpush.msra.mxu0 %v704
      %1181 = vmatpush.msra.mxu0 %v702
      %1182 = vmatpush.msra.mxu0 %v700
      %1183 = vmatmul.f32.gmra.mxu0 %v803
      %v1184 = vpop.f32.mrf.mxu0
      %v1185 = vadd.f32 0.0, %v1184
      %1186 = vdwg.mxu0
      %v1187 = vadd.f32 %v1145, %v1165
      %v1188 = vadd.f32 %v1146, %v1185
      %v1189 = vld [vmem:[%s927 + $0x1] sm:$0x7f]
      %v1191 = vsel %vm231, %v1189, 0
      %1193 = vmatpush.msra.mxu0 0.0
      %1194 = vmatpush.msra.mxu0 0.0
      %1195 = vmatpush.msra.mxu0 %v800
      %1196 = vmatpush.msra.mxu0 %v798
      %1197 = vmatpush.msra.mxu0 %v796
      %1198 = vmatpush.msra.mxu0 %v794
      %1199 = vmatpush.msra.mxu0 %v792
      %1200 = vmatpush.msra.mxu0 %v790
      %1201 = vmatpush.msra.mxu0 %v788
      %1202 = vmatpush.msra.mxu0 %v786
      %1203 = vmatpush.msra.mxu0 %v784
      %1204 = vmatpush.msra.mxu0 %v782
      %1205 = vmatpush.msra.mxu0 %v780
      %1206 = vmatpush.msra.mxu0 %v778
      %1207 = vmatpush.msra.mxu0 %v776
      %1208 = vmatpush.msra.mxu0 %v774
      %1209 = vmatmul.f32.gmra.mxu0 %v1191
      %v1210 = vpop.f32.mrf.mxu0
      %v1211 = vadd.f32 0.0, %v1210
      %1212 = vdwg.mxu0
      %1213 = vmatpush.msra.mxu0 0.0
      %1214 = vmatpush.msra.mxu0 0.0
      %1215 = vmatpush.msra.mxu0 %v801
      %1216 = vmatpush.msra.mxu0 %v799
      %1217 = vmatpush.msra.mxu0 %v797
      %1218 = vmatpush.msra.mxu0 %v795
      %1219 = vmatpush.msra.mxu0 %v793
      %1220 = vmatpush.msra.mxu0 %v791
      %1221 = vmatpush.msra.mxu0 %v789
      %1222 = vmatpush.msra.mxu0 %v787
      %1223 = vmatpush.msra.mxu0 %v785
      %1224 = vmatpush.msra.mxu0 %v783
      %1225 = vmatpush.msra.mxu0 %v781
      %1226 = vmatpush.msra.mxu0 %v779
      %1227 = vmatpush.msra.mxu0 %v777
      %1228 = vmatpush.msra.mxu0 %v775
      %1229 = vmatmul.f32.gmra.mxu0 %v1191
      %v1230 = vpop.f32.mrf.mxu0
      %v1231 = vadd.f32 0.0, %v1230
      %1232 = vdwg.mxu0
      %v1233 = vadd.f32 %v1187, %v1211
      %v1234 = vadd.f32 %v1188, %v1231
      %v1235 = vmax.f32 %v845, %v1233
      %v1236 = vmax.f32 %v846, %v1234
      %1237 = vmatpush.msra.mxu0 0.0
      %1238 = vmatpush.msra.mxu0 0.0
      %1239 = vmatpush.msra.mxu0 %v229
      %1240 = vmatpush.msra.mxu0 %v227
      %1241 = vmatpush.msra.mxu0 %v225
      %1242 = vmatpush.msra.mxu0 %v223
      %1243 = vmatpush.msra.mxu0 %v221
      %1244 = vmatpush.msra.mxu0 %v219
      %1245 = vmatpush.msra.mxu0 %v217
      %1246 = vmatpush.msra.mxu0 %v215
      %1247 = vmatpush.msra.mxu0 %v213
      %1248 = vmatpush.msra.mxu0 %v211
      %1249 = vmatpush.msra.mxu0 %v209
      %1250 = vmatpush.msra.mxu0 %v207
      %1251 = vmatpush.msra.mxu0 %v205
      %1252 = vmatpush.msra.mxu0 %v203
      %1253 = vmatmul.f32.gmra.mxu0 %v502
      %v1254 = vpop.f32.mrf.mxu0
      %v1255 = vadd.f32 0.0, %v1254
      %1256 = vdwg.mxu0
      %1257 = vmatpush.msra.mxu0 0.0
      %1258 = vmatpush.msra.mxu0 0.0
      %1259 = vmatpush.msra.mxu0 %v230
      %1260 = vmatpush.msra.mxu0 %v228
      %1261 = vmatpush.msra.mxu0 %v226
      %1262 = vmatpush.msra.mxu0 %v224
      %1263 = vmatpush.msra.mxu0 %v222
      %1264 = vmatpush.msra.mxu0 %v220
      %1265 = vmatpush.msra.mxu0 %v218
      %1266 = vmatpush.msra.mxu0 %v216
      %1267 = vmatpush.msra.mxu0 %v214
      %1268 = vmatpush.msra.mxu0 %v212
      %1269 = vmatpush.msra.mxu0 %v210
      %1270 = vmatpush.msra.mxu0 %v208
      %1271 = vmatpush.msra.mxu0 %v206
      %1272 = vmatpush.msra.mxu0 %v204
      %1273 = vmatmul.f32.gmra.mxu0 %v502
      %v1274 = vpop.f32.mrf.mxu0
      %v1275 = vadd.f32 0.0, %v1274
      %1276 = vdwg.mxu0
      %1277 = vmatpush.msra.mxu0 0.0
      %1278 = vmatpush.msra.mxu0 0.0
      %1279 = vmatpush.msra.mxu0 %v198
      %1280 = vmatpush.msra.mxu0 %v196
      %1281 = vmatpush.msra.mxu0 %v194
      %1282 = vmatpush.msra.mxu0 %v192
      %1283 = vmatpush.msra.mxu0 %v190
      %1284 = vmatpush.msra.mxu0 %v188
      %1285 = vmatpush.msra.mxu0 %v186
      %1286 = vmatpush.msra.mxu0 %v184
      %1287 = vmatpush.msra.mxu0 %v182
      %1288 = vmatpush.msra.mxu0 %v180
      %1289 = vmatpush.msra.mxu0 %v178
      %1290 = vmatpush.msra.mxu0 %v176
      %1291 = vmatpush.msra.mxu0 %v174
      %1292 = vmatpush.msra.mxu0 %v172
      %1293 = vmatmul.f32.gmra.mxu0 %v426
      %v1294 = vpop.f32.mrf.mxu0
      %v1295 = vadd.f32 %v1255, %v1294
      %1296 = vdwg.mxu0
      %1297 = vmatpush.msra.mxu0 0.0
      %1298 = vmatpush.msra.mxu0 0.0
      %1299 = vmatpush.msra.mxu0 %v199
      %1300 = vmatpush.msra.mxu0 %v197
      %1301 = vmatpush.msra.mxu0 %v195
      %1302 = vmatpush.msra.mxu0 %v193
      %1303 = vmatpush.msra.mxu0 %v191
      %1304 = vmatpush.msra.mxu0 %v189
      %1305 = vmatpush.msra.mxu0 %v187
      %1306 = vmatpush.msra.mxu0 %v185
      %1307 = vmatpush.msra.mxu0 %v183
      %1308 = vmatpush.msra.mxu0 %v181
      %1309 = vmatpush.msra.mxu0 %v179
      %1310 = vmatpush.msra.mxu0 %v177
      %1311 = vmatpush.msra.mxu0 %v175
      %1312 = vmatpush.msra.mxu0 %v173
      %1313 = vmatmul.f32.gmra.mxu0 %v426
      %v1314 = vpop.f32.mrf.mxu0
      %v1315 = vadd.f32 %v1275, %v1314
      %1316 = vdwg.mxu0
      %1317 = vmatpush.msra.mxu0 0.0
      %1318 = vmatpush.msra.mxu0 0.0
      %1319 = vmatpush.msra.mxu0 %v347
      %1320 = vmatpush.msra.mxu0 %v345
      %1321 = vmatpush.msra.mxu0 %v343
      %1322 = vmatpush.msra.mxu0 %v341
      %1323 = vmatpush.msra.mxu0 %v339
      %1324 = vmatpush.msra.mxu0 %v337
      %1325 = vmatpush.msra.mxu0 %v335
      %1326 = vmatpush.msra.mxu0 %v333
      %1327 = vmatpush.msra.mxu0 %v331
      %1328 = vmatpush.msra.mxu0 %v329
      %1329 = vmatpush.msra.mxu0 %v327
      %1330 = vmatpush.msra.mxu0 %v325
      %1331 = vmatpush.msra.mxu0 %v323
      %1332 = vmatpush.msra.mxu0 %v321
      %1333 = vmatmul.f32.gmra.mxu0 %v578
      %v1334 = vpop.f32.mrf.mxu0
      %v1335 = vadd.f32 0.0, %v1334
      %1336 = vdwg.mxu0
      %1337 = vmatpush.msra.mxu0 0.0
      %1338 = vmatpush.msra.mxu0 0.0
      %1339 = vmatpush.msra.mxu0 %v348
      %1340 = vmatpush.msra.mxu0 %v346
      %1341 = vmatpush.msra.mxu0 %v344
      %1342 = vmatpush.msra.mxu0 %v342
      %1343 = vmatpush.msra.mxu0 %v340
      %1344 = vmatpush.msra.mxu0 %v338
      %1345 = vmatpush.msra.mxu0 %v336
      %1346 = vmatpush.msra.mxu0 %v334
      %1347 = vmatpush.msra.mxu0 %v332
      %1348 = vmatpush.msra.mxu0 %v330
      %1349 = vmatpush.msra.mxu0 %v328
      %1350 = vmatpush.msra.mxu0 %v326
      %1351 = vmatpush.msra.mxu0 %v324
      %1352 = vmatpush.msra.mxu0 %v322
      %1353 = vmatmul.f32.gmra.mxu0 %v578
      %v1354 = vpop.f32.mrf.mxu0
      %v1355 = vadd.f32 0.0, %v1354
      %1356 = vdwg.mxu0
      %v1357 = vadd.f32 %v1295, %v1335
      %v1358 = vadd.f32 %v1315, %v1355
      %1359 = vmatpush.msra.mxu0 0.0
      %1360 = vmatpush.msra.mxu0 0.0
      %1361 = vmatpush.msra.mxu0 %v423
      %1362 = vmatpush.msra.mxu0 %v421
      %1363 = vmatpush.msra.mxu0 %v419
      %1364 = vmatpush.msra.mxu0 %v417
      %1365 = vmatpush.msra.mxu0 %v415
      %1366 = vmatpush.msra.mxu0 %v413
      %1367 = vmatpush.msra.mxu0 %v411
      %1368 = vmatpush.msra.mxu0 %v409
      %1369 = vmatpush.msra.mxu0 %v407
      %1370 = vmatpush.msra.mxu0 %v405
      %1371 = vmatpush.msra.mxu0 %v403
      %1372 = vmatpush.msra.mxu0 %v401
      %1373 = vmatpush.msra.mxu0 %v399
      %1374 = vmatpush.msra.mxu0 %v397
      %1375 = vmatmul.f32.gmra.mxu0 %v653
      %v1376 = vpop.f32.mrf.mxu0
      %v1377 = vadd.f32 0.0, %v1376
      %1378 = vdwg.mxu0
      %1379 = vmatpush.msra.mxu0 0.0
      %1380 = vmatpush.msra.mxu0 0.0
      %1381 = vmatpush.msra.mxu0 %v424
      %1382 = vmatpush.msra.mxu0 %v422
      %1383 = vmatpush.msra.mxu0 %v420
      %1384 = vmatpush.msra.mxu0 %v418
      %1385 = vmatpush.msra.mxu0 %v416
      %1386 = vmatpush.msra.mxu0 %v414
      %1387 = vmatpush.msra.mxu0 %v412
      %1388 = vmatpush.msra.mxu0 %v410
      %1389 = vmatpush.msra.mxu0 %v408
      %1390 = vmatpush.msra.mxu0 %v406
      %1391 = vmatpush.msra.mxu0 %v404
      %1392 = vmatpush.msra.mxu0 %v402
      %1393 = vmatpush.msra.mxu0 %v400
      %1394 = vmatpush.msra.mxu0 %v398
      %1395 = vmatmul.f32.gmra.mxu0 %v653
      %v1396 = vpop.f32.mrf.mxu0
      %v1397 = vadd.f32 0.0, %v1396
      %1398 = vdwg.mxu0
      %v1399 = vadd.f32 %v1357, %v1377
      %v1400 = vadd.f32 %v1358, %v1397
      %1401 = vmatpush.msra.mxu0 0.0
      %1402 = vmatpush.msra.mxu0 0.0
      %1403 = vmatpush.msra.mxu0 %v499
      %1404 = vmatpush.msra.mxu0 %v497
      %1405 = vmatpush.msra.mxu0 %v495
      %1406 = vmatpush.msra.mxu0 %v493
      %1407 = vmatpush.msra.mxu0 %v491
      %1408 = vmatpush.msra.mxu0 %v489
      %1409 = vmatpush.msra.mxu0 %v487
      %1410 = vmatpush.msra.mxu0 %v485
      %1411 = vmatpush.msra.mxu0 %v483
      %1412 = vmatpush.msra.mxu0 %v481
      %1413 = vmatpush.msra.mxu0 %v479
      %1414 = vmatpush.msra.mxu0 %v477
      %1415 = vmatpush.msra.mxu0 %v475
      %1416 = vmatpush.msra.mxu0 %v473
      %1417 = vmatmul.f32.gmra.mxu0 %v728
      %v1418 = vpop.f32.mrf.mxu0
      %v1419 = vadd.f32 0.0, %v1418
      %1420 = vdwg.mxu0
      %1421 = vmatpush.msra.mxu0 0.0
      %1422 = vmatpush.msra.mxu0 0.0
      %1423 = vmatpush.msra.mxu0 %v500
      %1424 = vmatpush.msra.mxu0 %v498
      %1425 = vmatpush.msra.mxu0 %v496
      %1426 = vmatpush.msra.mxu0 %v494
      %1427 = vmatpush.msra.mxu0 %v492
      %1428 = vmatpush.msra.mxu0 %v490
      %1429 = vmatpush.msra.mxu0 %v488
      %1430 = vmatpush.msra.mxu0 %v486
      %1431 = vmatpush.msra.mxu0 %v484
      %1432 = vmatpush.msra.mxu0 %v482
      %1433 = vmatpush.msra.mxu0 %v480
      %1434 = vmatpush.msra.mxu0 %v478
      %1435 = vmatpush.msra.mxu0 %v476
      %1436 = vmatpush.msra.mxu0 %v474
      %1437 = vmatmul.f32.gmra.mxu0 %v728
      %v1438 = vpop.f32.mrf.mxu0
      %v1439 = vadd.f32 0.0, %v1438
      %1440 = vdwg.mxu0
      %v1441 = vadd.f32 %v1399, %v1419
      %v1442 = vadd.f32 %v1400, %v1439
      %1443 = vmatpush.msra.mxu0 0.0
      %1444 = vmatpush.msra.mxu0 0.0
      %1445 = vmatpush.msra.mxu0 %v575
      %1446 = vmatpush.msra.mxu0 %v573
      %1447 = vmatpush.msra.mxu0 %v571
      %1448 = vmatpush.msra.mxu0 %v569
      %1449 = vmatpush.msra.mxu0 %v567
      %1450 = vmatpush.msra.mxu0 %v565
      %1451 = vmatpush.msra.mxu0 %v563
      %1452 = vmatpush.msra.mxu0 %v561
      %1453 = vmatpush.msra.mxu0 %v559
      %1454 = vmatpush.msra.mxu0 %v557
      %1455 = vmatpush.msra.mxu0 %v555
      %1456 = vmatpush.msra.mxu0 %v553
      %1457 = vmatpush.msra.mxu0 %v551
      %1458 = vmatpush.msra.mxu0 %v549
      %1459 = vmatmul.f32.gmra.mxu0 %v803
      %v1460 = vpop.f32.mrf.mxu0
      %v1461 = vadd.f32 0.0, %v1460
      %1462 = vdwg.mxu0
      %1463 = vmatpush.msra.mxu0 0.0
      %1464 = vmatpush.msra.mxu0 0.0
      %1465 = vmatpush.msra.mxu0 %v576
      %1466 = vmatpush.msra.mxu0 %v574
      %1467 = vmatpush.msra.mxu0 %v572
      %1468 = vmatpush.msra.mxu0 %v570
      %1469 = vmatpush.msra.mxu0 %v568
      %1470 = vmatpush.msra.mxu0 %v566
      %1471 = vmatpush.msra.mxu0 %v564
      %1472 = vmatpush.msra.mxu0 %v562
      %1473 = vmatpush.msra.mxu0 %v560
      %1474 = vmatpush.msra.mxu0 %v558
      %1475 = vmatpush.msra.mxu0 %v556
      %1476 = vmatpush.msra.mxu0 %v554
      %1477 = vmatpush.msra.mxu0 %v552
      %1478 = vmatpush.msra.mxu0 %v550
      %1479 = vmatmul.f32.gmra.mxu0 %v803
      %v1480 = vpop.f32.mrf.mxu0
      %v1481 = vadd.f32 0.0, %v1480
      %1482 = vdwg.mxu0
      %v1483 = vadd.f32 %v1441, %v1461
      %v1484 = vadd.f32 %v1442, %v1481
      %v1485 = vld [vmem:[%s394 + $0x1] sm:$0x7f]
      %v1487 = vsel %vm231, %v1485, 0
      %1489 = vmatpush.msra.mxu0 0.0
      %1490 = vmatpush.msra.mxu0 0.0
      %1491 = vmatpush.msra.mxu0 %v650
      %1492 = vmatpush.msra.mxu0 %v648
      %1493 = vmatpush.msra.mxu0 %v646
      %1494 = vmatpush.msra.mxu0 %v644
      %1495 = vmatpush.msra.mxu0 %v642
      %1496 = vmatpush.msra.mxu0 %v640
      %1497 = vmatpush.msra.mxu0 %v638
      %1498 = vmatpush.msra.mxu0 %v636
      %1499 = vmatpush.msra.mxu0 %v634
      %1500 = vmatpush.msra.mxu0 %v632
      %1501 = vmatpush.msra.mxu0 %v630
      %1502 = vmatpush.msra.mxu0 %v628
      %1503 = vmatpush.msra.mxu0 %v626
      %1504 = vmatpush.msra.mxu0 %v624
      %1505 = vmatmul.f32.gmra.mxu0 %v1487
      %v1506 = vpop.f32.mrf.mxu0
      %v1507 = vadd.f32 0.0, %v1506
      %1508 = vdwg.mxu0
      %1509 = vmatpush.msra.mxu0 0.0
      %1510 = vmatpush.msra.mxu0 0.0
      %1511 = vmatpush.msra.mxu0 %v651
      %1512 = vmatpush.msra.mxu0 %v649
      %1513 = vmatpush.msra.mxu0 %v647
      %1514 = vmatpush.msra.mxu0 %v645
      %1515 = vmatpush.msra.mxu0 %v643
      %1516 = vmatpush.msra.mxu0 %v641
      %1517 = vmatpush.msra.mxu0 %v639
      %1518 = vmatpush.msra.mxu0 %v637
      %1519 = vmatpush.msra.mxu0 %v635
      %1520 = vmatpush.msra.mxu0 %v633
      %1521 = vmatpush.msra.mxu0 %v631
      %1522 = vmatpush.msra.mxu0 %v629
      %1523 = vmatpush.msra.mxu0 %v627
      %1524 = vmatpush.msra.mxu0 %v625
      %1525 = vmatmul.f32.gmra.mxu0 %v1487
      %v1526 = vpop.f32.mrf.mxu0
      %v1527 = vadd.f32 0.0, %v1526
      %1528 = vdwg.mxu0
      %v1529 = vadd.f32 %v1483, %v1507
      %v1530 = vadd.f32 %v1484, %v1527
      %v1531 = vld [vmem:[%s470 + $0x1] sm:$0x7f]
      %v1533 = vsel %vm231, %v1531, 0
      %1535 = vmatpush.msra.mxu0 0.0
      %1536 = vmatpush.msra.mxu0 0.0
      %1537 = vmatpush.msra.mxu0 %v725
      %1538 = vmatpush.msra.mxu0 %v723
      %1539 = vmatpush.msra.mxu0 %v721
      %1540 = vmatpush.msra.mxu0 %v719
      %1541 = vmatpush.msra.mxu0 %v717
      %1542 = vmatpush.msra.mxu0 %v715
      %1543 = vmatpush.msra.mxu0 %v713
      %1544 = vmatpush.msra.mxu0 %v711
      %1545 = vmatpush.msra.mxu0 %v709
      %1546 = vmatpush.msra.mxu0 %v707
      %1547 = vmatpush.msra.mxu0 %v705
      %1548 = vmatpush.msra.mxu0 %v703
      %1549 = vmatpush.msra.mxu0 %v701
      %1550 = vmatpush.msra.mxu0 %v699
      %1551 = vmatmul.f32.gmra.mxu0 %v1533
      %v1552 = vpop.f32.mrf.mxu0
      %v1553 = vadd.f32 0.0, %v1552
      %1554 = vdwg.mxu0
      %1555 = vmatpush.msra.mxu0 0.0
      %1556 = vmatpush.msra.mxu0 0.0
      %1557 = vmatpush.msra.mxu0 %v726
      %1558 = vmatpush.msra.mxu0 %v724
      %1559 = vmatpush.msra.mxu0 %v722
      %1560 = vmatpush.msra.mxu0 %v720
      %1561 = vmatpush.msra.mxu0 %v718
      %1562 = vmatpush.msra.mxu0 %v716
      %1563 = vmatpush.msra.mxu0 %v714
      %1564 = vmatpush.msra.mxu0 %v712
      %1565 = vmatpush.msra.mxu0 %v710
      %1566 = vmatpush.msra.mxu0 %v708
      %1567 = vmatpush.msra.mxu0 %v706
      %1568 = vmatpush.msra.mxu0 %v704
      %1569 = vmatpush.msra.mxu0 %v702
      %1570 = vmatpush.msra.mxu0 %v700
      %1571 = vmatmul.f32.gmra.mxu0 %v1533
      %v1572 = vpop.f32.mrf.mxu0
      %v1573 = vadd.f32 0.0, %v1572
      %1574 = vdwg.mxu0
      %v1575 = vadd.f32 %v1529, %v1553
      %v1576 = vadd.f32 %v1530, %v1573
      %v1577 = vld [vmem:[%s546 + $0x1] sm:$0x7f]
      %v1579 = vsel %vm231, %v1577, 0
      %1581 = vmatpush.msra.mxu0 0.0
      %1582 = vmatpush.msra.mxu0 0.0
      %1583 = vmatpush.msra.mxu0 %v800
      %1584 = vmatpush.msra.mxu0 %v798
      %1585 = vmatpush.msra.mxu0 %v796
      %1586 = vmatpush.msra.mxu0 %v794
      %1587 = vmatpush.msra.mxu0 %v792
      %1588 = vmatpush.msra.mxu0 %v790
      %1589 = vmatpush.msra.mxu0 %v788
      %1590 = vmatpush.msra.mxu0 %v786
      %1591 = vmatpush.msra.mxu0 %v784
      %1592 = vmatpush.msra.mxu0 %v782
      %1593 = vmatpush.msra.mxu0 %v780
      %1594 = vmatpush.msra.mxu0 %v778
      %1595 = vmatpush.msra.mxu0 %v776
      %1596 = vmatpush.msra.mxu0 %v774
      %1597 = vmatmul.f32.gmra.mxu0 %v1579
      %v1598 = vpop.f32.mrf.mxu0
      %v1599 = vadd.f32 0.0, %v1598
      %1600 = vdwg.mxu0
      %1601 = vmatpush.msra.mxu0 0.0
      %1602 = vmatpush.msra.mxu0 0.0
      %1603 = vmatpush.msra.mxu0 %v801
      %1604 = vmatpush.msra.mxu0 %v799
      %1605 = vmatpush.msra.mxu0 %v797
      %1606 = vmatpush.msra.mxu0 %v795
      %1607 = vmatpush.msra.mxu0 %v793
      %1608 = vmatpush.msra.mxu0 %v791
      %1609 = vmatpush.msra.mxu0 %v789
      %1610 = vmatpush.msra.mxu0 %v787
      %1611 = vmatpush.msra.mxu0 %v785
      %1612 = vmatpush.msra.mxu0 %v783
      %1613 = vmatpush.msra.mxu0 %v781
      %1614 = vmatpush.msra.mxu0 %v779
      %1615 = vmatpush.msra.mxu0 %v777
      %1616 = vmatpush.msra.mxu0 %v775
      %1617 = vmatmul.f32.gmra.mxu0 %v1579
      %v1618 = vpop.f32.mrf.mxu0
      %v1619 = vadd.f32 0.0, %v1618
      %1620 = vdwg.mxu0
      %v1621 = vadd.f32 %v1575, %v1599
      %v1622 = vadd.f32 %v1576, %v1619
      %v1623 = vmax.f32 %v1235, %v1621
      %v1624 = vmax.f32 %v1236, %v1622
      %1625 = vmatpush.msra.mxu0 0.0
      %1626 = vmatpush.msra.mxu0 0.0
      %1627 = vmatpush.msra.mxu0 %v229
      %1628 = vmatpush.msra.mxu0 %v227
      %1629 = vmatpush.msra.mxu0 %v225
      %1630 = vmatpush.msra.mxu0 %v223
      %1631 = vmatpush.msra.mxu0 %v221
      %1632 = vmatpush.msra.mxu0 %v219
      %1633 = vmatpush.msra.mxu0 %v217
      %1634 = vmatpush.msra.mxu0 %v215
      %1635 = vmatpush.msra.mxu0 %v213
      %1636 = vmatpush.msra.mxu0 %v211
      %1637 = vmatpush.msra.mxu0 %v209
      %1638 = vmatpush.msra.mxu0 %v207
      %1639 = vmatpush.msra.mxu0 %v205
      %1640 = vmatpush.msra.mxu0 %v203
      %1641 = vmatmul.f32.gmra.mxu0 %v578
      %v1642 = vpop.f32.mrf.mxu0
      %v1643 = vadd.f32 0.0, %v1642
      %1644 = vdwg.mxu0
      %1645 = vmatpush.msra.mxu0 0.0
      %1646 = vmatpush.msra.mxu0 0.0
      %1647 = vmatpush.msra.mxu0 %v230
      %1648 = vmatpush.msra.mxu0 %v228
      %1649 = vmatpush.msra.mxu0 %v226
      %1650 = vmatpush.msra.mxu0 %v224
      %1651 = vmatpush.msra.mxu0 %v222
      %1652 = vmatpush.msra.mxu0 %v220
      %1653 = vmatpush.msra.mxu0 %v218
      %1654 = vmatpush.msra.mxu0 %v216
      %1655 = vmatpush.msra.mxu0 %v214
      %1656 = vmatpush.msra.mxu0 %v212
      %1657 = vmatpush.msra.mxu0 %v210
      %1658 = vmatpush.msra.mxu0 %v208
      %1659 = vmatpush.msra.mxu0 %v206
      %1660 = vmatpush.msra.mxu0 %v204
      %1661 = vmatmul.f32.gmra.mxu0 %v578
      %v1662 = vpop.f32.mrf.mxu0
      %v1663 = vadd.f32 0.0, %v1662
      %1664 = vdwg.mxu0
      %1665 = vmatpush.msra.mxu0 0.0
      %1666 = vmatpush.msra.mxu0 0.0
      %1667 = vmatpush.msra.mxu0 %v198
      %1668 = vmatpush.msra.mxu0 %v196
      %1669 = vmatpush.msra.mxu0 %v194
      %1670 = vmatpush.msra.mxu0 %v192
      %1671 = vmatpush.msra.mxu0 %v190
      %1672 = vmatpush.msra.mxu0 %v188
      %1673 = vmatpush.msra.mxu0 %v186
      %1674 = vmatpush.msra.mxu0 %v184
      %1675 = vmatpush.msra.mxu0 %v182
      %1676 = vmatpush.msra.mxu0 %v180
      %1677 = vmatpush.msra.mxu0 %v178
      %1678 = vmatpush.msra.mxu0 %v176
      %1679 = vmatpush.msra.mxu0 %v174
      %1680 = vmatpush.msra.mxu0 %v172
      %1681 = vmatmul.f32.gmra.mxu0 %v502
      %v1682 = vpop.f32.mrf.mxu0
      %v1683 = vadd.f32 %v1643, %v1682
      %1684 = vdwg.mxu0
      %1685 = vmatpush.msra.mxu0 0.0
      %1686 = vmatpush.msra.mxu0 0.0
      %1687 = vmatpush.msra.mxu0 %v199
      %1688 = vmatpush.msra.mxu0 %v197
      %1689 = vmatpush.msra.mxu0 %v195
      %1690 = vmatpush.msra.mxu0 %v193
      %1691 = vmatpush.msra.mxu0 %v191
      %1692 = vmatpush.msra.mxu0 %v189
      %1693 = vmatpush.msra.mxu0 %v187
      %1694 = vmatpush.msra.mxu0 %v185
      %1695 = vmatpush.msra.mxu0 %v183
      %1696 = vmatpush.msra.mxu0 %v181
      %1697 = vmatpush.msra.mxu0 %v179
      %1698 = vmatpush.msra.mxu0 %v177
      %1699 = vmatpush.msra.mxu0 %v175
      %1700 = vmatpush.msra.mxu0 %v173
      %1701 = vmatmul.f32.gmra.mxu0 %v502
      %v1702 = vpop.f32.mrf.mxu0
      %v1703 = vadd.f32 %v1663, %v1702
      %1704 = vdwg.mxu0
      %1705 = vmatpush.msra.mxu0 0.0
      %1706 = vmatpush.msra.mxu0 0.0
      %1707 = vmatpush.msra.mxu0 %v347
      %1708 = vmatpush.msra.mxu0 %v345
      %1709 = vmatpush.msra.mxu0 %v343
      %1710 = vmatpush.msra.mxu0 %v341
      %1711 = vmatpush.msra.mxu0 %v339
      %1712 = vmatpush.msra.mxu0 %v337
      %1713 = vmatpush.msra.mxu0 %v335
      %1714 = vmatpush.msra.mxu0 %v333
      %1715 = vmatpush.msra.mxu0 %v331
      %1716 = vmatpush.msra.mxu0 %v329
      %1717 = vmatpush.msra.mxu0 %v327
      %1718 = vmatpush.msra.mxu0 %v325
      %1719 = vmatpush.msra.mxu0 %v323
      %1720 = vmatpush.msra.mxu0 %v321
      %1721 = vmatmul.f32.gmra.mxu0 %v1061
      %v1722 = vpop.f32.mrf.mxu0
      %v1723 = vadd.f32 0.0, %v1722
      %1724 = vdwg.mxu0
      %1725 = vmatpush.msra.mxu0 0.0
      %1726 = vmatpush.msra.mxu0 0.0
      %1727 = vmatpush.msra.mxu0 %v348
      %1728 = vmatpush.msra.mxu0 %v346
      %1729 = vmatpush.msra.mxu0 %v344
      %1730 = vmatpush.msra.mxu0 %v342
      %1731 = vmatpush.msra.mxu0 %v340
      %1732 = vmatpush.msra.mxu0 %v338
      %1733 = vmatpush.msra.mxu0 %v336
      %1734 = vmatpush.msra.mxu0 %v334
      %1735 = vmatpush.msra.mxu0 %v332
      %1736 = vmatpush.msra.mxu0 %v330
      %1737 = vmatpush.msra.mxu0 %v328
      %1738 = vmatpush.msra.mxu0 %v326
      %1739 = vmatpush.msra.mxu0 %v324
      %1740 = vmatpush.msra.mxu0 %v322
      %1741 = vmatmul.f32.gmra.mxu0 %v1061
      %v1742 = vpop.f32.mrf.mxu0
      %v1743 = vadd.f32 0.0, %v1742
      %1744 = vdwg.mxu0
      %v1745 = vadd.f32 %v1683, %v1723
      %v1746 = vadd.f32 %v1703, %v1743
      %1747 = vmatpush.msra.mxu0 0.0
      %1748 = vmatpush.msra.mxu0 0.0
      %1749 = vmatpush.msra.mxu0 %v423
      %1750 = vmatpush.msra.mxu0 %v421
      %1751 = vmatpush.msra.mxu0 %v419
      %1752 = vmatpush.msra.mxu0 %v417
      %1753 = vmatpush.msra.mxu0 %v415
      %1754 = vmatpush.msra.mxu0 %v413
      %1755 = vmatpush.msra.mxu0 %v411
      %1756 = vmatpush.msra.mxu0 %v409
      %1757 = vmatpush.msra.mxu0 %v407
      %1758 = vmatpush.msra.mxu0 %v405
      %1759 = vmatpush.msra.mxu0 %v403
      %1760 = vmatpush.msra.mxu0 %v401
      %1761 = vmatpush.msra.mxu0 %v399
      %1762 = vmatpush.msra.mxu0 %v397
      %1763 = vmatmul.f32.gmra.mxu0 %v728
      %v1764 = vpop.f32.mrf.mxu0
      %v1765 = vadd.f32 0.0, %v1764
      %1766 = vdwg.mxu0
      %1767 = vmatpush.msra.mxu0 0.0
      %1768 = vmatpush.msra.mxu0 0.0
      %1769 = vmatpush.msra.mxu0 %v424
      %1770 = vmatpush.msra.mxu0 %v422
      %1771 = vmatpush.msra.mxu0 %v420
      %1772 = vmatpush.msra.mxu0 %v418
      %1773 = vmatpush.msra.mxu0 %v416
      %1774 = vmatpush.msra.mxu0 %v414
      %1775 = vmatpush.msra.mxu0 %v412
      %1776 = vmatpush.msra.mxu0 %v410
      %1777 = vmatpush.msra.mxu0 %v408
      %1778 = vmatpush.msra.mxu0 %v406
      %1779 = vmatpush.msra.mxu0 %v404
      %1780 = vmatpush.msra.mxu0 %v402
      %1781 = vmatpush.msra.mxu0 %v400
      %1782 = vmatpush.msra.mxu0 %v398
      %1783 = vmatmul.f32.gmra.mxu0 %v728
      %v1784 = vpop.f32.mrf.mxu0
      %v1785 = vadd.f32 0.0, %v1784
      %1786 = vdwg.mxu0
      %v1787 = vadd.f32 %v1745, %v1765
      %v1788 = vadd.f32 %v1746, %v1785
      %1789 = vmatpush.msra.mxu0 0.0
      %1790 = vmatpush.msra.mxu0 0.0
      %1791 = vmatpush.msra.mxu0 %v499
      %1792 = vmatpush.msra.mxu0 %v497
      %1793 = vmatpush.msra.mxu0 %v495
      %1794 = vmatpush.msra.mxu0 %v493
      %1795 = vmatpush.msra.mxu0 %v491
      %1796 = vmatpush.msra.mxu0 %v489
      %1797 = vmatpush.msra.mxu0 %v487
      %1798 = vmatpush.msra.mxu0 %v485
      %1799 = vmatpush.msra.mxu0 %v483
      %1800 = vmatpush.msra.mxu0 %v481
      %1801 = vmatpush.msra.mxu0 %v479
      %1802 = vmatpush.msra.mxu0 %v477
      %1803 = vmatpush.msra.mxu0 %v475
      %1804 = vmatpush.msra.mxu0 %v473
      %1805 = vmatmul.f32.gmra.mxu0 %v803
      %v1806 = vpop.f32.mrf.mxu0
      %v1807 = vadd.f32 0.0, %v1806
      %1808 = vdwg.mxu0
      %1809 = vmatpush.msra.mxu0 0.0
      %1810 = vmatpush.msra.mxu0 0.0
      %1811 = vmatpush.msra.mxu0 %v500
      %1812 = vmatpush.msra.mxu0 %v498
      %1813 = vmatpush.msra.mxu0 %v496
      %1814 = vmatpush.msra.mxu0 %v494
      %1815 = vmatpush.msra.mxu0 %v492
      %1816 = vmatpush.msra.mxu0 %v490
      %1817 = vmatpush.msra.mxu0 %v488
      %1818 = vmatpush.msra.mxu0 %v486
      %1819 = vmatpush.msra.mxu0 %v484
      %1820 = vmatpush.msra.mxu0 %v482
      %1821 = vmatpush.msra.mxu0 %v480
      %1822 = vmatpush.msra.mxu0 %v478
      %1823 = vmatpush.msra.mxu0 %v476
      %1824 = vmatpush.msra.mxu0 %v474
      %1825 = vmatmul.f32.gmra.mxu0 %v803
      %v1826 = vpop.f32.mrf.mxu0
      %v1827 = vadd.f32 0.0, %v1826
      %1828 = vdwg.mxu0
      %v1829 = vadd.f32 %v1787, %v1807
      %v1830 = vadd.f32 %v1788, %v1827
      %1831 = vmatpush.msra.mxu0 0.0
      %1832 = vmatpush.msra.mxu0 0.0
      %1833 = vmatpush.msra.mxu0 %v575
      %1834 = vmatpush.msra.mxu0 %v573
      %1835 = vmatpush.msra.mxu0 %v571
      %1836 = vmatpush.msra.mxu0 %v569
      %1837 = vmatpush.msra.mxu0 %v567
      %1838 = vmatpush.msra.mxu0 %v565
      %1839 = vmatpush.msra.mxu0 %v563
      %1840 = vmatpush.msra.mxu0 %v561
      %1841 = vmatpush.msra.mxu0 %v559
      %1842 = vmatpush.msra.mxu0 %v557
      %1843 = vmatpush.msra.mxu0 %v555
      %1844 = vmatpush.msra.mxu0 %v553
      %1845 = vmatpush.msra.mxu0 %v551
      %1846 = vmatpush.msra.mxu0 %v549
      %1847 = vmatmul.f32.gmra.mxu0 %v1191
      %v1848 = vpop.f32.mrf.mxu0
      %v1849 = vadd.f32 0.0, %v1848
      %1850 = vdwg.mxu0
      %1851 = vmatpush.msra.mxu0 0.0
      %1852 = vmatpush.msra.mxu0 0.0
      %1853 = vmatpush.msra.mxu0 %v576
      %1854 = vmatpush.msra.mxu0 %v574
      %1855 = vmatpush.msra.mxu0 %v572
      %1856 = vmatpush.msra.mxu0 %v570
      %1857 = vmatpush.msra.mxu0 %v568
      %1858 = vmatpush.msra.mxu0 %v566
      %1859 = vmatpush.msra.mxu0 %v564
      %1860 = vmatpush.msra.mxu0 %v562
      %1861 = vmatpush.msra.mxu0 %v560
      %1862 = vmatpush.msra.mxu0 %v558
      %1863 = vmatpush.msra.mxu0 %v556
      %1864 = vmatpush.msra.mxu0 %v554
      %1865 = vmatpush.msra.mxu0 %v552
      %1866 = vmatpush.msra.mxu0 %v550
      %1867 = vmatmul.f32.gmra.mxu0 %v1191
      %v1868 = vpop.f32.mrf.mxu0
      %v1869 = vadd.f32 0.0, %v1868
      %1870 = vdwg.mxu0
      %v1871 = vadd.f32 %v1829, %v1849
      %v1872 = vadd.f32 %v1830, %v1869
      %1873 = vmatpush.msra.mxu0 0.0
      %1874 = vmatpush.msra.mxu0 0.0
      %1875 = vmatpush.msra.mxu0 %v650
      %1876 = vmatpush.msra.mxu0 %v648
      %1877 = vmatpush.msra.mxu0 %v646
      %1878 = vmatpush.msra.mxu0 %v644
      %1879 = vmatpush.msra.mxu0 %v642
      %1880 = vmatpush.msra.mxu0 %v640
      %1881 = vmatpush.msra.mxu0 %v638
      %1882 = vmatpush.msra.mxu0 %v636
      %1883 = vmatpush.msra.mxu0 %v634
      %1884 = vmatpush.msra.mxu0 %v632
      %1885 = vmatpush.msra.mxu0 %v630
      %1886 = vmatpush.msra.mxu0 %v628
      %1887 = vmatpush.msra.mxu0 %v626
      %1888 = vmatpush.msra.mxu0 %v624
      %1889 = vmatmul.f32.gmra.mxu0 %v1533
      %v1890 = vpop.f32.mrf.mxu0
      %v1891 = vadd.f32 0.0, %v1890
      %1892 = vdwg.mxu0
      %1893 = vmatpush.msra.mxu0 0.0
      %1894 = vmatpush.msra.mxu0 0.0
      %1895 = vmatpush.msra.mxu0 %v651
      %1896 = vmatpush.msra.mxu0 %v649
      %1897 = vmatpush.msra.mxu0 %v647
      %1898 = vmatpush.msra.mxu0 %v645
      %1899 = vmatpush.msra.mxu0 %v643
      %1900 = vmatpush.msra.mxu0 %v641
      %1901 = vmatpush.msra.mxu0 %v639
      %1902 = vmatpush.msra.mxu0 %v637
      %1903 = vmatpush.msra.mxu0 %v635
      %1904 = vmatpush.msra.mxu0 %v633
      %1905 = vmatpush.msra.mxu0 %v631
      %1906 = vmatpush.msra.mxu0 %v629
      %1907 = vmatpush.msra.mxu0 %v627
      %1908 = vmatpush.msra.mxu0 %v625
      %1909 = vmatmul.f32.gmra.mxu0 %v1533
      %v1910 = vpop.f32.mrf.mxu0
      %v1911 = vadd.f32 0.0, %v1910
      %1912 = vdwg.mxu0
      %v1913 = vadd.f32 %v1871, %v1891
      %v1914 = vadd.f32 %v1872, %v1911
      %1915 = vmatpush.msra.mxu0 0.0
      %1916 = vmatpush.msra.mxu0 0.0
      %1917 = vmatpush.msra.mxu0 %v725
      %1918 = vmatpush.msra.mxu0 %v723
      %1919 = vmatpush.msra.mxu0 %v721
      %1920 = vmatpush.msra.mxu0 %v719
      %1921 = vmatpush.msra.mxu0 %v717
      %1922 = vmatpush.msra.mxu0 %v715
      %1923 = vmatpush.msra.mxu0 %v713
      %1924 = vmatpush.msra.mxu0 %v711
      %1925 = vmatpush.msra.mxu0 %v709
      %1926 = vmatpush.msra.mxu0 %v707
      %1927 = vmatpush.msra.mxu0 %v705
      %1928 = vmatpush.msra.mxu0 %v703
      %1929 = vmatpush.msra.mxu0 %v701
      %1930 = vmatpush.msra.mxu0 %v699
      %1931 = vmatmul.f32.gmra.mxu0 %v1579
      %v1932 = vpop.f32.mrf.mxu0
      %v1933 = vadd.f32 0.0, %v1932
      %1934 = vdwg.mxu0
      %1935 = vmatpush.msra.mxu0 0.0
      %1936 = vmatpush.msra.mxu0 0.0
      %1937 = vmatpush.msra.mxu0 %v726
      %1938 = vmatpush.msra.mxu0 %v724
      %1939 = vmatpush.msra.mxu0 %v722
      %1940 = vmatpush.msra.mxu0 %v720
      %1941 = vmatpush.msra.mxu0 %v718
      %1942 = vmatpush.msra.mxu0 %v716
      %1943 = vmatpush.msra.mxu0 %v714
      %1944 = vmatpush.msra.mxu0 %v712
      %1945 = vmatpush.msra.mxu0 %v710
      %1946 = vmatpush.msra.mxu0 %v708
      %1947 = vmatpush.msra.mxu0 %v706
      %1948 = vmatpush.msra.mxu0 %v704
      %1949 = vmatpush.msra.mxu0 %v702
      %1950 = vmatpush.msra.mxu0 %v700
      %1951 = vmatmul.f32.gmra.mxu0 %v1579
      %v1952 = vpop.f32.mrf.mxu0
      %v1953 = vadd.f32 0.0, %v1952
      %1954 = vdwg.mxu0
      %v1955 = vadd.f32 %v1913, %v1933
      %v1956 = vadd.f32 %v1914, %v1953
      %v1957 = vld [vmem:[%s1058 + $0x1] sm:$0x7f]
      %v1959 = vsel %vm231, %v1957, 0
      %1961 = vmatpush.msra.mxu0 0.0
      %1962 = vmatpush.msra.mxu0 0.0
      %1963 = vmatpush.msra.mxu0 %v800
      %1964 = vmatpush.msra.mxu0 %v798
      %1965 = vmatpush.msra.mxu0 %v796
      %1966 = vmatpush.msra.mxu0 %v794
      %1967 = vmatpush.msra.mxu0 %v792
      %1968 = vmatpush.msra.mxu0 %v790
      %1969 = vmatpush.msra.mxu0 %v788
      %1970 = vmatpush.msra.mxu0 %v786
      %1971 = vmatpush.msra.mxu0 %v784
      %1972 = vmatpush.msra.mxu0 %v782
      %1973 = vmatpush.msra.mxu0 %v780
      %1974 = vmatpush.msra.mxu0 %v778
      %1975 = vmatpush.msra.mxu0 %v776
      %1976 = vmatpush.msra.mxu0 %v774
      %1977 = vmatmul.f32.gmra.mxu0 %v1959
      %v1978 = vpop.f32.mrf.mxu0
      %v1979 = vadd.f32 0.0, %v1978
      %1980 = vdwg.mxu0
      %1981 = vmatpush.msra.mxu0 0.0
      %1982 = vmatpush.msra.mxu0 0.0
      %1983 = vmatpush.msra.mxu0 %v801
      %1984 = vmatpush.msra.mxu0 %v799
      %1985 = vmatpush.msra.mxu0 %v797
      %1986 = vmatpush.msra.mxu0 %v795
      %1987 = vmatpush.msra.mxu0 %v793
      %1988 = vmatpush.msra.mxu0 %v791
      %1989 = vmatpush.msra.mxu0 %v789
      %1990 = vmatpush.msra.mxu0 %v787
      %1991 = vmatpush.msra.mxu0 %v785
      %1992 = vmatpush.msra.mxu0 %v783
      %1993 = vmatpush.msra.mxu0 %v781
      %1994 = vmatpush.msra.mxu0 %v779
      %1995 = vmatpush.msra.mxu0 %v777
      %1996 = vmatpush.msra.mxu0 %v775
      %1997 = vmatmul.f32.gmra.mxu0 %v1959
      %v1998 = vpop.f32.mrf.mxu0
      %v1999 = vadd.f32 0.0, %v1998
      %2000 = vdwg.mxu0
      %v2001 = vadd.f32 %v1955, %v1979
      %v2002 = vadd.f32 %v1956, %v1999
      %v2003 = vmax.f32 %v1623, %v2001
      %v2004 = vmax.f32 %v1624, %v2002
      %v2005 = vld [vmem:[%s2] sm:$0x3]
      %v2007 = vperm.slane %v2005, 0
      %v2008 = vperm.slane %v2005, 1
      %v2011 = vadd.f32 %v2003, %v2007
      %v2012 = vadd.f32 %v2004, %v2008
      %v2013 = vmax.f32 %v2011, 0.0
      %v2014 = vmax.f32 %v2012, 0.0
      %2015 = vst [vmem:[%s170] sm:$0x7f] %v2013
      %vm2016 = vcmask 784384
      %2017 = vst.msk [vmem:[%s170 + $0x8] sm:$0x7f] %vm2016, %v2014
      %p2018 = scmp.lt.s32.totalorder %s14, 1
      %s2019 = scalar_select %p2018, %s14, 1
      %s2020 = smul.addr %s2019, 2
      %s2021 = smul.addr %s2020, 8
      %s2022 = scalar_lea.vmem %s3, %s2021
      // Predicated region
      $region33: #{cnn_forward.4} parent=31 // pred_check
        %p2023 = pneg %p100
      $region34: #{cnn_forward.4} parent=31 // pred_check_branch
        %2025 = sbr.rel (%p2023) target = $region36
      $region35: #{cnn_forward.4} parent=31 // pred_region
        _
      $region36: #{cnn_forward.4} parent=31 // pred_fallthru
        _
    $region32: #{cnn_forward.4} parent=5 // pred_fallthru
      _
    %p2026 = scmp.le.s32.totalorder 2, %s9
    // Predicated region
    $region37: #{cnn_forward.4} parent=5 // pred_check
      %p2027 = pneg %p2026
    $region38: #{cnn_forward.4} parent=5 // pred_check_branch
      %2029 = sbr.rel (%p2027) target = $region40
    $region39: #{cnn_forward.4} parent=5 // pred_region
      %s2030 = ssub.s32 %s9, 2
      // Predicated region
      $region41: #{cnn_forward.4} parent=39 // pred_check
        %p2031 = pneg %p106
      $region42: #{cnn_forward.4} parent=39 // pred_check_branch
        %2033 = sbr.rel (%p2031) target = $region44
      $region43: #{cnn_forward.4} parent=39 // pred_region
        %p2034 = scmp.lt.s32.totalorder %s15, 1
        %s2035 = scalar_select %p2034, %s15, 1
        %s2036 = smul.addr %s2035, 2
        %s2037 = smul.addr %s2036, 8
        %s2038 = scalar_lea.vmem %s3, %s2037
      $region44: #{cnn_forward.4} parent=39 // pred_fallthru
        _
    $region40: #{cnn_forward.4} parent=5 // pred_fallthru
      _
  $region6: #{cnn_forward.4} parent=0 // loop_footer
    %s13 = sadd.s32 1, %s9
  $region7: #{cnn_forward.4} parent=0 // loop_footer_branch
    %8 = sbr.rel target = $region3
  $region8: #{cnn_forward.4} parent=0 // loop_exit
    _

// kernel: cnn_forward.5
$region0: #{cnn_forward.5}
  #allocation0 [shape = 'u32[]', space=smem, size = 0x4, offset = 0x4, fixed_abs, tag = 'smem constant byte address 0x4 - core index']
  #allocation1 [shape = 'u32[72,128]{1,0:T(1,128)}', space=vmem, size = 0x9000, scoped, tag = 'internal scratch']
  %s0 = inlined_call_operand.vmem [shape: f32[2,1568], index: 0, kind: input, shape index: {}]
  %s1 = inlined_call_operand.vmem [shape: f32[1568,10], index: 1, kind: input, shape index: {}]
  %s2 = inlined_call_operand.vmem [shape: f32[1,10], index: 2, kind: input, shape index: {}]
  %s3 = inlined_call_operand.hbm [shape: f32[2,10], index: 3, kind: output, shape index: {}]
  %s4 = sld [smem:[#allocation0]]
  $region22: #{cnn_forward.5} parent=0
    _
  %s6 = ssub.s32 1, %s4
  %s7 = scalar_select 0, %s6, %s4
  $region1: #{cnn_forward.5} parent=0
    #allocation2 [shape = 'u8[1024]{0}', space=vmem, size = 0x400, scoped, tag = 'output window, operand 0, single buffered']
    #allocation3 [shape = 's32[1]{0}', space=sflag, size = 0x4, scoped, tag = 'scoped memory for cnn_forward.5']
    %8 = vsyncpa [#allocation3], 0
    // Predicated region
    $region2: #{cnn_forward.5} parent=1 // pred_check
      _
    $region3: #{cnn_forward.5} parent=1 // pred_check_branch
      %10 = sbr.rel (0) target = $region5
    $region4: #{cnn_forward.5} parent=1 // pred_region
      _
    $region5: #{cnn_forward.5} parent=1 // pred_fallthru
      _
    // Predicated region
    $region6: #{cnn_forward.5} parent=1 // pred_check
      _
    $region7: #{cnn_forward.5} parent=1 // pred_check_branch
      %12 = sbr.rel (0) target = $region9
    $region8: #{cnn_forward.5} parent=1 // pred_region
      _
    $region9: #{cnn_forward.5} parent=1 // pred_fallthru
      _
    // Predicated region
    $region10: #{cnn_forward.5} parent=1 // pred_check
      _
    $region11: #{cnn_forward.5} parent=1 // pred_check_branch
      %14 = sbr.rel (0) target = $region13
    $region12: #{cnn_forward.5} parent=1 // pred_region
      _
    $region13: #{cnn_forward.5} parent=1 // pred_fallthru
      _
    %v15 = vld [vmem:[%s0] sm:$0xff]
    %v16 = vld [vmem:[%s0 + $0x8] sm:$0xff]
    %v17 = vld [vmem:[%s0 + $0x10] sm:$0xff]
    %v18 = vld [vmem:[%s0 + $0x18] sm:$0x3]
    %v19 = vld [vmem:[%s1] sm:$0xff]
    %v20 = vld [vmem:[%s1 + $0x8] sm:$0xff]
    %v21 = vld [vmem:[%s1 + $0x10] sm:$0xff]
    %v22 = vld [vmem:[%s1 + $0x18] sm:$0xff]
    %v23 = vld [vmem:[%s1 + $0x20] sm:$0xff]
    %v24 = vld [vmem:[%s1 + $0x28] sm:$0xff]
    %v25 = vld [vmem:[%s1 + $0x30] sm:$0xff]
    %v26 = vld [vmem:[%s1 + $0x38] sm:$0xff]
    %v27 = vld [vmem:[%s1 + $0x40] sm:$0xff]
    %v28 = vld [vmem:[%s1 + $0x48] sm:$0xff]
    %v29 = vld [vmem:[%s1 + $0x50] sm:$0xff]
    %v30 = vld [vmem:[%s1 + $0x58] sm:$0xff]
    %v31 = vld [vmem:[%s1 + $0x60] sm:$0xff]
    %v32 = vld [vmem:[%s1 + $0x68] sm:$0xff]
    %v33 = vld [vmem:[%s1 + $0x70] sm:$0xff]
    %v34 = vld [vmem:[%s1 + $0x78] sm:$0xff]
    %v35 = vld [vmem:[%s1 + $0x80] sm:$0xff]
    %v36 = vld [vmem:[%s1 + $0x88] sm:$0xff]
    %v37 = vld [vmem:[%s1 + $0x90] sm:$0xff]
    %v38 = vld [vmem:[%s1 + $0x98] sm:$0xff]
    %v39 = vld [vmem:[%s1 + $0xa0] sm:$0xff]
    %v40 = vld [vmem:[%s1 + $0xa8] sm:$0xff]
    %v41 = vld [vmem:[%s1 + $0xb0] sm:$0xff]
    %v42 = vld [vmem:[%s1 + $0xb8] sm:$0xff]
    %v43 = vld [vmem:[%s1 + $0xc0] sm:$0xff]
    %v44 = vld [vmem:[%s1 + $0xc8] sm:$0xff]
    %v45 = vld [vmem:[%s1 + $0xd0] sm:$0xff]
    %v46 = vld [vmem:[%s1 + $0xd8] sm:$0xff]
    %v47 = vld [vmem:[%s1 + $0xe0] sm:$0xff]
    %v48 = vld [vmem:[%s1 + $0xe8] sm:$0xff]
    %v49 = vld [vmem:[%s1 + $0xf0] sm:$0xff]
    %v50 = vld [vmem:[%s1 + $0xf8] sm:$0xff]
    %v51 = vld [vmem:[%s1 + $0x100] sm:$0xff]
    %v52 = vld [vmem:[%s1 + $0x108] sm:$0xff]
    %v53 = vld [vmem:[%s1 + $0x110] sm:$0xff]
    %v54 = vld [vmem:[%s1 + $0x118] sm:$0xff]
    %v55 = vld [vmem:[%s1 + $0x120] sm:$0xff]
    %v56 = vld [vmem:[%s1 + $0x128] sm:$0xff]
    %v57 = vld [vmem:[%s1 + $0x130] sm:$0xff]
    %v58 = vld [vmem:[%s1 + $0x138] sm:$0xff]
    %v59 = vld [vmem:[%s1 + $0x140] sm:$0xff]
    %v60 = vld [vmem:[%s1 + $0x148] sm:$0xff]
    %v61 = vld [vmem:[%s1 + $0x150] sm:$0xff]
    %v62 = vld [vmem:[%s1 + $0x158] sm:$0xff]
    %v63 = vld [vmem:[%s1 + $0x160] sm:$0xff]
    %v64 = vld [vmem:[%s1 + $0x168] sm:$0xff]
    %v65 = vld [vmem:[%s1 + $0x170] sm:$0xff]
    %v66 = vld [vmem:[%s1 + $0x178] sm:$0xff]
    %v67 = vld [vmem:[%s1 + $0x180] sm:$0xff]
    %v68 = vld [vmem:[%s1 + $0x188] sm:$0xff]
    %v69 = vld [vmem:[%s1 + $0x190] sm:$0xff]
    %v70 = vld [vmem:[%s1 + $0x198] sm:$0xff]
    %v71 = vld [vmem:[%s1 + $0x1a0] sm:$0xff]
    %v72 = vld [vmem:[%s1 + $0x1a8] sm:$0xff]
    %v73 = vld [vmem:[%s1 + $0x1b0] sm:$0xff]
    %v74 = vld [vmem:[%s1 + $0x1b8] sm:$0xff]
    %v75 = vld [vmem:[%s1 + $0x1c0] sm:$0xff]
    %v76 = vld [vmem:[%s1 + $0x1c8] sm:$0xff]
    %v77 = vld [vmem:[%s1 + $0x1d0] sm:$0xff]
    %v78 = vld [vmem:[%s1 + $0x1d8] sm:$0xff]
    %v79 = vld [vmem:[%s1 + $0x1e0] sm:$0xff]
    %v80 = vld [vmem:[%s1 + $0x1e8] sm:$0xff]
    %v81 = vld [vmem:[%s1 + $0x1f0] sm:$0xff]
    %v82 = vld [vmem:[%s1 + $0x1f8] sm:$0xff]
    %v83 = vld [vmem:[%s1 + $0x200] sm:$0xff]
    %v84 = vld [vmem:[%s1 + $0x208] sm:$0xff]
    %v85 = vld [vmem:[%s1 + $0x210] sm:$0xff]
    %v86 = vld [vmem:[%s1 + $0x218] sm:$0xff]
    %v87 = vld [vmem:[%s1 + $0x220] sm:$0xff]
    %v88 = vld [vmem:[%s1 + $0x228] sm:$0xff]
    %v89 = vld [vmem:[%s1 + $0x230] sm:$0xff]
    %v90 = vld [vmem:[%s1 + $0x238] sm:$0xff]
    %v91 = vld [vmem:[%s1 + $0x240] sm:$0xff]
    %v92 = vld [vmem:[%s1 + $0x248] sm:$0xff]
    %v93 = vld [vmem:[%s1 + $0x250] sm:$0xff]
    %v94 = vld [vmem:[%s1 + $0x258] sm:$0xff]
    %v95 = vld [vmem:[%s1 + $0x260] sm:$0xff]
    %v96 = vld [vmem:[%s1 + $0x268] sm:$0xff]
    %v97 = vld [vmem:[%s1 + $0x270] sm:$0xff]
    %v98 = vld [vmem:[%s1 + $0x278] sm:$0xff]
    %v99 = vld [vmem:[%s1 + $0x280] sm:$0xff]
    %v100 = vld [vmem:[%s1 + $0x288] sm:$0xff]
    %v101 = vld [vmem:[%s1 + $0x290] sm:$0xff]
    %v102 = vld [vmem:[%s1 + $0x298] sm:$0xff]
    %v103 = vld [vmem:[%s1 + $0x2a0] sm:$0xff]
    %v104 = vld [vmem:[%s1 + $0x2a8] sm:$0xff]
    %v105 = vld [vmem:[%s1 + $0x2b0] sm:$0xff]
    %v106 = vld [vmem:[%s1 + $0x2b8] sm:$0xff]
    %v107 = vld [vmem:[%s1 + $0x2c0] sm:$0xff]
    %v108 = vld [vmem:[%s1 + $0x2c8] sm:$0xff]
    %v109 = vld [vmem:[%s1 + $0x2d0] sm:$0xff]
    %v110 = vld [vmem:[%s1 + $0x2d8] sm:$0xff]
    %v111 = vld [vmem:[%s1 + $0x2e0] sm:$0xff]
    %v112 = vld [vmem:[%s1 + $0x2e8] sm:$0xff]
    %v113 = vld [vmem:[%s1 + $0x2f0] sm:$0xff]
    %v114 = vld [vmem:[%s1 + $0x2f8] sm:$0xff]
    %v115 = vld [vmem:[%s1 + $0x300] sm:$0xff]
    %v116 = vld [vmem:[%s1 + $0x308] sm:$0xff]
    %v117 = vld [vmem:[%s1 + $0x310] sm:$0xff]
    %v118 = vld [vmem:[%s1 + $0x318] sm:$0xff]
    %v119 = vld [vmem:[%s1 + $0x320] sm:$0xff]
    %v120 = vld [vmem:[%s1 + $0x328] sm:$0xff]
    %v121 = vld [vmem:[%s1 + $0x330] sm:$0xff]
    %v122 = vld [vmem:[%s1 + $0x338] sm:$0xff]
    %v123 = vld [vmem:[%s1 + $0x340] sm:$0xff]
    %v124 = vld [vmem:[%s1 + $0x348] sm:$0xff]
    %v125 = vld [vmem:[%s1 + $0x350] sm:$0xff]
    %v126 = vld [vmem:[%s1 + $0x358] sm:$0xff]
    %v127 = vld [vmem:[%s1 + $0x360] sm:$0xff]
    %v128 = vld [vmem:[%s1 + $0x368] sm:$0xff]
    %v129 = vld [vmem:[%s1 + $0x370] sm:$0xff]
    %v130 = vld [vmem:[%s1 + $0x378] sm:$0xff]
    %v131 = vld [vmem:[%s1 + $0x380] sm:$0xff]
    %v132 = vld [vmem:[%s1 + $0x388] sm:$0xff]
    %v133 = vld [vmem:[%s1 + $0x390] sm:$0xff]
    %v134 = vld [vmem:[%s1 + $0x398] sm:$0xff]
    %v135 = vld [vmem:[%s1 + $0x3a0] sm:$0xff]
    %v136 = vld [vmem:[%s1 + $0x3a8] sm:$0xff]
    %v137 = vld [vmem:[%s1 + $0x3b0] sm:$0xff]
    %v138 = vld [vmem:[%s1 + $0x3b8] sm:$0xff]
    %v139 = vld [vmem:[%s1 + $0x3c0] sm:$0xff]
    %v140 = vld [vmem:[%s1 + $0x3c8] sm:$0xff]
    %v141 = vld [vmem:[%s1 + $0x3d0] sm:$0xff]
    %v142 = vld [vmem:[%s1 + $0x3d8] sm:$0xff]
    %v143 = vld [vmem:[%s1 + $0x3e0] sm:$0xff]
    %v144 = vld [vmem:[%s1 + $0x3e8] sm:$0xff]
    %v145 = vld [vmem:[%s1 + $0x3f0] sm:$0xff]
    %v146 = vld [vmem:[%s1 + $0x3f8] sm:$0xff]
    %v147 = vld [vmem:[%s1 + $0x400] sm:$0xff]
    %v148 = vld [vmem:[%s1 + $0x408] sm:$0xff]
    %v149 = vld [vmem:[%s1 + $0x410] sm:$0xff]
    %v150 = vld [vmem:[%s1 + $0x418] sm:$0xff]
    %v151 = vld [vmem:[%s1 + $0x420] sm:$0xff]
    %v152 = vld [vmem:[%s1 + $0x428] sm:$0xff]
    %v153 = vld [vmem:[%s1 + $0x430] sm:$0xff]
    %v154 = vld [vmem:[%s1 + $0x438] sm:$0xff]
    %v155 = vld [vmem:[%s1 + $0x440] sm:$0xff]
    %v156 = vld [vmem:[%s1 + $0x448] sm:$0xff]
    %v157 = vld [vmem:[%s1 + $0x450] sm:$0xff]
    %v158 = vld [vmem:[%s1 + $0x458] sm:$0xff]
    %v159 = vld [vmem:[%s1 + $0x460] sm:$0xff]
    %v160 = vld [vmem:[%s1 + $0x468] sm:$0xff]
    %v161 = vld [vmem:[%s1 + $0x470] sm:$0xff]
    %v162 = vld [vmem:[%s1 + $0x478] sm:$0xff]
    %v163 = vld [vmem:[%s1 + $0x480] sm:$0xff]
    %v164 = vld [vmem:[%s1 + $0x488] sm:$0xff]
    %v165 = vld [vmem:[%s1 + $0x490] sm:$0xff]
    %v166 = vld [vmem:[%s1 + $0x498] sm:$0xff]
    %v167 = vld [vmem:[%s1 + $0x4a0] sm:$0xff]
    %v168 = vld [vmem:[%s1 + $0x4a8] sm:$0xff]
    %v169 = vld [vmem:[%s1 + $0x4b0] sm:$0xff]
    %v170 = vld [vmem:[%s1 + $0x4b8] sm:$0xff]
    %v171 = vld [vmem:[%s1 + $0x4c0] sm:$0xff]
    %v172 = vld [vmem:[%s1 + $0x4c8] sm:$0xff]
    %v173 = vld [vmem:[%s1 + $0x4d0] sm:$0xff]
    %v174 = vld [vmem:[%s1 + $0x4d8] sm:$0xff]
    %v175 = vld [vmem:[%s1 + $0x4e0] sm:$0xff]
    %v176 = vld [vmem:[%s1 + $0x4e8] sm:$0xff]
    %v177 = vld [vmem:[%s1 + $0x4f0] sm:$0xff]
    %v178 = vld [vmem:[%s1 + $0x4f8] sm:$0xff]
    %v179 = vld [vmem:[%s1 + $0x500] sm:$0xff]
    %v180 = vld [vmem:[%s1 + $0x508] sm:$0xff]
    %v181 = vld [vmem:[%s1 + $0x510] sm:$0xff]
    %v182 = vld [vmem:[%s1 + $0x518] sm:$0xff]
    %v183 = vld [vmem:[%s1 + $0x520] sm:$0xff]
    %v184 = vld [vmem:[%s1 + $0x528] sm:$0xff]
    %v185 = vld [vmem:[%s1 + $0x530] sm:$0xff]
    %v186 = vld [vmem:[%s1 + $0x538] sm:$0xff]
    %v187 = vld [vmem:[%s1 + $0x540] sm:$0xff]
    %v188 = vld [vmem:[%s1 + $0x548] sm:$0xff]
    %v189 = vld [vmem:[%s1 + $0x550] sm:$0xff]
    %v190 = vld [vmem:[%s1 + $0x558] sm:$0xff]
    %v191 = vld [vmem:[%s1 + $0x560] sm:$0xff]
    %v192 = vld [vmem:[%s1 + $0x568] sm:$0xff]
    %v193 = vld [vmem:[%s1 + $0x570] sm:$0xff]
    %v194 = vld [vmem:[%s1 + $0x578] sm:$0xff]
    %v195 = vld [vmem:[%s1 + $0x580] sm:$0xff]
    %v196 = vld [vmem:[%s1 + $0x588] sm:$0xff]
    %v197 = vld [vmem:[%s1 + $0x590] sm:$0xff]
    %v198 = vld [vmem:[%s1 + $0x598] sm:$0xff]
    %v199 = vld [vmem:[%s1 + $0x5a0] sm:$0xff]
    %v200 = vld [vmem:[%s1 + $0x5a8] sm:$0xff]
    %v201 = vld [vmem:[%s1 + $0x5b0] sm:$0xff]
    %v202 = vld [vmem:[%s1 + $0x5b8] sm:$0xff]
    %v203 = vld [vmem:[%s1 + $0x5c0] sm:$0xff]
    %v204 = vld [vmem:[%s1 + $0x5c8] sm:$0xff]
    %v205 = vld [vmem:[%s1 + $0x5d0] sm:$0xff]
    %v206 = vld [vmem:[%s1 + $0x5d8] sm:$0xff]
    %v207 = vld [vmem:[%s1 + $0x5e0] sm:$0xff]
    %v208 = vld [vmem:[%s1 + $0x5e8] sm:$0xff]
    %v209 = vld [vmem:[%s1 + $0x5f0] sm:$0xff]
    %v210 = vld [vmem:[%s1 + $0x5f8] sm:$0xff]
    %v211 = vld [vmem:[%s1 + $0x600] sm:$0xff]
    %v212 = vld [vmem:[%s1 + $0x608] sm:$0xff]
    %v213 = vld [vmem:[%s1 + $0x610] sm:$0xff]
    %v214 = vld [vmem:[%s1 + $0x618] sm:$0xff]
    %v215 = vld [vmem:[%s2] sm:$0x1]
    %v217 = vperm.slane %v215, 0
    %223 = vst [vmem:[#allocation1] ss:$4 sm:$0xff] %v15
    %s224 = scalar_lea.vmem [#allocation1], 32
    %225 = vst [vmem:[%s224] ss:$4 sm:$0xff] %v16
    %v226 = vld.sshfl [vmem:[#allocation1] sm:$0xff pattern:$0x73625140]
    %v227 = vld.sshfl [vmem:[#allocation1 + $0x8] sm:$0xff pattern:$0x73625140]
    %v228 = vld.sshfl [vmem:[#allocation1 + $0x10] sm:$0xff pattern:$0x73625140]
    %v229 = vld.sshfl [vmem:[#allocation1 + $0x18] sm:$0xff pattern:$0x73625140]
    %v230 = vld.sshfl [vmem:[#allocation1 + $0x20] sm:$0xff pattern:$0x73625140]
    %v231 = vld.sshfl [vmem:[#allocation1 + $0x28] sm:$0xff pattern:$0x73625140]
    %v232 = vld.sshfl [vmem:[#allocation1 + $0x30] sm:$0xff pattern:$0x73625140]
    %v233 = vld.sshfl [vmem:[#allocation1 + $0x38] sm:$0xff pattern:$0x73625140]
    %234 = vst [vmem:[#allocation1] ss:$4 sm:$0xff] %v17
    %235 = vst [vmem:[%s224] ss:$4 sm:$0xff] %v18
    %v236 = vld.sshfl [vmem:[#allocation1] sm:$0xff pattern:$0x73625140]
    %v237 = vld.sshfl [vmem:[#allocation1 + $0x8] sm:$0xff pattern:$0x73625140]
    %v238 = vld.sshfl [vmem:[#allocation1 + $0x10] sm:$0xff pattern:$0x73625140]
    %v239 = vld.sshfl [vmem:[#allocation1 + $0x18] sm:$0xff pattern:$0x73625140]
    %v240 = vld.sshfl [vmem:[#allocation1 + $0x20] sm:$0xff pattern:$0x73625140]
    %vm253 = vcmask 261120
    %v254 = vsel %vm253, %v240, 0
    %256 = vmatpush.msra.mxu0 %v34
    %257 = vmatpush.msra.mxu0 %v33
    %258 = vmatpush.msra.mxu0 %v32
    %259 = vmatpush.msra.mxu0 %v31
    %260 = vmatpush.msra.mxu0 %v30
    %261 = vmatpush.msra.mxu0 %v29
    %262 = vmatpush.msra.mxu0 %v28
    %263 = vmatpush.msra.mxu0 %v27
    %264 = vmatpush.msra.mxu0 %v26
    %265 = vmatpush.msra.mxu0 %v25
    %266 = vmatpush.msra.mxu0 %v24
    %267 = vmatpush.msra.mxu0 %v23
    %268 = vmatpush.msra.mxu0 %v22
    %269 = vmatpush.msra.mxu0 %v21
    %270 = vmatpush.msra.mxu0 %v20
    %271 = vmatpush.msra.mxu0 %v19
    %272 = vmatmul.f32.gmra.mxu0 %v226
    %v273 = vpop.f32.mrf.mxu0
    %v274 = vadd.f32 %v217, %v273
    %275 = vdwg.mxu0
    %276 = vmatpush.msra.mxu0 %v50
    %277 = vmatpush.msra.mxu0 %v49
    %278 = vmatpush.msra.mxu0 %v48
    %279 = vmatpush.msra.mxu0 %v47
    %280 = vmatpush.msra.mxu0 %v46
    %281 = vmatpush.msra.mxu0 %v45
    %282 = vmatpush.msra.mxu0 %v44
    %283 = vmatpush.msra.mxu0 %v43
    %284 = vmatpush.msra.mxu0 %v42
    %285 = vmatpush.msra.mxu0 %v41
    %286 = vmatpush.msra.mxu0 %v40
    %287 = vmatpush.msra.mxu0 %v39
    %288 = vmatpush.msra.mxu0 %v38
    %289 = vmatpush.msra.mxu0 %v37
    %290 = vmatpush.msra.mxu0 %v36
    %291 = vmatpush.msra.mxu0 %v35
    %292 = vmatmul.f32.gmra.mxu0 %v227
    %v293 = vpop.f32.mrf.mxu0
    %v294 = vadd.f32 %v274, %v293
    %295 = vdwg.mxu0
    %296 = vmatpush.msra.mxu0 %v66
    %297 = vmatpush.msra.mxu0 %v65
    %298 = vmatpush.msra.mxu0 %v64
    %299 = vmatpush.msra.mxu0 %v63
    %300 = vmatpush.msra.mxu0 %v62
    %301 = vmatpush.msra.mxu0 %v61
    %302 = vmatpush.msra.mxu0 %v60
    %303 = vmatpush.msra.mxu0 %v59
    %304 = vmatpush.msra.mxu0 %v58
    %305 = vmatpush.msra.mxu0 %v57
    %306 = vmatpush.msra.mxu0 %v56
    %307 = vmatpush.msra.mxu0 %v55
    %308 = vmatpush.msra.mxu0 %v54
    %309 = vmatpush.msra.mxu0 %v53
    %310 = vmatpush.msra.mxu0 %v52
    %311 = vmatpush.msra.mxu0 %v51
    %312 = vmatmul.f32.gmra.mxu0 %v228
    %v313 = vpop.f32.mrf.mxu0
    %v314 = vadd.f32 %v294, %v313
    %315 = vdwg.mxu0
    %316 = vmatpush.msra.mxu0 %v82
    %317 = vmatpush.msra.mxu0 %v81
    %318 = vmatpush.msra.mxu0 %v80
    %319 = vmatpush.msra.mxu0 %v79
    %320 = vmatpush.msra.mxu0 %v78
    %321 = vmatpush.msra.mxu0 %v77
    %322 = vmatpush.msra.mxu0 %v76
    %323 = vmatpush.msra.mxu0 %v75
    %324 = vmatpush.msra.mxu0 %v74
    %325 = vmatpush.msra.mxu0 %v73
    %326 = vmatpush.msra.mxu0 %v72
    %327 = vmatpush.msra.mxu0 %v71
    %328 = vmatpush.msra.mxu0 %v70
    %329 = vmatpush.msra.mxu0 %v69
    %330 = vmatpush.msra.mxu0 %v68
    %331 = vmatpush.msra.mxu0 %v67
    %332 = vmatmul.f32.gmra.mxu0 %v229
    %v333 = vpop.f32.mrf.mxu0
    %v334 = vadd.f32 %v314, %v333
    %335 = vdwg.mxu0
    %336 = vmatpush.msra.mxu0 %v98
    %337 = vmatpush.msra.mxu0 %v97
    %338 = vmatpush.msra.mxu0 %v96
    %339 = vmatpush.msra.mxu0 %v95
    %340 = vmatpush.msra.mxu0 %v94
    %341 = vmatpush.msra.mxu0 %v93
    %342 = vmatpush.msra.mxu0 %v92
    %343 = vmatpush.msra.mxu0 %v91
    %344 = vmatpush.msra.mxu0 %v90
    %345 = vmatpush.msra.mxu0 %v89
    %346 = vmatpush.msra.mxu0 %v88
    %347 = vmatpush.msra.mxu0 %v87
    %348 = vmatpush.msra.mxu0 %v86
    %349 = vmatpush.msra.mxu0 %v85
    %350 = vmatpush.msra.mxu0 %v84
    %351 = vmatpush.msra.mxu0 %v83
    %352 = vmatmul.f32.gmra.mxu0 %v230
    %v353 = vpop.f32.mrf.mxu0
    %v354 = vadd.f32 %v334, %v353
    %355 = vdwg.mxu0
    %356 = vmatpush.msra.mxu0 %v114
    %357 = vmatpush.msra.mxu0 %v113
    %358 = vmatpush.msra.mxu0 %v112
    %359 = vmatpush.msra.mxu0 %v111
    %360 = vmatpush.msra.mxu0 %v110
    %361 = vmatpush.msra.mxu0 %v109
    %362 = vmatpush.msra.mxu0 %v108
    %363 = vmatpush.msra.mxu0 %v107
    %364 = vmatpush.msra.mxu0 %v106
    %365 = vmatpush.msra.mxu0 %v105
    %366 = vmatpush.msra.mxu0 %v104
    %367 = vmatpush.msra.mxu0 %v103
    %368 = vmatpush.msra.mxu0 %v102
    %369 = vmatpush.msra.mxu0 %v101
    %370 = vmatpush.msra.mxu0 %v100
    %371 = vmatpush.msra.mxu0 %v99
    %372 = vmatmul.f32.gmra.mxu0 %v231
    %v373 = vpop.f32.mrf.mxu0
    %v374 = vadd.f32 %v354, %v373
    %375 = vdwg.mxu0
    %376 = vmatpush.msra.mxu0 %v130
    %377 = vmatpush.msra.mxu0 %v129
    %378 = vmatpush.msra.mxu0 %v128
    %379 = vmatpush.msra.mxu0 %v127
    %380 = vmatpush.msra.mxu0 %v126
    %381 = vmatpush.msra.mxu0 %v125
    %382 = vmatpush.msra.mxu0 %v124
    %383 = vmatpush.msra.mxu0 %v123
    %384 = vmatpush.msra.mxu0 %v122
    %385 = vmatpush.msra.mxu0 %v121
    %386 = vmatpush.msra.mxu0 %v120
    %387 = vmatpush.msra.mxu0 %v119
    %388 = vmatpush.msra.mxu0 %v118
    %389 = vmatpush.msra.mxu0 %v117
    %390 = vmatpush.msra.mxu0 %v116
    %391 = vmatpush.msra.mxu0 %v115
    %392 = vmatmul.f32.gmra.mxu0 %v232
    %v393 = vpop.f32.mrf.mxu0
    %v394 = vadd.f32 %v374, %v393
    %395 = vdwg.mxu0
    %396 = vmatpush.msra.mxu0 %v146
    %397 = vmatpush.msra.mxu0 %v145
    %398 = vmatpush.msra.mxu0 %v144
    %399 = vmatpush.msra.mxu0 %v143
    %400 = vmatpush.msra.mxu0 %v142
    %401 = vmatpush.msra.mxu0 %v141
    %402 = vmatpush.msra.mxu0 %v140
    %403 = vmatpush.msra.mxu0 %v139
    %404 = vmatpush.msra.mxu0 %v138
    %405 = vmatpush.msra.mxu0 %v137
    %406 = vmatpush.msra.mxu0 %v136
    %407 = vmatpush.msra.mxu0 %v135
    %408 = vmatpush.msra.mxu0 %v134
    %409 = vmatpush.msra.mxu0 %v133
    %410 = vmatpush.msra.mxu0 %v132
    %411 = vmatpush.msra.mxu0 %v131
    %412 = vmatmul.f32.gmra.mxu0 %v233
    %v413 = vpop.f32.mrf.mxu0
    %v414 = vadd.f32 %v394, %v413
    %415 = vdwg.mxu0
    %416 = vmatpush.msra.mxu0 %v162
    %417 = vmatpush.msra.mxu0 %v161
    %418 = vmatpush.msra.mxu0 %v160
    %419 = vmatpush.msra.mxu0 %v159
    %420 = vmatpush.msra.mxu0 %v158
    %421 = vmatpush.msra.mxu0 %v157
    %422 = vmatpush.msra.mxu0 %v156
    %423 = vmatpush.msra.mxu0 %v155
    %424 = vmatpush.msra.mxu0 %v154
    %425 = vmatpush.msra.mxu0 %v153
    %426 = vmatpush.msra.mxu0 %v152
    %427 = vmatpush.msra.mxu0 %v151
    %428 = vmatpush.msra.mxu0 %v150
    %429 = vmatpush.msra.mxu0 %v149
    %430 = vmatpush.msra.mxu0 %v148
    %431 = vmatpush.msra.mxu0 %v147
    %432 = vmatmul.f32.gmra.mxu0 %v236
    %v433 = vpop.f32.mrf.mxu0
    %v434 = vadd.f32 %v414, %v433
    %435 = vdwg.mxu0
    %436 = vmatpush.msra.mxu0 %v178
    %437 = vmatpush.msra.mxu0 %v177
    %438 = vmatpush.msra.mxu0 %v176
    %439 = vmatpush.msra.mxu0 %v175
    %440 = vmatpush.msra.mxu0 %v174
    %441 = vmatpush.msra.mxu0 %v173
    %442 = vmatpush.msra.mxu0 %v172
    %443 = vmatpush.msra.mxu0 %v171
    %444 = vmatpush.msra.mxu0 %v170
    %445 = vmatpush.msra.mxu0 %v169
    %446 = vmatpush.msra.mxu0 %v168
    %447 = vmatpush.msra.mxu0 %v167
    %448 = vmatpush.msra.mxu0 %v166
    %449 = vmatpush.msra.mxu0 %v165
    %450 = vmatpush.msra.mxu0 %v164
    %451 = vmatpush.msra.mxu0 %v163
    %452 = vmatmul.f32.gmra.mxu0 %v237
    %v453 = vpop.f32.mrf.mxu0
    %v454 = vadd.f32 %v434, %v453
    %455 = vdwg.mxu0
    %456 = vmatpush.msra.mxu0 %v194
    %457 = vmatpush.msra.mxu0 %v193
    %458 = vmatpush.msra.mxu0 %v192
    %459 = vmatpush.msra.mxu0 %v191
    %460 = vmatpush.msra.mxu0 %v190
    %461 = vmatpush.msra.mxu0 %v189
    %462 = vmatpush.msra.mxu0 %v188
    %463 = vmatpush.msra.mxu0 %v187
    %464 = vmatpush.msra.mxu0 %v186
    %465 = vmatpush.msra.mxu0 %v185
    %466 = vmatpush.msra.mxu0 %v184
    %467 = vmatpush.msra.mxu0 %v183
    %468 = vmatpush.msra.mxu0 %v182
    %469 = vmatpush.msra.mxu0 %v181
    %470 = vmatpush.msra.mxu0 %v180
    %471 = vmatpush.msra.mxu0 %v179
    %472 = vmatmul.f32.gmra.mxu0 %v238
    %v473 = vpop.f32.mrf.mxu0
    %v474 = vadd.f32 %v454, %v473
    %475 = vdwg.mxu0
    %476 = vmatpush.msra.mxu0 %v210
    %477 = vmatpush.msra.mxu0 %v209
    %478 = vmatpush.msra.mxu0 %v208
    %479 = vmatpush.msra.mxu0 %v207
    %480 = vmatpush.msra.mxu0 %v206
    %481 = vmatpush.msra.mxu0 %v205
    %482 = vmatpush.msra.mxu0 %v204
    %483 = vmatpush.msra.mxu0 %v203
    %484 = vmatpush.msra.mxu0 %v202
    %485 = vmatpush.msra.mxu0 %v201
    %486 = vmatpush.msra.mxu0 %v200
    %487 = vmatpush.msra.mxu0 %v199
    %488 = vmatpush.msra.mxu0 %v198
    %489 = vmatpush.msra.mxu0 %v197
    %490 = vmatpush.msra.mxu0 %v196
    %491 = vmatpush.msra.mxu0 %v195
    %492 = vmatmul.f32.gmra.mxu0 %v239
    %v493 = vpop.f32.mrf.mxu0
    %v494 = vadd.f32 %v474, %v493
    %495 = vdwg.mxu0
    %496 = vmatpush.msra.mxu0 0.0
    %497 = vmatpush.msra.mxu0 0.0
    %498 = vmatpush.msra.mxu0 0.0
    %499 = vmatpush.msra.mxu0 0.0
    %500 = vmatpush.msra.mxu0 0.0
    %501 = vmatpush.msra.mxu0 0.0
    %502 = vmatpush.msra.mxu0 0.0
    %503 = vmatpush.msra.mxu0 0.0
    %504 = vmatpush.msra.mxu0 0.0
    %505 = vmatpush.msra.mxu0 0.0
    %506 = vmatpush.msra.mxu0 0.0
    %507 = vmatpush.msra.mxu0 0.0
    %508 = vmatpush.msra.mxu0 %v214
    %509 = vmatpush.msra.mxu0 %v213
    %510 = vmatpush.msra.mxu0 %v212
    %511 = vmatpush.msra.mxu0 %v211
    %512 = vmatmul.f32.gmra.mxu0 %v254
    %v513 = vpop.f32.mrf.mxu0
    %v514 = vadd.f32 %v494, %v513
    %515 = vdwg.mxu0
    %vm516 = vcmask 74752
    %v517 = vsel %vm516, %v514, -inf
    %518 = vmax.xlane.f32.xlu0 %v517
    %v519 = vpop.xlane.xlu0 %518
    %v520 = vsub.f32 %v514, %v519
    %v521 = vmul.f32 %v520, 1.442695
    %v522 = vpow.pop %v521
    %v523 = vsel %vm516, %v522, 0.0
    %524 = vadd.xlane.f32.xlu0 %v523
    %v525 = vpop.xlane.xlu0 %524
    %v526 = vrcp.pop %v525
    %v527 = vmul.f32 %v522, %v526
    %528 = vst.msk [vmem:[#allocation2] sm:$0x3] %vm516, %v527
    // Predicated region
    $region14: #{cnn_forward.5} parent=1 // pred_check
      _
    $region15: #{cnn_forward.5} parent=1 // pred_check_branch
      %530 = sbr.rel (0) target = $region17
    $region16: #{cnn_forward.5} parent=1 // pred_region
      %532 = vsyncadd [#allocation3], 0
      %s534 = sshll.u32 [#allocation2], 4
      %s535 = int_to_ptr.vmem [resolvable:$true] %s534
      %s536 = sshll.u32 %s3, 4
      %s537 = int_to_ptr.hbm [resolvable:$true] %s536
      %539 = dma.vmem_to_hbm [thread:$0]  %s535, 32, %s537, [#allocation3]
    $region17: #{cnn_forward.5} parent=1 // pred_fallthru
      _
    // Predicated region
    $region18: #{cnn_forward.5} parent=1 // pred_check
      _
    $region19: #{cnn_forward.5} parent=1 // pred_check_branch
      %541 = sbr.rel (0) target = $region21
    $region20: #{cnn_forward.5} parent=1 // pred_region
      %543 = dma.done [#allocation3], 32
    $region21: #{cnn_forward.5} parent=1 // pred_fallthru
      _
    %544 = vsyncpa [#allocation3], 1

</llo_original>
